<compile_context>
chip_gen: v7x
topology: tpu7x:2x2x1
jax: 0.10.0
libtpu: 0.0.40
codegen_flags: <defaults>
</compile_context>

<pallas_src>
import math

import jax
import jax.numpy as jnp
import numpy as np
from jax.experimental import pallas as pl
from jax.experimental.pallas import tpu as pltpu


def _encoder_layer_kernel(x_ref, mask_ref,
                          wqkv_ref, bqkv_ref, wo_ref, bo_ref,
                          g1_ref, bt1_ref,
                          w1_ref, b1_ref, w2_ref, b2_ref,
                          g2_ref, bt2_ref,
                          out_ref,
                          acc_ref, bias_ref):
    h = pl.program_id(1)
    num_heads = pl.num_programs(1)
    bb, s_len, d_model = x_ref.shape
    d_k = wqkv_ref.shape[2] // 3
    rows = bb * s_len
    scale = 1.0 / math.sqrt(float(d_k))

    x = x_ref[...]                     # (bb, S, D)
    xf = x.reshape(rows, d_model)      # big-M slab for the projections / FFN

    @pl.when(h == 0)
    def _init():
        acc_ref[...] = jnp.zeros_like(acc_ref)
        # additive mask bias computed once per batch block, reused by all heads
        bias_ref[...] = jnp.where(mask_ref[...] == 0,
                                  jnp.float32(-1e9), jnp.float32(0.0))

    # fused Q|K|V projection for this head: one (rows, D) x (D, 3*d_k) matmul
    qkv = (jnp.dot(xf, wqkv_ref[0], preferred_element_type=jnp.float32)
           + bqkv_ref[0]).reshape(bb, s_len, 3 * d_k)
    q = qkv[:, :, 0 * d_k:1 * d_k]
    k = qkv[:, :, 1 * d_k:2 * d_k]
    v = qkv[:, :, 2 * d_k:3 * d_k]

    # batched (over batch) attention for this head
    s = jnp.einsum("bqd,bkd->bqk", q, k,
                   preferred_element_type=jnp.float32) * scale
    s = s + bias_ref[...]
    s = s - jnp.max(s, axis=-1, keepdims=True)          # stable softmax
    e = jnp.exp(s)
    p = e * pl.reciprocal(jnp.sum(e, axis=-1, keepdims=True), approx=True)
    ctx = jnp.einsum("bqk,bkd->bqd", p, v,
                     preferred_element_type=jnp.float32)  # (bb, S, d_k)

    # accumulate this head's contribution to the output projection
    acc_ref[...] += jnp.dot(ctx.reshape(rows, d_k), wo_ref[0],
                            preferred_element_type=jnp.float32)

    @pl.when(h == num_heads - 1)
    def _finalize():
        attn = acc_ref[...] + bo_ref[...]

        # AddNorm 1
        y = attn + xf
        mu = jnp.mean(y, axis=-1, keepdims=True)
        var = jnp.mean((y - mu) ** 2, axis=-1, keepdims=True)
        y1 = (y - mu) * jax.lax.rsqrt(var + 1e-5) * g1_ref[...] + bt1_ref[...]

        # position-wise FFN
        hdn = jnp.maximum(
            jnp.dot(y1, w1_ref[...], preferred_element_type=jnp.float32)
            + b1_ref[...], 0.0)
        f = (jnp.dot(hdn, w2_ref[...], preferred_element_type=jnp.float32)
             + b2_ref[...])

        # AddNorm 2
        z = f + y1
        mu2 = jnp.mean(z, axis=-1, keepdims=True)
        var2 = jnp.mean((z - mu2) ** 2, axis=-1, keepdims=True)
        zn = (z - mu2) * jax.lax.rsqrt(var2 + 1e-5) * g2_ref[...] + bt2_ref[...]
        out_ref[...] = zn.reshape(bb, s_len, d_model)


def _pack_heads(params, num_heads, d_k, d_model):
    """Repack (D,D) Q/K/V/O weights into per-head, fused layouts (wrapper-side)."""
    def split_cols(w):  # (D, D) -> (H, D, d_k): head h = columns h*d_k:(h+1)*d_k
        return w.reshape(d_model, num_heads, d_k).transpose(1, 0, 2)

    wqkv = jnp.concatenate([split_cols(params["wq"]),
                            split_cols(params["wk"]),
                            split_cols(params["wv"])], axis=-1)   # (H, D, 3*d_k)

    def split_bias(b):  # (1, D) -> (H, 1, d_k)
        return b.reshape(num_heads, 1, d_k)

    bqkv = jnp.concatenate([split_bias(params["bq"]),
                            split_bias(params["bk"]),
                            split_bias(params["bv"])], axis=-1)   # (H, 1, 3*d_k)

    wo_heads = params["wo"].reshape(num_heads, d_k, d_model)      # rows per head
    return wqkv, bqkv, wo_heads


def encoder_layer(x, mask, params, *, num_heads, block_b=None):
    """x: (B, S, D) f32, mask: (B, S, S) f32 (0 = masked). Returns (B, S, D)."""
    B, S, D = x.shape
    F = params["w1"].shape[1]
    assert D % num_heads == 0
    d_k = D // num_heads

    # choose how many batch elements per grid step (aim for M = block_b*S ~ 256)
    if block_b is None:
        block_b = min(B, max(1, 256 // max(S, 1)))
    block_b = max(1, min(block_b, B))
    while B % block_b:
        block_b -= 1

    wqkv, bqkv, wo_h = _pack_heads(params, num_heads, d_k, D)
    args = (x, mask, wqkv, bqkv, wo_h, params["bo"],
            params["g1"], params["bt1"],
            params["w1"], params["b1"], params["w2"], params["b2"],
            params["g2"], params["bt2"])

    # explicit VMEM budget: double-buffered streamed blocks + resident weights + scratch
    f32 = 4
    est = f32 * (2 * block_b * S * D                       # x
                 + 2 * block_b * S * S                     # mask
                 + 2 * block_b * S * D                     # out
                 + 2 * (D * 3 * d_k + 3 * d_k + d_k * D)   # per-head weights
                 + (D * F + F + F * D + 6 * D)             # constant weights/biases
                 + block_b * S * D + block_b * S * S)      # scratch (acc + bias)
    vmem_limit = int(min(96 * 2**20, max(2 * est, 16 * 2**20)))

    def build(single_buffer_consts):
        const_kwargs = (dict(pipeline_mode=pl.Buffered(1))
                        if single_buffer_consts else {})

        def const_spec(shape):
            # grid-constant weights: fetched once, single-buffered when supported
            return pl.BlockSpec(shape, lambda b, h: (0,) * len(shape),
                                **const_kwargs)

        in_specs = [
            pl.BlockSpec((block_b, S, D), lambda b, h: (b, 0, 0)),   # x
            pl.BlockSpec((block_b, S, S), lambda b, h: (b, 0, 0)),   # mask
            pl.BlockSpec((1, D, 3 * d_k), lambda b, h: (h, 0, 0)),   # fused Wqkv[h]
            pl.BlockSpec((1, 1, 3 * d_k), lambda b, h: (h, 0, 0)),   # fused bqkv[h]
            pl.BlockSpec((1, d_k, D), lambda b, h: (h, 0, 0)),       # Wo rows of head h
            const_spec((1, D)),                                      # bo
            const_spec((1, D)), const_spec((1, D)),                  # ln1 gamma, beta
            const_spec((D, F)), const_spec((1, F)),                  # W1, b1
            const_spec((F, D)), const_spec((1, D)),                  # W2, b2
            const_spec((1, D)), const_spec((1, D)),                  # ln2 gamma, beta
        ]

        return pl.pallas_call(
            _encoder_layer_kernel,
            out_shape=jax.ShapeDtypeStruct((B, S, D), jnp.float32),
            grid_spec=pltpu.PrefetchScalarGridSpec(
                num_scalar_prefetch=0,
                grid=(B // block_b, num_heads),        # heads = reduction axis (last)
                in_specs=in_specs,
                out_specs=pl.BlockSpec((block_b, S, D), lambda b, h: (b, 0, 0)),
                scratch_shapes=[
                    pltpu.VMEM((block_b * S, D), jnp.float32),   # W_o accumulator
                    pltpu.VMEM((block_b, S, S), jnp.float32),    # additive mask bias
                ]),
            compiler_params=pltpu.CompilerParams(
                dimension_semantics=("parallel", "arbitrary"),
                vmem_limit_bytes=vmem_limit))

    try:
        out = build(True)(*args)
        return jax.block_until_ready(out)
    except Exception:
        # pipeline_mode=pl.Buffered(1) not supported on this Pallas version:
        # fall back to default double buffering for the constant weights.
        return build(False)(*args)


def _reference(x, mask, params, *, num_heads):
    """Pure-JAX reference mirroring the PyTorch forward (dropout = identity)."""
    B, S, D = x.shape
    d_k = D // num_heads

    def lin(v, w, b):
        return v @ w + b

    q = lin(x, params["wq"], params["bq"]).reshape(B, S, num_heads, d_k).transpose(0, 2, 1, 3)
    k = lin(x, params["wk"], params["bk"]).reshape(B, S, num_heads, d_k).transpose(0, 2, 1, 3)
    v = lin(x, params["wv"], params["bv"]).reshape(B, S, num_heads, d_k).transpose(0, 2, 1, 3)
    scores = jnp.einsum("bhqd,bhkd->bhqk", q, k) / math.sqrt(d_k)
    scores = jnp.where(mask[:, None, :, :] == 0, -1e9, scores)
    p = jax.nn.softmax(scores, axis=-1)
    attn = jnp.einsum("bhqk,bhkd->bhqd", p, v).transpose(0, 2, 1, 3).reshape(B, S, D)
    attn = lin(attn, params["wo"], params["bo"])

    def ln(z, g, b):
        mu = jnp.mean(z, axis=-1, keepdims=True)
        var = jnp.mean((z - mu) ** 2, axis=-1, keepdims=True)
        return (z - mu) / jnp.sqrt(var + 1e-5) * g + b

    y1 = ln(attn + x, params["g1"], params["bt1"])
    f = lin(jnp.maximum(lin(y1, params["w1"], params["b1"]), 0.0),
            params["w2"], params["b2"])
    return ln(f + y1, params["g2"], params["bt2"])


if __name__ == "__main__":
    B, S, D, H, F = 2, 8, 32, 4, 64      # batch, seq, d_model, heads, ffn hidden

    key = jax.random.PRNGKey(0)
    keys = jax.random.split(key, 16)

    def rnd(k, shape, scale=0.05):
        return (scale * jax.random.normal(k, shape)).astype(jnp.float32)

    params = {
        "wq": rnd(keys[0], (D, D)), "bq": rnd(keys[1], (1, D)),
        "wk": rnd(keys[2], (D, D)), "bk": rnd(keys[3], (1, D)),
        "wv": rnd(keys[4], (D, D)), "bv": rnd(keys[5], (1, D)),
        "wo": rnd(keys[6], (D, D)), "bo": rnd(keys[7], (1, D)),
        "g1": jnp.ones((1, D), jnp.float32), "bt1": jnp.zeros((1, D), jnp.float32),
        "w1": rnd(keys[8], (D, F)), "b1": rnd(keys[9], (1, F)),
        "w2": rnd(keys[10], (F, D)), "b2": rnd(keys[11], (1, D)),
        "g2": jnp.ones((1, D), jnp.float32), "bt2": jnp.zeros((1, D), jnp.float32),
    }

    x = jax.random.normal(keys[12], (B, S, D), dtype=jnp.float32)
    # causal mask, broadcast over heads (mask==0 -> -1e9), matches mask.unsqueeze(1)
    mask = jnp.tril(jnp.ones((S, S), jnp.float32))[None].repeat(B, axis=0)

    out = encoder_layer(x, mask, params, num_heads=H)
    out = jax.block_until_ready(out)

    ref = _reference(x, mask, params, num_heads=H)
    # tolerance loosened from 1e-4: softmax uses the EUP approximate reciprocal.
    np.testing.assert_allclose(np.asarray(out), np.asarray(ref),
                               rtol=5e-3, atol=5e-3)

    print("KERNEL_OK")
</pallas_src>

<mosaic_0001>
module attributes {stable_mosaic.version = 11 : i64} {
  func.func @_encoder_layer_kernel(%arg0: i32, %arg1: i32, %arg2: memref<2x8x32xf32, #tpu.memory_space<vmem>>, %arg3: memref<2x8x8xf32, #tpu.memory_space<vmem>>, %arg4: memref<1x32x24xf32, #tpu.memory_space<vmem>>, %arg5: memref<1x1x24xf32, #tpu.memory_space<vmem>>, %arg6: memref<1x8x32xf32, #tpu.memory_space<vmem>>, %arg7: memref<1x32xf32, #tpu.memory_space<vmem>>, %arg8: memref<1x32xf32, #tpu.memory_space<vmem>>, %arg9: memref<1x32xf32, #tpu.memory_space<vmem>>, %arg10: memref<32x64xf32, #tpu.memory_space<vmem>>, %arg11: memref<1x64xf32, #tpu.memory_space<vmem>>, %arg12: memref<64x32xf32, #tpu.memory_space<vmem>>, %arg13: memref<1x32xf32, #tpu.memory_space<vmem>>, %arg14: memref<1x32xf32, #tpu.memory_space<vmem>>, %arg15: memref<1x32xf32, #tpu.memory_space<vmem>>, %arg16: memref<2x8x32xf32, #tpu.memory_space<vmem>>, %arg17: memref<16x32xf32, #tpu.memory_space<vmem>>, %arg18: memref<2x8x8xf32, #tpu.memory_space<vmem>>) attributes {dimension_semantics = [#tpu.dimension_semantics<parallel>, #tpu.dimension_semantics<arbitrary>], iteration_bounds = array<i64: 1, 4>, scalar_prefetch = 0 : i64, scratch_operands = 2 : i64, tpu.core_type = #tpu.core_type<tc>, window_params = [{transform_indices = @transform_0, window_bounds = array<i64: 2, 8, 32>}, {transform_indices = @transform_1, window_bounds = array<i64: 2, 8, 8>}, {transform_indices = @transform_2, window_bounds = array<i64: 1, 32, 24>}, {transform_indices = @transform_3, window_bounds = array<i64: 1, 1, 24>}, {transform_indices = @transform_4, window_bounds = array<i64: 1, 8, 32>}, {pipeline_mode = #tpu.pipeline_mode<synchronous>, transform_indices = @transform_5, window_bounds = array<i64: 1, 32>}, {pipeline_mode = #tpu.pipeline_mode<synchronous>, transform_indices = @transform_6, window_bounds = array<i64: 1, 32>}, {pipeline_mode = #tpu.pipeline_mode<synchronous>, transform_indices = @transform_7, window_bounds = array<i64: 1, 32>}, {pipeline_mode = #tpu.pipeline_mode<synchronous>, transform_indices = @transform_8, window_bounds = array<i64: 32, 64>}, {pipeline_mode = #tpu.pipeline_mode<synchronous>, transform_indices = @transform_9, window_bounds = array<i64: 1, 64>}, {pipeline_mode = #tpu.pipeline_mode<synchronous>, transform_indices = @transform_10, window_bounds = array<i64: 64, 32>}, {pipeline_mode = #tpu.pipeline_mode<synchronous>, transform_indices = @transform_11, window_bounds = array<i64: 1, 32>}, {pipeline_mode = #tpu.pipeline_mode<synchronous>, transform_indices = @transform_12, window_bounds = array<i64: 1, 32>}, {pipeline_mode = #tpu.pipeline_mode<synchronous>, transform_indices = @transform_13, window_bounds = array<i64: 1, 32>}, {transform_indices = @transform_14, window_bounds = array<i64: 2, 8, 32>}]} {
    %c0 = arith.constant 0 : index
    %c0_0 = arith.constant 0 : index
    %c0_1 = arith.constant 0 : index
    %0 = vector.load %arg2[%c0, %c0_0, %c0_1] : memref<2x8x32xf32, #tpu.memory_space<vmem>>, vector<2x8x32xf32>
    %1 = vector.shape_cast %0 : vector<2x8x32xf32> to vector<16x32xf32>
    %c0_i32 = arith.constant 0 : i32
    %2 = arith.cmpi eq, %arg1, %c0_i32 : i32
    %3 = arith.extui %2 : i1 to i32
    %c0_i32_2 = arith.constant 0 : i32
    %4 = arith.cmpi ne, %3, %c0_i32_2 : i32
    scf.if %4 {
      %cst_26 = arith.constant 0.000000e+00 : f32
      %42 = vector.broadcast %cst_26 : f32 to vector<16x32xf32>
      %c0_27 = arith.constant 0 : index
      %c0_28 = arith.constant 0 : index
      %43 = vector.load %arg17[%c0_27, %c0_28] : memref<16x32xf32, #tpu.memory_space<vmem>>, vector<16x32xf32>
      tpu.vector_store %arg17[%c0_27, %c0_28], %42 {strides = array<i32>} : memref<16x32xf32, #tpu.memory_space<vmem>>, vector<16x32xf32>,
      %c0_29 = arith.constant 0 : index
      %c0_30 = arith.constant 0 : index
      %c0_31 = arith.constant 0 : index
      %44 = vector.load %arg3[%c0_29, %c0_30, %c0_31] : memref<2x8x8xf32, #tpu.memory_space<vmem>>, vector<2x8x8xf32>
      %cst_32 = arith.constant 0.000000e+00 : f32
      %45 = vector.broadcast %cst_32 : f32 to vector<2x8x8xf32>
      %46 = arith.cmpf oeq, %44, %45 : vector<2x8x8xf32>
      %cst_33 = arith.constant -1.000000e+09 : f32
      %cst_34 = arith.constant 0.000000e+00 : f32
      %47 = vector.broadcast %cst_33 : f32 to vector<2x8x8xf32>
      %48 = vector.broadcast %cst_34 : f32 to vector<2x8x8xf32>
      %49 = arith.select %46, %47, %48 : vector<2x8x8xi1>, vector<2x8x8xf32>
      %c0_35 = arith.constant 0 : index
      %c0_36 = arith.constant 0 : index
      %c0_37 = arith.constant 0 : index
      %50 = vector.load %arg18[%c0_35, %c0_36, %c0_37] : memref<2x8x8xf32, #tpu.memory_space<vmem>>, vector<2x8x8xf32>
      tpu.vector_store %arg18[%c0_35, %c0_36, %c0_37], %49 {strides = array<i32>} : memref<2x8x8xf32, #tpu.memory_space<vmem>>, vector<2x8x8xf32>,
    } else {
    }
    %c0_3 = arith.constant 0 : index
    %c0_4 = arith.constant 0 : index
    %c0_5 = arith.constant 0 : index
    %5 = vector.load %arg4[%c0_3, %c0_4, %c0_5] : memref<1x32x24xf32, #tpu.memory_space<vmem>>, vector<1x32x24xf32>
    %6 = vector.shape_cast %5 : vector<1x32x24xf32> to vector<32x24xf32>
    %cst = arith.constant dense<0.000000e+00> : vector<16x24xf32>
    %7 = tpu.matmul %1, %6, %cst {dimension_numbers = #tpu.dot_dimension_numbers<[1], [0], [0], [1], [0, 0, 1, 1], [], []>} : vector<16x32xf32>, vector<32x24xf32>, vector<16x24xf32> -> vector<16x24xf32>
    %c0_6 = arith.constant 0 : index
    %c0_7 = arith.constant 0 : index
    %c0_8 = arith.constant 0 : index
    %8 = vector.load %arg5[%c0_6, %c0_7, %c0_8] : memref<1x1x24xf32, #tpu.memory_space<vmem>>, vector<1x1x24xf32>
    %9 = vector.shape_cast %8 : vector<1x1x24xf32> to vector<1x24xf32>
    %10 = vector.broadcast %9 : vector<1x24xf32> to vector<16x24xf32>
    %11 = arith.addf %7, %10 : vector<16x24xf32>
    %12 = vector.shape_cast %11 : vector<16x24xf32> to vector<2x8x24xf32>
    %13 = vector.extract_strided_slice %12 {offsets = [0, 0, 0], sizes = [2, 8, 8], strides = [1, 1, 1]} : vector<2x8x24xf32> to vector<2x8x8xf32>
    %14 = vector.extract_strided_slice %12 {offsets = [0, 0, 8], sizes = [2, 8, 8], strides = [1, 1, 1]} : vector<2x8x24xf32> to vector<2x8x8xf32>
    %15 = vector.extract_strided_slice %12 {offsets = [0, 0, 16], sizes = [2, 8, 8], strides = [1, 1, 1]} : vector<2x8x24xf32> to vector<2x8x8xf32>
    "tpu.trace_start"() <{level = 10 : i32, message = "bqd,bkd->bqk"}> : () -> ()
    %cst_9 = arith.constant dense<0.000000e+00> : vector<2x8x8xf32>
    %16 = tpu.matmul %13, %14, %cst_9 {dimension_numbers = #tpu.dot_dimension_numbers<[2], [2], [1], [1], [0, 0, 0, 1, 1, 1], [0], [0]>} : vector<2x8x8xf32>, vector<2x8x8xf32>, vector<2x8x8xf32> -> vector<2x8x8xf32>
    "tpu.trace_stop"() : () -> ()
    %cst_10 = arith.constant 0.353553385 : f32
    %17 = vector.broadcast %cst_10 : f32 to vector<2x8x8xf32>
    %18 = arith.mulf %16, %17 : vector<2x8x8xf32>
    %c0_11 = arith.constant 0 : index
    %c0_12 = arith.constant 0 : index
    %c0_13 = arith.constant 0 : index
    %19 = vector.load %arg18[%c0_11, %c0_12, %c0_13] : memref<2x8x8xf32, #tpu.memory_space<vmem>>, vector<2x8x8xf32>
    %20 = arith.addf %18, %19 : vector<2x8x8xf32>
    %cst_14 = arith.constant dense<0xFF800000> : vector<2x8xf32>
    %21 = vector.multi_reduction <maximumf>, %20, %cst_14 [2] : vector<2x8x8xf32> to vector<2x8xf32>
    %22 = vector.shape_cast %21 : vector<2x8xf32> to vector<2x8x1xf32>
    %23 = vector.broadcast %22 : vector<2x8x1xf32> to vector<2x8x8xf32>
    %24 = arith.subf %20, %23 : vector<2x8x8xf32>
    %25 = math.exp %24 : vector<2x8x8xf32>
    %cst_15 = arith.constant dense<0.000000e+00> : vector<2x8xf32>
    %26 = vector.multi_reduction <add>, %25, %cst_15 [2] : vector<2x8x8xf32> to vector<2x8xf32>
    %27 = vector.shape_cast %26 : vector<2x8xf32> to vector<2x8x1xf32>
    %28 = tpu.reciprocal %27 {approx = true} : vector<2x8x1xf32> -> vector<2x8x1xf32>
    %29 = vector.broadcast %28 : vector<2x8x1xf32> to vector<2x8x8xf32>
    %30 = arith.mulf %25, %29 : vector<2x8x8xf32>
    "tpu.trace_start"() <{level = 10 : i32, message = "bqk,bkd->bqd"}> : () -> ()
    %cst_16 = arith.constant dense<0.000000e+00> : vector<2x8x8xf32>
    %31 = tpu.matmul %30, %15, %cst_16 {dimension_numbers = #tpu.dot_dimension_numbers<[2], [1], [1], [2], [0, 0, 0, 1, 1, 2], [0], [0]>} : vector<2x8x8xf32>, vector<2x8x8xf32>, vector<2x8x8xf32> -> vector<2x8x8xf32>
    "tpu.trace_stop"() : () -> ()
    %c0_17 = arith.constant 0 : index
    %c0_18 = arith.constant 0 : index
    %32 = vector.load %arg17[%c0_17, %c0_18] : memref<16x32xf32, #tpu.memory_space<vmem>>, vector<16x32xf32>
    %33 = vector.shape_cast %31 : vector<2x8x8xf32> to vector<16x8xf32>
    %c0_19 = arith.constant 0 : index
    %c0_20 = arith.constant 0 : index
    %c0_21 = arith.constant 0 : index
    %34 = vector.load %arg6[%c0_19, %c0_20, %c0_21] : memref<1x8x32xf32, #tpu.memory_space<vmem>>, vector<1x8x32xf32>
    %35 = vector.shape_cast %34 : vector<1x8x32xf32> to vector<8x32xf32>
    %cst_22 = arith.constant dense<0.000000e+00> : vector<16x32xf32>
    %36 = tpu.matmul %33, %35, %cst_22 {dimension_numbers = #tpu.dot_dimension_numbers<[1], [0], [0], [1], [0, 0, 1, 1], [], []>} : vector<16x8xf32>, vector<8x32xf32>, vector<16x32xf32> -> vector<16x32xf32>
    %37 = arith.addf %32, %36 : vector<16x32xf32>
    %c0_23 = arith.constant 0 : index
    %c0_24 = arith.constant 0 : index
    %38 = vector.load %arg17[%c0_23, %c0_24] : memref<16x32xf32, #tpu.memory_space<vmem>>, vector<16x32xf32>
    tpu.vector_store %arg17[%c0_23, %c0_24], %37 {strides = array<i32>} : memref<16x32xf32, #tpu.memory_space<vmem>>, vector<16x32xf32>,
    %c3_i32 = arith.constant 3 : i32
    %39 = arith.cmpi eq, %arg1, %c3_i32 : i32
    %40 = arith.extui %39 : i1 to i32
    %c0_i32_25 = arith.constant 0 : i32
    %41 = arith.cmpi ne, %40, %c0_i32_25 : i32
    scf.if %41 {
      %c0_26 = arith.constant 0 : index
      %c0_27 = arith.constant 0 : index
      %42 = vector.load %arg17[%c0_26, %c0_27] : memref<16x32xf32, #tpu.memory_space<vmem>>, vector<16x32xf32>
      %c0_28 = arith.constant 0 : index
      %c0_29 = arith.constant 0 : index
      %43 = vector.load %arg7[%c0_28, %c0_29] : memref<1x32xf32, #tpu.memory_space<vmem>>, vector<1x32xf32>
      %44 = vector.broadcast %43 : vector<1x32xf32> to vector<16x32xf32>
      %45 = arith.addf %42, %44 : vector<16x32xf32>
      %46 = arith.addf %45, %1 : vector<16x32xf32>
      %cst_30 = arith.constant dense<0.000000e+00> : vector<16xf32>
      %47 = vector.multi_reduction <add>, %46, %cst_30 [1] : vector<16x32xf32> to vector<16xf32>
      %48 = vector.shape_cast %47 : vector<16xf32> to vector<16x1xf32>
      %cst_31 = arith.constant 3.200000e+01 : f32
      %49 = vector.broadcast %cst_31 : f32 to vector<16x1xf32>
      %50 = arith.divf %48, %49 : vector<16x1xf32>
      %51 = vector.broadcast %50 : vector<16x1xf32> to vector<16x32xf32>
      %52 = arith.subf %46, %51 : vector<16x32xf32>
      %53 = arith.mulf %52, %52 : vector<16x32xf32>
      %cst_32 = arith.constant dense<0.000000e+00> : vector<16xf32>
      %54 = vector.multi_reduction <add>, %53, %cst_32 [1] : vector<16x32xf32> to vector<16xf32>
      %55 = vector.shape_cast %54 : vector<16xf32> to vector<16x1xf32>
      %cst_33 = arith.constant 3.200000e+01 : f32
      %56 = vector.broadcast %cst_33 : f32 to vector<16x1xf32>
      %57 = arith.divf %55, %56 : vector<16x1xf32>
      %58 = vector.broadcast %50 : vector<16x1xf32> to vector<16x32xf32>
      %59 = arith.subf %46, %58 : vector<16x32xf32>
      %cst_34 = arith.constant 9.99999974E-6 : f32
      %60 = vector.broadcast %cst_34 : f32 to vector<16x1xf32>
      %61 = arith.addf %57, %60 : vector<16x1xf32>
      %62 = math.rsqrt %61 : vector<16x1xf32>
      %63 = vector.broadcast %62 : vector<16x1xf32> to vector<16x32xf32>
      %64 = arith.mulf %59, %63 : vector<16x32xf32>
      %c0_35 = arith.constant 0 : index
      %c0_36 = arith.constant 0 : index
      %65 = vector.load %arg8[%c0_35, %c0_36] : memref<1x32xf32, #tpu.memory_space<vmem>>, vector<1x32xf32>
      %66 = vector.broadcast %65 : vector<1x32xf32> to vector<16x32xf32>
      %67 = arith.mulf %64, %66 : vector<16x32xf32>
      %c0_37 = arith.constant 0 : index
      %c0_38 = arith.constant 0 : index
      %68 = vector.load %arg9[%c0_37, %c0_38] : memref<1x32xf32, #tpu.memory_space<vmem>>, vector<1x32xf32>
      %69 = vector.broadcast %68 : vector<1x32xf32> to vector<16x32xf32>
      %70 = arith.addf %67, %69 : vector<16x32xf32>
      %c0_39 = arith.constant 0 : index
      %c0_40 = arith.constant 0 : index
      %71 = vector.load %arg10[%c0_39, %c0_40] : memref<32x64xf32, #tpu.memory_space<vmem>>, vector<32x64xf32>
      %cst_41 = arith.constant dense<0.000000e+00> : vector<16x64xf32>
      %72 = tpu.matmul %70, %71, %cst_41 {dimension_numbers = #tpu.dot_dimension_numbers<[1], [0], [0], [1], [0, 0, 1, 1], [], []>} : vector<16x32xf32>, vector<32x64xf32>, vector<16x64xf32> -> vector<16x64xf32>
      %c0_42 = arith.constant 0 : index
      %c0_43 = arith.constant 0 : index
      %73 = vector.load %arg11[%c0_42, %c0_43] : memref<1x64xf32, #tpu.memory_space<vmem>>, vector<1x64xf32>
      %74 = vector.broadcast %73 : vector<1x64xf32> to vector<16x64xf32>
      %75 = arith.addf %72, %74 : vector<16x64xf32>
      %cst_44 = arith.constant 0.000000e+00 : f32
      %76 = vector.broadcast %cst_44 : f32 to vector<16x64xf32>
      %77 = arith.maximumf %75, %76 : vector<16x64xf32>
      %c0_45 = arith.constant 0 : index
      %c0_46 = arith.constant 0 : index
      %78 = vector.load %arg12[%c0_45, %c0_46] : memref<64x32xf32, #tpu.memory_space<vmem>>, vector<64x32xf32>
      %cst_47 = arith.constant dense<0.000000e+00> : vector<16x32xf32>
      %79 = tpu.matmul %77, %78, %cst_47 {dimension_numbers = #tpu.dot_dimension_numbers<[1], [0], [0], [1], [0, 0, 1, 1], [], []>} : vector<16x64xf32>, vector<64x32xf32>, vector<16x32xf32> -> vector<16x32xf32>
      %c0_48 = arith.constant 0 : index
      %c0_49 = arith.constant 0 : index
      %80 = vector.load %arg13[%c0_48, %c0_49] : memref<1x32xf32, #tpu.memory_space<vmem>>, vector<1x32xf32>
      %81 = vector.broadcast %80 : vector<1x32xf32> to vector<16x32xf32>
      %82 = arith.addf %79, %81 : vector<16x32xf32>
      %83 = arith.addf %82, %70 : vector<16x32xf32>
      %cst_50 = arith.constant dense<0.000000e+00> : vector<16xf32>
      %84 = vector.multi_reduction <add>, %83, %cst_50 [1] : vector<16x32xf32> to vector<16xf32>
      %85 = vector.shape_cast %84 : vector<16xf32> to vector<16x1xf32>
      %cst_51 = arith.constant 3.200000e+01 : f32
      %86 = vector.broadcast %cst_51 : f32 to vector<16x1xf32>
      %87 = arith.divf %85, %86 : vector<16x1xf32>
      %88 = vector.broadcast %87 : vector<16x1xf32> to vector<16x32xf32>
      %89 = arith.subf %83, %88 : vector<16x32xf32>
      %90 = arith.mulf %89, %89 : vector<16x32xf32>
      %cst_52 = arith.constant dense<0.000000e+00> : vector<16xf32>
      %91 = vector.multi_reduction <add>, %90, %cst_52 [1] : vector<16x32xf32> to vector<16xf32>
      %92 = vector.shape_cast %91 : vector<16xf32> to vector<16x1xf32>
      %cst_53 = arith.constant 3.200000e+01 : f32
      %93 = vector.broadcast %cst_53 : f32 to vector<16x1xf32>
      %94 = arith.divf %92, %93 : vector<16x1xf32>
      %95 = vector.broadcast %87 : vector<16x1xf32> to vector<16x32xf32>
      %96 = arith.subf %83, %95 : vector<16x32xf32>
      %cst_54 = arith.constant 9.99999974E-6 : f32
      %97 = vector.broadcast %cst_54 : f32 to vector<16x1xf32>
      %98 = arith.addf %94, %97 : vector<16x1xf32>
      %99 = math.rsqrt %98 : vector<16x1xf32>
      %100 = vector.broadcast %99 : vector<16x1xf32> to vector<16x32xf32>
      %101 = arith.mulf %96, %100 : vector<16x32xf32>
      %c0_55 = arith.constant 0 : index
      %c0_56 = arith.constant 0 : index
      %102 = vector.load %arg14[%c0_55, %c0_56] : memref<1x32xf32, #tpu.memory_space<vmem>>, vector<1x32xf32>
      %103 = vector.broadcast %102 : vector<1x32xf32> to vector<16x32xf32>
      %104 = arith.mulf %101, %103 : vector<16x32xf32>
      %c0_57 = arith.constant 0 : index
      %c0_58 = arith.constant 0 : index
      %105 = vector.load %arg15[%c0_57, %c0_58] : memref<1x32xf32, #tpu.memory_space<vmem>>, vector<1x32xf32>
      %106 = vector.broadcast %105 : vector<1x32xf32> to vector<16x32xf32>
      %107 = arith.addf %104, %106 : vector<16x32xf32>
      %108 = vector.shape_cast %107 : vector<16x32xf32> to vector<2x8x32xf32>
      %c0_59 = arith.constant 0 : index
      %c0_60 = arith.constant 0 : index
      %c0_61 = arith.constant 0 : index
      %109 = vector.load %arg16[%c0_59, %c0_60, %c0_61] : memref<2x8x32xf32, #tpu.memory_space<vmem>>, vector<2x8x32xf32>
      tpu.vector_store %arg16[%c0_59, %c0_60, %c0_61], %108 {strides = array<i32>} : memref<2x8x32xf32, #tpu.memory_space<vmem>>, vector<2x8x32xf32>,
    } else {
    }
    return
  }
  func.func @transform_0(%arg0: i32, %arg1: i32) -> (i32, i32, i32) {
    %c0_i32 = arith.constant 0 : i32
    %c0_i32_0 = arith.constant 0 : i32
    %c0_i32_1 = arith.constant 0 : i32
    return %arg0, %c0_i32, %c0_i32_0 : i32, i32, i32
  }
  func.func @transform_1(%arg0: i32, %arg1: i32) -> (i32, i32, i32) {
    %c0_i32 = arith.constant 0 : i32
    %c0_i32_0 = arith.constant 0 : i32
    %c0_i32_1 = arith.constant 0 : i32
    return %arg0, %c0_i32, %c0_i32_0 : i32, i32, i32
  }
  func.func @transform_2(%arg0: i32, %arg1: i32) -> (i32, i32, i32) {
    %c0_i32 = arith.constant 0 : i32
    %c0_i32_0 = arith.constant 0 : i32
    %c0_i32_1 = arith.constant 0 : i32
    return %arg1, %c0_i32, %c0_i32_0 : i32, i32, i32
  }
  func.func @transform_3(%arg0: i32, %arg1: i32) -> (i32, i32, i32) {
    %c0_i32 = arith.constant 0 : i32
    %c0_i32_0 = arith.constant 0 : i32
    %c0_i32_1 = arith.constant 0 : i32
    return %arg1, %c0_i32, %c0_i32_0 : i32, i32, i32
  }
  func.func @transform_4(%arg0: i32, %arg1: i32) -> (i32, i32, i32) {
    %c0_i32 = arith.constant 0 : i32
    %c0_i32_0 = arith.constant 0 : i32
    %c0_i32_1 = arith.constant 0 : i32
    return %arg1, %c0_i32, %c0_i32_0 : i32, i32, i32
  }
  func.func @transform_5(%arg0: i32, %arg1: i32) -> (i32, i32) {
    %c0_i32 = arith.constant 0 : i32
    %c0_i32_0 = arith.constant 0 : i32
    %c0_i32_1 = arith.constant 0 : i32
    return %c0_i32, %c0_i32_0 : i32, i32
  }
  func.func @transform_6(%arg0: i32, %arg1: i32) -> (i32, i32) {
    %c0_i32 = arith.constant 0 : i32
    %c0_i32_0 = arith.constant 0 : i32
    %c0_i32_1 = arith.constant 0 : i32
    return %c0_i32, %c0_i32_0 : i32, i32
  }
  func.func @transform_7(%arg0: i32, %arg1: i32) -> (i32, i32) {
    %c0_i32 = arith.constant 0 : i32
    %c0_i32_0 = arith.constant 0 : i32
    %c0_i32_1 = arith.constant 0 : i32
    return %c0_i32, %c0_i32_0 : i32, i32
  }
  func.func @transform_8(%arg0: i32, %arg1: i32) -> (i32, i32) {
    %c0_i32 = arith.constant 0 : i32
    %c0_i32_0 = arith.constant 0 : i32
    %c0_i32_1 = arith.constant 0 : i32
    return %c0_i32, %c0_i32_0 : i32, i32
  }
  func.func @transform_9(%arg0: i32, %arg1: i32) -> (i32, i32) {
    %c0_i32 = arith.constant 0 : i32
    %c0_i32_0 = arith.constant 0 : i32
    %c0_i32_1 = arith.constant 0 : i32
    return %c0_i32, %c0_i32_0 : i32, i32
  }
  func.func @transform_10(%arg0: i32, %arg1: i32) -> (i32, i32) {
    %c0_i32 = arith.constant 0 : i32
    %c0_i32_0 = arith.constant 0 : i32
    %c0_i32_1 = arith.constant 0 : i32
    return %c0_i32, %c0_i32_0 : i32, i32
  }
  func.func @transform_11(%arg0: i32, %arg1: i32) -> (i32, i32) {
    %c0_i32 = arith.constant 0 : i32
    %c0_i32_0 = arith.constant 0 : i32
    %c0_i32_1 = arith.constant 0 : i32
    return %c0_i32, %c0_i32_0 : i32, i32
  }
  func.func @transform_12(%arg0: i32, %arg1: i32) -> (i32, i32) {
    %c0_i32 = arith.constant 0 : i32
    %c0_i32_0 = arith.constant 0 : i32
    %c0_i32_1 = arith.constant 0 : i32
    return %c0_i32, %c0_i32_0 : i32, i32
  }
  func.func @transform_13(%arg0: i32, %arg1: i32) -> (i32, i32) {
    %c0_i32 = arith.constant 0 : i32
    %c0_i32_0 = arith.constant 0 : i32
    %c0_i32_1 = arith.constant 0 : i32
    return %c0_i32, %c0_i32_0 : i32, i32
  }
  func.func @transform_14(%arg0: i32, %arg1: i32) -> (i32, i32, i32) {
    %c0_i32 = arith.constant 0 : i32
    %c0_i32_0 = arith.constant 0 : i32
    %c0_i32_1 = arith.constant 0 : i32
    return %arg0, %c0_i32, %c0_i32_0 : i32, i32, i32
  }
}

module attributes {stable_mosaic.version = 11 : i64} {
  func.func @_encoder_layer_kernel(%arg0: i32, %arg1: i32, %arg2: memref<2x8x32xf32, #tpu.memory_space<vmem>>, %arg3: memref<2x8x8xf32, #tpu.memory_space<vmem>>, %arg4: memref<1x32x24xf32, #tpu.memory_space<vmem>>, %arg5: memref<1x1x24xf32, #tpu.memory_space<vmem>>, %arg6: memref<1x8x32xf32, #tpu.memory_space<vmem>>, %arg7: memref<1x32xf32, #tpu.memory_space<vmem>>, %arg8: memref<1x32xf32, #tpu.memory_space<vmem>>, %arg9: memref<1x32xf32, #tpu.memory_space<vmem>>, %arg10: memref<32x64xf32, #tpu.memory_space<vmem>>, %arg11: memref<1x64xf32, #tpu.memory_space<vmem>>, %arg12: memref<64x32xf32, #tpu.memory_space<vmem>>, %arg13: memref<1x32xf32, #tpu.memory_space<vmem>>, %arg14: memref<1x32xf32, #tpu.memory_space<vmem>>, %arg15: memref<1x32xf32, #tpu.memory_space<vmem>>, %arg16: memref<2x8x32xf32, #tpu.memory_space<vmem>>, %arg17: memref<16x32xf32, #tpu.memory_space<vmem>>, %arg18: memref<2x8x8xf32, #tpu.memory_space<vmem>>) attributes {dimension_semantics = [#tpu.dimension_semantics<parallel>, #tpu.dimension_semantics<arbitrary>], iteration_bounds = array<i64: 1, 4>, scalar_prefetch = 0 : i64, scratch_operands = 2 : i64, tpu.core_type = #tpu.core_type<tc>, window_params = [{transform_indices = @transform_0, window_bounds = array<i64: 2, 8, 32>}, {transform_indices = @transform_1, window_bounds = array<i64: 2, 8, 8>}, {transform_indices = @transform_2, window_bounds = array<i64: 1, 32, 24>}, {transform_indices = @transform_3, window_bounds = array<i64: 1, 1, 24>}, {transform_indices = @transform_4, window_bounds = array<i64: 1, 8, 32>}, {pipeline_mode = #tpu.pipeline_mode<synchronous>, transform_indices = @transform_5, window_bounds = array<i64: 1, 32>}, {pipeline_mode = #tpu.pipeline_mode<synchronous>, transform_indices = @transform_6, window_bounds = array<i64: 1, 32>}, {pipeline_mode = #tpu.pipeline_mode<synchronous>, transform_indices = @transform_7, window_bounds = array<i64: 1, 32>}, {pipeline_mode = #tpu.pipeline_mode<synchronous>, transform_indices = @transform_8, window_bounds = array<i64: 32, 64>}, {pipeline_mode = #tpu.pipeline_mode<synchronous>, transform_indices = @transform_9, window_bounds = array<i64: 1, 64>}, {pipeline_mode = #tpu.pipeline_mode<synchronous>, transform_indices = @transform_10, window_bounds = array<i64: 64, 32>}, {pipeline_mode = #tpu.pipeline_mode<synchronous>, transform_indices = @transform_11, window_bounds = array<i64: 1, 32>}, {pipeline_mode = #tpu.pipeline_mode<synchronous>, transform_indices = @transform_12, window_bounds = array<i64: 1, 32>}, {pipeline_mode = #tpu.pipeline_mode<synchronous>, transform_indices = @transform_13, window_bounds = array<i64: 1, 32>}, {transform_indices = @transform_14, window_bounds = array<i64: 2, 8, 32>}]} {
    %c0 = arith.constant 0 : index
    %c0_0 = arith.constant 0 : index
    %c0_1 = arith.constant 0 : index
    %0 = vector.load %arg2[%c0, %c0_0, %c0_1] : memref<2x8x32xf32, #tpu.memory_space<vmem>>, vector<2x8x32xf32>
    %1 = vector.shape_cast %0 : vector<2x8x32xf32> to vector<16x32xf32>
    %c0_i32 = arith.constant 0 : i32
    %2 = arith.cmpi eq, %arg1, %c0_i32 : i32
    %3 = arith.extui %2 : i1 to i32
    %c0_i32_2 = arith.constant 0 : i32
    %4 = arith.cmpi ne, %3, %c0_i32_2 : i32
    scf.if %4 {
      %cst_26 = arith.constant 0.000000e+00 : f32
      %42 = vector.broadcast %cst_26 : f32 to vector<16x32xf32>
      %c0_27 = arith.constant 0 : index
      %c0_28 = arith.constant 0 : index
      %43 = vector.load %arg17[%c0_27, %c0_28] : memref<16x32xf32, #tpu.memory_space<vmem>>, vector<16x32xf32>
      tpu.vector_store %arg17[%c0_27, %c0_28], %42 {strides = array<i32>} : memref<16x32xf32, #tpu.memory_space<vmem>>, vector<16x32xf32>,
      %c0_29 = arith.constant 0 : index
      %c0_30 = arith.constant 0 : index
      %c0_31 = arith.constant 0 : index
      %44 = vector.load %arg3[%c0_29, %c0_30, %c0_31] : memref<2x8x8xf32, #tpu.memory_space<vmem>>, vector<2x8x8xf32>
      %cst_32 = arith.constant 0.000000e+00 : f32
      %45 = vector.broadcast %cst_32 : f32 to vector<2x8x8xf32>
      %46 = arith.cmpf oeq, %44, %45 : vector<2x8x8xf32>
      %cst_33 = arith.constant -1.000000e+09 : f32
      %cst_34 = arith.constant 0.000000e+00 : f32
      %47 = vector.broadcast %cst_33 : f32 to vector<2x8x8xf32>
      %48 = vector.broadcast %cst_34 : f32 to vector<2x8x8xf32>
      %49 = arith.select %46, %47, %48 : vector<2x8x8xi1>, vector<2x8x8xf32>
      %c0_35 = arith.constant 0 : index
      %c0_36 = arith.constant 0 : index
      %c0_37 = arith.constant 0 : index
      %50 = vector.load %arg18[%c0_35, %c0_36, %c0_37] : memref<2x8x8xf32, #tpu.memory_space<vmem>>, vector<2x8x8xf32>
      tpu.vector_store %arg18[%c0_35, %c0_36, %c0_37], %49 {strides = array<i32>} : memref<2x8x8xf32, #tpu.memory_space<vmem>>, vector<2x8x8xf32>,
    } else {
    }
    %c0_3 = arith.constant 0 : index
    %c0_4 = arith.constant 0 : index
    %c0_5 = arith.constant 0 : index
    %5 = vector.load %arg4[%c0_3, %c0_4, %c0_5] : memref<1x32x24xf32, #tpu.memory_space<vmem>>, vector<1x32x24xf32>
    %6 = vector.shape_cast %5 : vector<1x32x24xf32> to vector<32x24xf32>
    %cst = arith.constant dense<0.000000e+00> : vector<16x24xf32>
    %7 = tpu.matmul %1, %6, %cst {dimension_numbers = #tpu.dot_dimension_numbers<[1], [0], [0], [1], [0, 0, 1, 1], [], []>} : vector<16x32xf32>, vector<32x24xf32>, vector<16x24xf32> -> vector<16x24xf32>
    %c0_6 = arith.constant 0 : index
    %c0_7 = arith.constant 0 : index
    %c0_8 = arith.constant 0 : index
    %8 = vector.load %arg5[%c0_6, %c0_7, %c0_8] : memref<1x1x24xf32, #tpu.memory_space<vmem>>, vector<1x1x24xf32>
    %9 = vector.shape_cast %8 : vector<1x1x24xf32> to vector<1x24xf32>
    %10 = vector.broadcast %9 : vector<1x24xf32> to vector<16x24xf32>
    %11 = arith.addf %7, %10 : vector<16x24xf32>
    %12 = vector.shape_cast %11 : vector<16x24xf32> to vector<2x8x24xf32>
    %13 = vector.extract_strided_slice %12 {offsets = [0, 0, 0], sizes = [2, 8, 8], strides = [1, 1, 1]} : vector<2x8x24xf32> to vector<2x8x8xf32>
    %14 = vector.extract_strided_slice %12 {offsets = [0, 0, 8], sizes = [2, 8, 8], strides = [1, 1, 1]} : vector<2x8x24xf32> to vector<2x8x8xf32>
    %15 = vector.extract_strided_slice %12 {offsets = [0, 0, 16], sizes = [2, 8, 8], strides = [1, 1, 1]} : vector<2x8x24xf32> to vector<2x8x8xf32>
    "tpu.trace_start"() <{level = 10 : i32, message = "bqd,bkd->bqk"}> : () -> ()
    %cst_9 = arith.constant dense<0.000000e+00> : vector<2x8x8xf32>
    %16 = tpu.matmul %13, %14, %cst_9 {dimension_numbers = #tpu.dot_dimension_numbers<[2], [2], [1], [1], [0, 0, 0, 1, 1, 1], [0], [0]>} : vector<2x8x8xf32>, vector<2x8x8xf32>, vector<2x8x8xf32> -> vector<2x8x8xf32>
    "tpu.trace_stop"() : () -> ()
    %cst_10 = arith.constant 0.353553385 : f32
    %17 = vector.broadcast %cst_10 : f32 to vector<2x8x8xf32>
    %18 = arith.mulf %16, %17 : vector<2x8x8xf32>
    %c0_11 = arith.constant 0 : index
    %c0_12 = arith.constant 0 : index
    %c0_13 = arith.constant 0 : index
    %19 = vector.load %arg18[%c0_11, %c0_12, %c0_13] : memref<2x8x8xf32, #tpu.memory_space<vmem>>, vector<2x8x8xf32>
    %20 = arith.addf %18, %19 : vector<2x8x8xf32>
    %cst_14 = arith.constant dense<0xFF800000> : vector<2x8xf32>
    %21 = vector.multi_reduction <maximumf>, %20, %cst_14 [2] : vector<2x8x8xf32> to vector<2x8xf32>
    %22 = vector.shape_cast %21 : vector<2x8xf32> to vector<2x8x1xf32>
    %23 = vector.broadcast %22 : vector<2x8x1xf32> to vector<2x8x8xf32>
    %24 = arith.subf %20, %23 : vector<2x8x8xf32>
    %25 = math.exp %24 : vector<2x8x8xf32>
    %cst_15 = arith.constant dense<0.000000e+00> : vector<2x8xf32>
    %26 = vector.multi_reduction <add>, %25, %cst_15 [2] : vector<2x8x8xf32> to vector<2x8xf32>
    %27 = vector.shape_cast %26 : vector<2x8xf32> to vector<2x8x1xf32>
    %28 = tpu.reciprocal %27 {approx = true} : vector<2x8x1xf32> -> vector<2x8x1xf32>
    %29 = vector.broadcast %28 : vector<2x8x1xf32> to vector<2x8x8xf32>
    %30 = arith.mulf %25, %29 : vector<2x8x8xf32>
    "tpu.trace_start"() <{level = 10 : i32, message = "bqk,bkd->bqd"}> : () -> ()
    %cst_16 = arith.constant dense<0.000000e+00> : vector<2x8x8xf32>
    %31 = tpu.matmul %30, %15, %cst_16 {dimension_numbers = #tpu.dot_dimension_numbers<[2], [1], [1], [2], [0, 0, 0, 1, 1, 2], [0], [0]>} : vector<2x8x8xf32>, vector<2x8x8xf32>, vector<2x8x8xf32> -> vector<2x8x8xf32>
    "tpu.trace_stop"() : () -> ()
    %c0_17 = arith.constant 0 : index
    %c0_18 = arith.constant 0 : index
    %32 = vector.load %arg17[%c0_17, %c0_18] : memref<16x32xf32, #tpu.memory_space<vmem>>, vector<16x32xf32>
    %33 = vector.shape_cast %31 : vector<2x8x8xf32> to vector<16x8xf32>
    %c0_19 = arith.constant 0 : index
    %c0_20 = arith.constant 0 : index
    %c0_21 = arith.constant 0 : index
    %34 = vector.load %arg6[%c0_19, %c0_20, %c0_21] : memref<1x8x32xf32, #tpu.memory_space<vmem>>, vector<1x8x32xf32>
    %35 = vector.shape_cast %34 : vector<1x8x32xf32> to vector<8x32xf32>
    %cst_22 = arith.constant dense<0.000000e+00> : vector<16x32xf32>
    %36 = tpu.matmul %33, %35, %cst_22 {dimension_numbers = #tpu.dot_dimension_numbers<[1], [0], [0], [1], [0, 0, 1, 1], [], []>} : vector<16x8xf32>, vector<8x32xf32>, vector<16x32xf32> -> vector<16x32xf32>
    %37 = arith.addf %32, %36 : vector<16x32xf32>
    %c0_23 = arith.constant 0 : index
    %c0_24 = arith.constant 0 : index
    %38 = vector.load %arg17[%c0_23, %c0_24] : memref<16x32xf32, #tpu.memory_space<vmem>>, vector<16x32xf32>
    tpu.vector_store %arg17[%c0_23, %c0_24], %37 {strides = array<i32>} : memref<16x32xf32, #tpu.memory_space<vmem>>, vector<16x32xf32>,
    %c3_i32 = arith.constant 3 : i32
    %39 = arith.cmpi eq, %arg1, %c3_i32 : i32
    %40 = arith.extui %39 : i1 to i32
    %c0_i32_25 = arith.constant 0 : i32
    %41 = arith.cmpi ne, %40, %c0_i32_25 : i32
    scf.if %41 {
      %c0_26 = arith.constant 0 : index
      %c0_27 = arith.constant 0 : index
      %42 = vector.load %arg17[%c0_26, %c0_27] : memref<16x32xf32, #tpu.memory_space<vmem>>, vector<16x32xf32>
      %c0_28 = arith.constant 0 : index
      %c0_29 = arith.constant 0 : index
      %43 = vector.load %arg7[%c0_28, %c0_29] : memref<1x32xf32, #tpu.memory_space<vmem>>, vector<1x32xf32>
      %44 = vector.broadcast %43 : vector<1x32xf32> to vector<16x32xf32>
      %45 = arith.addf %42, %44 : vector<16x32xf32>
      %46 = arith.addf %45, %1 : vector<16x32xf32>
      %cst_30 = arith.constant dense<0.000000e+00> : vector<16xf32>
      %47 = vector.multi_reduction <add>, %46, %cst_30 [1] : vector<16x32xf32> to vector<16xf32>
      %48 = vector.shape_cast %47 : vector<16xf32> to vector<16x1xf32>
      %cst_31 = arith.constant 3.200000e+01 : f32
      %49 = vector.broadcast %cst_31 : f32 to vector<16x1xf32>
      %50 = arith.divf %48, %49 : vector<16x1xf32>
      %51 = vector.broadcast %50 : vector<16x1xf32> to vector<16x32xf32>
      %52 = arith.subf %46, %51 : vector<16x32xf32>
      %53 = arith.mulf %52, %52 : vector<16x32xf32>
      %cst_32 = arith.constant dense<0.000000e+00> : vector<16xf32>
      %54 = vector.multi_reduction <add>, %53, %cst_32 [1] : vector<16x32xf32> to vector<16xf32>
      %55 = vector.shape_cast %54 : vector<16xf32> to vector<16x1xf32>
      %cst_33 = arith.constant 3.200000e+01 : f32
      %56 = vector.broadcast %cst_33 : f32 to vector<16x1xf32>
      %57 = arith.divf %55, %56 : vector<16x1xf32>
      %58 = vector.broadcast %50 : vector<16x1xf32> to vector<16x32xf32>
      %59 = arith.subf %46, %58 : vector<16x32xf32>
      %cst_34 = arith.constant 9.99999974E-6 : f32
      %60 = vector.broadcast %cst_34 : f32 to vector<16x1xf32>
      %61 = arith.addf %57, %60 : vector<16x1xf32>
      %62 = math.rsqrt %61 : vector<16x1xf32>
      %63 = vector.broadcast %62 : vector<16x1xf32> to vector<16x32xf32>
      %64 = arith.mulf %59, %63 : vector<16x32xf32>
      %c0_35 = arith.constant 0 : index
      %c0_36 = arith.constant 0 : index
      %65 = vector.load %arg8[%c0_35, %c0_36] : memref<1x32xf32, #tpu.memory_space<vmem>>, vector<1x32xf32>
      %66 = vector.broadcast %65 : vector<1x32xf32> to vector<16x32xf32>
      %67 = arith.mulf %64, %66 : vector<16x32xf32>
      %c0_37 = arith.constant 0 : index
      %c0_38 = arith.constant 0 : index
      %68 = vector.load %arg9[%c0_37, %c0_38] : memref<1x32xf32, #tpu.memory_space<vmem>>, vector<1x32xf32>
      %69 = vector.broadcast %68 : vector<1x32xf32> to vector<16x32xf32>
      %70 = arith.addf %67, %69 : vector<16x32xf32>
      %c0_39 = arith.constant 0 : index
      %c0_40 = arith.constant 0 : index
      %71 = vector.load %arg10[%c0_39, %c0_40] : memref<32x64xf32, #tpu.memory_space<vmem>>, vector<32x64xf32>
      %cst_41 = arith.constant dense<0.000000e+00> : vector<16x64xf32>
      %72 = tpu.matmul %70, %71, %cst_41 {dimension_numbers = #tpu.dot_dimension_numbers<[1], [0], [0], [1], [0, 0, 1, 1], [], []>} : vector<16x32xf32>, vector<32x64xf32>, vector<16x64xf32> -> vector<16x64xf32>
      %c0_42 = arith.constant 0 : index
      %c0_43 = arith.constant 0 : index
      %73 = vector.load %arg11[%c0_42, %c0_43] : memref<1x64xf32, #tpu.memory_space<vmem>>, vector<1x64xf32>
      %74 = vector.broadcast %73 : vector<1x64xf32> to vector<16x64xf32>
      %75 = arith.addf %72, %74 : vector<16x64xf32>
      %cst_44 = arith.constant 0.000000e+00 : f32
      %76 = vector.broadcast %cst_44 : f32 to vector<16x64xf32>
      %77 = arith.maximumf %75, %76 : vector<16x64xf32>
      %c0_45 = arith.constant 0 : index
      %c0_46 = arith.constant 0 : index
      %78 = vector.load %arg12[%c0_45, %c0_46] : memref<64x32xf32, #tpu.memory_space<vmem>>, vector<64x32xf32>
      %cst_47 = arith.constant dense<0.000000e+00> : vector<16x32xf32>
      %79 = tpu.matmul %77, %78, %cst_47 {dimension_numbers = #tpu.dot_dimension_numbers<[1], [0], [0], [1], [0, 0, 1, 1], [], []>} : vector<16x64xf32>, vector<64x32xf32>, vector<16x32xf32> -> vector<16x32xf32>
      %c0_48 = arith.constant 0 : index
      %c0_49 = arith.constant 0 : index
      %80 = vector.load %arg13[%c0_48, %c0_49] : memref<1x32xf32, #tpu.memory_space<vmem>>, vector<1x32xf32>
      %81 = vector.broadcast %80 : vector<1x32xf32> to vector<16x32xf32>
      %82 = arith.addf %79, %81 : vector<16x32xf32>
      %83 = arith.addf %82, %70 : vector<16x32xf32>
      %cst_50 = arith.constant dense<0.000000e+00> : vector<16xf32>
      %84 = vector.multi_reduction <add>, %83, %cst_50 [1] : vector<16x32xf32> to vector<16xf32>
      %85 = vector.shape_cast %84 : vector<16xf32> to vector<16x1xf32>
      %cst_51 = arith.constant 3.200000e+01 : f32
      %86 = vector.broadcast %cst_51 : f32 to vector<16x1xf32>
      %87 = arith.divf %85, %86 : vector<16x1xf32>
      %88 = vector.broadcast %87 : vector<16x1xf32> to vector<16x32xf32>
      %89 = arith.subf %83, %88 : vector<16x32xf32>
      %90 = arith.mulf %89, %89 : vector<16x32xf32>
      %cst_52 = arith.constant dense<0.000000e+00> : vector<16xf32>
      %91 = vector.multi_reduction <add>, %90, %cst_52 [1] : vector<16x32xf32> to vector<16xf32>
      %92 = vector.shape_cast %91 : vector<16xf32> to vector<16x1xf32>
      %cst_53 = arith.constant 3.200000e+01 : f32
      %93 = vector.broadcast %cst_53 : f32 to vector<16x1xf32>
      %94 = arith.divf %92, %93 : vector<16x1xf32>
      %95 = vector.broadcast %87 : vector<16x1xf32> to vector<16x32xf32>
      %96 = arith.subf %83, %95 : vector<16x32xf32>
      %cst_54 = arith.constant 9.99999974E-6 : f32
      %97 = vector.broadcast %cst_54 : f32 to vector<16x1xf32>
      %98 = arith.addf %94, %97 : vector<16x1xf32>
      %99 = math.rsqrt %98 : vector<16x1xf32>
      %100 = vector.broadcast %99 : vector<16x1xf32> to vector<16x32xf32>
      %101 = arith.mulf %96, %100 : vector<16x32xf32>
      %c0_55 = arith.constant 0 : index
      %c0_56 = arith.constant 0 : index
      %102 = vector.load %arg14[%c0_55, %c0_56] : memref<1x32xf32, #tpu.memory_space<vmem>>, vector<1x32xf32>
      %103 = vector.broadcast %102 : vector<1x32xf32> to vector<16x32xf32>
      %104 = arith.mulf %101, %103 : vector<16x32xf32>
      %c0_57 = arith.constant 0 : index
      %c0_58 = arith.constant 0 : index
      %105 = vector.load %arg15[%c0_57, %c0_58] : memref<1x32xf32, #tpu.memory_space<vmem>>, vector<1x32xf32>
      %106 = vector.broadcast %105 : vector<1x32xf32> to vector<16x32xf32>
      %107 = arith.addf %104, %106 : vector<16x32xf32>
      %108 = vector.shape_cast %107 : vector<16x32xf32> to vector<2x8x32xf32>
      %c0_59 = arith.constant 0 : index
      %c0_60 = arith.constant 0 : index
      %c0_61 = arith.constant 0 : index
      %109 = vector.load %arg16[%c0_59, %c0_60, %c0_61] : memref<2x8x32xf32, #tpu.memory_space<vmem>>, vector<2x8x32xf32>
      tpu.vector_store %arg16[%c0_59, %c0_60, %c0_61], %108 {strides = array<i32>} : memref<2x8x32xf32, #tpu.memory_space<vmem>>, vector<2x8x32xf32>,
    } else {
    }
    return
  }
  func.func @transform_0(%arg0: i32, %arg1: i32) -> (i32, i32, i32) {
    %c0_i32 = arith.constant 0 : i32
    %c0_i32_0 = arith.constant 0 : i32
    %c0_i32_1 = arith.constant 0 : i32
    return %arg0, %c0_i32, %c0_i32_0 : i32, i32, i32
  }
  func.func @transform_1(%arg0: i32, %arg1: i32) -> (i32, i32, i32) {
    %c0_i32 = arith.constant 0 : i32
    %c0_i32_0 = arith.constant 0 : i32
    %c0_i32_1 = arith.constant 0 : i32
    return %arg0, %c0_i32, %c0_i32_0 : i32, i32, i32
  }
  func.func @transform_2(%arg0: i32, %arg1: i32) -> (i32, i32, i32) {
    %c0_i32 = arith.constant 0 : i32
    %c0_i32_0 = arith.constant 0 : i32
    %c0_i32_1 = arith.constant 0 : i32
    return %arg1, %c0_i32, %c0_i32_0 : i32, i32, i32
  }
  func.func @transform_3(%arg0: i32, %arg1: i32) -> (i32, i32, i32) {
    %c0_i32 = arith.constant 0 : i32
    %c0_i32_0 = arith.constant 0 : i32
    %c0_i32_1 = arith.constant 0 : i32
    return %arg1, %c0_i32, %c0_i32_0 : i32, i32, i32
  }
  func.func @transform_4(%arg0: i32, %arg1: i32) -> (i32, i32, i32) {
    %c0_i32 = arith.constant 0 : i32
    %c0_i32_0 = arith.constant 0 : i32
    %c0_i32_1 = arith.constant 0 : i32
    return %arg1, %c0_i32, %c0_i32_0 : i32, i32, i32
  }
  func.func @transform_5(%arg0: i32, %arg1: i32) -> (i32, i32) {
    %c0_i32 = arith.constant 0 : i32
    %c0_i32_0 = arith.constant 0 : i32
    %c0_i32_1 = arith.constant 0 : i32
    return %c0_i32, %c0_i32_0 : i32, i32
  }
  func.func @transform_6(%arg0: i32, %arg1: i32) -> (i32, i32) {
    %c0_i32 = arith.constant 0 : i32
    %c0_i32_0 = arith.constant 0 : i32
    %c0_i32_1 = arith.constant 0 : i32
    return %c0_i32, %c0_i32_0 : i32, i32
  }
  func.func @transform_7(%arg0: i32, %arg1: i32) -> (i32, i32) {
    %c0_i32 = arith.constant 0 : i32
    %c0_i32_0 = arith.constant 0 : i32
    %c0_i32_1 = arith.constant 0 : i32
    return %c0_i32, %c0_i32_0 : i32, i32
  }
  func.func @transform_8(%arg0: i32, %arg1: i32) -> (i32, i32) {
    %c0_i32 = arith.constant 0 : i32
    %c0_i32_0 = arith.constant 0 : i32
    %c0_i32_1 = arith.constant 0 : i32
    return %c0_i32, %c0_i32_0 : i32, i32
  }
  func.func @transform_9(%arg0: i32, %arg1: i32) -> (i32, i32) {
    %c0_i32 = arith.constant 0 : i32
    %c0_i32_0 = arith.constant 0 : i32
    %c0_i32_1 = arith.constant 0 : i32
    return %c0_i32, %c0_i32_0 : i32, i32
  }
  func.func @transform_10(%arg0: i32, %arg1: i32) -> (i32, i32) {
    %c0_i32 = arith.constant 0 : i32
    %c0_i32_0 = arith.constant 0 : i32
    %c0_i32_1 = arith.constant 0 : i32
    return %c0_i32, %c0_i32_0 : i32, i32
  }
  func.func @transform_11(%arg0: i32, %arg1: i32) -> (i32, i32) {
    %c0_i32 = arith.constant 0 : i32
    %c0_i32_0 = arith.constant 0 : i32
    %c0_i32_1 = arith.constant 0 : i32
    return %c0_i32, %c0_i32_0 : i32, i32
  }
  func.func @transform_12(%arg0: i32, %arg1: i32) -> (i32, i32) {
    %c0_i32 = arith.constant 0 : i32
    %c0_i32_0 = arith.constant 0 : i32
    %c0_i32_1 = arith.constant 0 : i32
    return %c0_i32, %c0_i32_0 : i32, i32
  }
  func.func @transform_13(%arg0: i32, %arg1: i32) -> (i32, i32) {
    %c0_i32 = arith.constant 0 : i32
    %c0_i32_0 = arith.constant 0 : i32
    %c0_i32_1 = arith.constant 0 : i32
    return %c0_i32, %c0_i32_0 : i32, i32
  }
  func.func @transform_14(%arg0: i32, %arg1: i32) -> (i32, i32, i32) {
    %c0_i32 = arith.constant 0 : i32
    %c0_i32_0 = arith.constant 0 : i32
    %c0_i32_1 = arith.constant 0 : i32
    return %arg0, %c0_i32, %c0_i32_0 : i32, i32, i32
  }
}

</mosaic_0001>

<llo_original>
// kernel: tpu_custom_call.1
$region0: #{tpu_custom_call.1}
  #allocation0 [shape = 'u32[]', space=smem, size = 0x4, offset = 0x4, fixed_abs, tag = 'smem constant byte address 0x4 - core index']
  #allocation1 [shape = 'u32[144,128]{1,0:T(1,128)}', space=vmem, size = 0x12000, scoped, tag = 'internal scratch']
  #allocation2 [shape = 'f32[16,32]{1,0:T(8,128)}', space=vmem, size = 0x2000, scoped, tag = 'scratch operand']
  #allocation3 [shape = 'f32[2,8,8]{2,1,0:T(8,128)}', space=vmem, size = 0x2000, scoped, tag = 'scratch operand']
  %s0 = inlined_call_operand.vmem [shape: f32[2,8,32], index: 0, kind: input, shape index: {}]
  %s1 = inlined_call_operand.vmem [shape: f32[2,8,8], index: 1, kind: input, shape index: {}]
  %s2 = inlined_call_operand.vmem [shape: f32[4,32,24], index: 2, kind: input, shape index: {}]
  %s3 = inlined_call_operand.vmem [shape: f32[4,1,24], index: 3, kind: input, shape index: {}]
  %s4 = inlined_call_operand.vmem [shape: f32[4,8,32], index: 4, kind: input, shape index: {}]
  %s5 = inlined_call_operand.vmem [shape: f32[1,32], index: 5, kind: input, shape index: {}]
  %s6 = inlined_call_operand.vmem [shape: f32[1,32], index: 6, kind: input, shape index: {}]
  %s7 = inlined_call_operand.vmem [shape: f32[1,32], index: 7, kind: input, shape index: {}]
  %s8 = inlined_call_operand.vmem [shape: f32[32,64], index: 8, kind: input, shape index: {}]
  %s9 = inlined_call_operand.vmem [shape: f32[1,64], index: 9, kind: input, shape index: {}]
  %s10 = inlined_call_operand.vmem [shape: f32[64,32], index: 10, kind: input, shape index: {}]
  %s11 = inlined_call_operand.vmem [shape: f32[1,32], index: 11, kind: input, shape index: {}]
  %s12 = inlined_call_operand.vmem [shape: f32[1,32], index: 12, kind: input, shape index: {}]
  %s13 = inlined_call_operand.vmem [shape: f32[1,32], index: 13, kind: input, shape index: {}]
  %s14 = inlined_call_operand.hbm [shape: f32[2,8,32], index: 14, kind: output, shape index: {}]
  %s15 = sld [smem:[#allocation0]]
  $region97: #{tpu_custom_call.1} parent=0
    _
  %s17 = ssub.s32 1, %s15
  %s18 = scalar_select 0, %s17, %s15
  $region1: #{tpu_custom_call.1} parent=0
    #allocation4 [shape = 'u8[8192]{0}', space=vmem, size = 0x2000, scoped, tag = 'output window, operand 0, single buffered']
    #allocation5 [shape = 's32[2]{0}', space=sflag, size = 0x8, scoped, tag = 'scoped memory for tpu_custom_call.1']
    %19 = vsyncpa [#allocation5], 0
    loop: start=0, step=1, limit=6
    $region2: #{tpu_custom_call.1} parent=1 // loop_pre_header
      _
    $region3: #{tpu_custom_call.1} parent=1 // loop_header
      %s21 = sphi 0, %s25
      %p22 = scmp.ge.s32.totalorder %s21, 6
      %s28 = sphi 0, %s40
      %s29 = sphi 0, %s36
      %s30 = sphi 0, %s28
      %s31 = sphi 0, %s29
      %s32 = sphi 0, %s30
      %s33 = sphi 0, %s31
      %s43 = sphi 0, %s45
      %s46 = sphi 0, %s43
      %s47 = sphi 0, %s46
      %s63 = sphi 0, %s47
      %s69 = sphi 0, %s71
      %s72 = sphi 0, %s69
      %s73 = sphi 0, %s72
      %s89 = sphi 0, %s73
      %s95 = sphi 0, %s97
      %s98 = sphi 0, %s95
      %s99 = sphi 0, %s98
      %s115 = sphi 0, %s99
      %s121 = sphi 0, %s123
      %s124 = sphi 0, %s121
      %s125 = sphi 0, %s124
      %s141 = sphi 0, %s125
      %s147 = sphi 0, %s149
      %s150 = sphi 0, %s147
      %s151 = sphi 0, %s150
      %s167 = sphi 0, %s151
      %s171 = sphi 0, %s171
      %s173 = sphi 0, %s171
      %s174 = sphi 0, %s173
      %s188 = sphi 0, %s174
      %s192 = sphi 0, %s192
      %s194 = sphi 0, %s192
      %s195 = sphi 0, %s194
      %s209 = sphi 0, %s195
      %s213 = sphi 0, %s213
      %s215 = sphi 0, %s213
      %s216 = sphi 0, %s215
      %s230 = sphi 0, %s216
      %s234 = sphi 0, %s234
      %s236 = sphi 0, %s234
      %s237 = sphi 0, %s236
      %s251 = sphi 0, %s237
      %s255 = sphi 0, %s255
      %s257 = sphi 0, %s255
      %s258 = sphi 0, %s257
      %s272 = sphi 0, %s258
      %s276 = sphi 0, %s276
      %s278 = sphi 0, %s276
      %s279 = sphi 0, %s278
      %s293 = sphi 0, %s279
      %s297 = sphi 0, %s297
      %s299 = sphi 0, %s297
      %s300 = sphi 0, %s299
      %s314 = sphi 0, %s300
      %s318 = sphi 0, %s318
      %s320 = sphi 0, %s318
      %s321 = sphi 0, %s320
      %s335 = sphi 0, %s321
      %s339 = sphi 0, %s339
      %s341 = sphi 0, %s339
      %s342 = sphi 0, %s341
      %s356 = sphi 0, %s342
      %s362 = sphi 0, %s364
      %s365 = sphi 0, %s362
      %s366 = sphi 0, %s365
      %s382 = sphi 0, %s366
    $region4: #{tpu_custom_call.1} parent=1 // loop_header_branch
      %24 = sbr.rel (%p22) target = $region8
    $region5: #{tpu_custom_call.1} parent=1 // loop_body
      %s26 = ssub.s32 %s21, 1
      %s27 = ssub.s32 %s21, 2
      %s34 = sadd.s32 1, %s29
      %p35 = scmp.ge.s32.totalorder %s34, 4
      %s36 = scalar_select %p35, 0, %s34
      %s37 = sadd.s32 1, %s28
      %s38 = scalar_select %p35, %s37, %s28
      %p39 = scmp.ge.s32.totalorder %s38, 1
      %s40 = scalar_select %p39, 0, %s38
      %s41 = ssub.s32 %s28, %s40
      %p42 = scmp.eq.s32.totalorder %s41, 0
      %s44 = sadd.s32 %s43, 1
      %s45 = scalar_select %p42, %s43, %s44
      %p48 = pneg %p42
      %p49 = scmp.eq.s32.totalorder %s21, 3
      %p50 = por %p48, %p49
      %p51 = scmp.ne.s32.totalorder %s43, %s46
      %p52 = scmp.eq.s32.totalorder %s21, 0
      %p53 = por %p51, %p52
      %p54 = scmp.ne.s32.totalorder %s43, %s46
      %p55 = scmp.eq.s32.totalorder %s26, 3
      %p56 = por %p54, %p55
      %p57 = scmp.ne.s32.totalorder %s46, %s47
      %p58 = scmp.eq.s32.totalorder %s26, 0
      %p59 = por %p57, %p58
      %p60 = scmp.ne.s32.totalorder %s46, %s47
      %p61 = scmp.eq.s32.totalorder %s27, 3
      %p62 = por %p60, %p61
      %p64 = scmp.ne.s32.totalorder %s47, %s63
      %p65 = scmp.eq.s32.totalorder %s27, 0
      %p66 = por %p64, %p65
      %s67 = ssub.s32 %s28, %s40
      %p68 = scmp.eq.s32.totalorder %s67, 0
      %s70 = sadd.s32 %s69, 1
      %s71 = scalar_select %p68, %s69, %s70
      %p74 = pneg %p68
      %p75 = scmp.eq.s32.totalorder %s21, 3
      %p76 = por %p74, %p75
      %p77 = scmp.ne.s32.totalorder %s69, %s72
      %p78 = scmp.eq.s32.totalorder %s21, 0
      %p79 = por %p77, %p78
      %p80 = scmp.ne.s32.totalorder %s69, %s72
      %p81 = scmp.eq.s32.totalorder %s26, 3
      %p82 = por %p80, %p81
      %p83 = scmp.ne.s32.totalorder %s72, %s73
      %p84 = scmp.eq.s32.totalorder %s26, 0
      %p85 = por %p83, %p84
      %p86 = scmp.ne.s32.totalorder %s72, %s73
      %p87 = scmp.eq.s32.totalorder %s27, 3
      %p88 = por %p86, %p87
      %p90 = scmp.ne.s32.totalorder %s73, %s89
      %p91 = scmp.eq.s32.totalorder %s27, 0
      %p92 = por %p90, %p91
      %s93 = ssub.s32 %s29, %s36
      %p94 = scmp.eq.s32.totalorder %s93, 0
      %s96 = sadd.s32 %s95, 1
      %s97 = scalar_select %p94, %s95, %s96
      %p100 = pneg %p94
      %p101 = scmp.eq.s32.totalorder %s21, 3
      %p102 = por %p100, %p101
      %p103 = scmp.ne.s32.totalorder %s95, %s98
      %p104 = scmp.eq.s32.totalorder %s21, 0
      %p105 = por %p103, %p104
      %p106 = scmp.ne.s32.totalorder %s95, %s98
      %p107 = scmp.eq.s32.totalorder %s26, 3
      %p108 = por %p106, %p107
      %p109 = scmp.ne.s32.totalorder %s98, %s99
      %p110 = scmp.eq.s32.totalorder %s26, 0
      %p111 = por %p109, %p110
      %p112 = scmp.ne.s32.totalorder %s98, %s99
      %p113 = scmp.eq.s32.totalorder %s27, 3
      %p114 = por %p112, %p113
      %p116 = scmp.ne.s32.totalorder %s99, %s115
      %p117 = scmp.eq.s32.totalorder %s27, 0
      %p118 = por %p116, %p117
      %s119 = ssub.s32 %s29, %s36
      %p120 = scmp.eq.s32.totalorder %s119, 0
      %s122 = sadd.s32 %s121, 1
      %s123 = scalar_select %p120, %s121, %s122
      %p126 = pneg %p120
      %p127 = scmp.eq.s32.totalorder %s21, 3
      %p128 = por %p126, %p127
      %p129 = scmp.ne.s32.totalorder %s121, %s124
      %p130 = scmp.eq.s32.totalorder %s21, 0
      %p131 = por %p129, %p130
      %p132 = scmp.ne.s32.totalorder %s121, %s124
      %p133 = scmp.eq.s32.totalorder %s26, 3
      %p134 = por %p132, %p133
      %p135 = scmp.ne.s32.totalorder %s124, %s125
      %p136 = scmp.eq.s32.totalorder %s26, 0
      %p137 = por %p135, %p136
      %p138 = scmp.ne.s32.totalorder %s124, %s125
      %p139 = scmp.eq.s32.totalorder %s27, 3
      %p140 = por %p138, %p139
      %p142 = scmp.ne.s32.totalorder %s125, %s141
      %p143 = scmp.eq.s32.totalorder %s27, 0
      %p144 = por %p142, %p143
      %s145 = ssub.s32 %s29, %s36
      %p146 = scmp.eq.s32.totalorder %s145, 0
      %s148 = sadd.s32 %s147, 1
      %s149 = scalar_select %p146, %s147, %s148
      %p152 = pneg %p146
      %p153 = scmp.eq.s32.totalorder %s21, 3
      %p154 = por %p152, %p153
      %p155 = scmp.ne.s32.totalorder %s147, %s150
      %p156 = scmp.eq.s32.totalorder %s21, 0
      %p157 = por %p155, %p156
      %p158 = scmp.ne.s32.totalorder %s147, %s150
      %p159 = scmp.eq.s32.totalorder %s26, 3
      %p160 = por %p158, %p159
      %p161 = scmp.ne.s32.totalorder %s150, %s151
      %p162 = scmp.eq.s32.totalorder %s26, 0
      %p163 = por %p161, %p162
      %p164 = scmp.ne.s32.totalorder %s150, %s151
      %p165 = scmp.eq.s32.totalorder %s27, 3
      %p166 = por %p164, %p165
      %p168 = scmp.ne.s32.totalorder %s151, %s167
      %p169 = scmp.eq.s32.totalorder %s27, 0
      %p170 = por %p168, %p169
      %s172 = sadd.s32 %s171, 1
      %p175 = scmp.eq.s32.totalorder %s21, 3
      %p176 = scmp.ne.s32.totalorder %s171, %s173
      %p177 = scmp.eq.s32.totalorder %s21, 0
      %p178 = por %p176, %p177
      %p179 = scmp.ne.s32.totalorder %s171, %s173
      %p180 = scmp.eq.s32.totalorder %s26, 3
      %p181 = por %p179, %p180
      %p182 = scmp.ne.s32.totalorder %s173, %s174
      %p183 = scmp.eq.s32.totalorder %s26, 0
      %p184 = por %p182, %p183
      %p185 = scmp.ne.s32.totalorder %s173, %s174
      %p186 = scmp.eq.s32.totalorder %s27, 3
      %p187 = por %p185, %p186
      %p189 = scmp.ne.s32.totalorder %s174, %s188
      %p190 = scmp.eq.s32.totalorder %s27, 0
      %p191 = por %p189, %p190
      %s193 = sadd.s32 %s192, 1
      %p196 = scmp.eq.s32.totalorder %s21, 3
      %p197 = scmp.ne.s32.totalorder %s192, %s194
      %p198 = scmp.eq.s32.totalorder %s21, 0
      %p199 = por %p197, %p198
      %p200 = scmp.ne.s32.totalorder %s192, %s194
      %p201 = scmp.eq.s32.totalorder %s26, 3
      %p202 = por %p200, %p201
      %p203 = scmp.ne.s32.totalorder %s194, %s195
      %p204 = scmp.eq.s32.totalorder %s26, 0
      %p205 = por %p203, %p204
      %p206 = scmp.ne.s32.totalorder %s194, %s195
      %p207 = scmp.eq.s32.totalorder %s27, 3
      %p208 = por %p206, %p207
      %p210 = scmp.ne.s32.totalorder %s195, %s209
      %p211 = scmp.eq.s32.totalorder %s27, 0
      %p212 = por %p210, %p211
      %s214 = sadd.s32 %s213, 1
      %p217 = scmp.eq.s32.totalorder %s21, 3
      %p218 = scmp.ne.s32.totalorder %s213, %s215
      %p219 = scmp.eq.s32.totalorder %s21, 0
      %p220 = por %p218, %p219
      %p221 = scmp.ne.s32.totalorder %s213, %s215
      %p222 = scmp.eq.s32.totalorder %s26, 3
      %p223 = por %p221, %p222
      %p224 = scmp.ne.s32.totalorder %s215, %s216
      %p225 = scmp.eq.s32.totalorder %s26, 0
      %p226 = por %p224, %p225
      %p227 = scmp.ne.s32.totalorder %s215, %s216
      %p228 = scmp.eq.s32.totalorder %s27, 3
      %p229 = por %p227, %p228
      %p231 = scmp.ne.s32.totalorder %s216, %s230
      %p232 = scmp.eq.s32.totalorder %s27, 0
      %p233 = por %p231, %p232
      %s235 = sadd.s32 %s234, 1
      %p238 = scmp.eq.s32.totalorder %s21, 3
      %p239 = scmp.ne.s32.totalorder %s234, %s236
      %p240 = scmp.eq.s32.totalorder %s21, 0
      %p241 = por %p239, %p240
      %p242 = scmp.ne.s32.totalorder %s234, %s236
      %p243 = scmp.eq.s32.totalorder %s26, 3
      %p244 = por %p242, %p243
      %p245 = scmp.ne.s32.totalorder %s236, %s237
      %p246 = scmp.eq.s32.totalorder %s26, 0
      %p247 = por %p245, %p246
      %p248 = scmp.ne.s32.totalorder %s236, %s237
      %p249 = scmp.eq.s32.totalorder %s27, 3
      %p250 = por %p248, %p249
      %p252 = scmp.ne.s32.totalorder %s237, %s251
      %p253 = scmp.eq.s32.totalorder %s27, 0
      %p254 = por %p252, %p253
      %s256 = sadd.s32 %s255, 1
      %p259 = scmp.eq.s32.totalorder %s21, 3
      %p260 = scmp.ne.s32.totalorder %s255, %s257
      %p261 = scmp.eq.s32.totalorder %s21, 0
      %p262 = por %p260, %p261
      %p263 = scmp.ne.s32.totalorder %s255, %s257
      %p264 = scmp.eq.s32.totalorder %s26, 3
      %p265 = por %p263, %p264
      %p266 = scmp.ne.s32.totalorder %s257, %s258
      %p267 = scmp.eq.s32.totalorder %s26, 0
      %p268 = por %p266, %p267
      %p269 = scmp.ne.s32.totalorder %s257, %s258
      %p270 = scmp.eq.s32.totalorder %s27, 3
      %p271 = por %p269, %p270
      %p273 = scmp.ne.s32.totalorder %s258, %s272
      %p274 = scmp.eq.s32.totalorder %s27, 0
      %p275 = por %p273, %p274
      %s277 = sadd.s32 %s276, 1
      %p280 = scmp.eq.s32.totalorder %s21, 3
      %p281 = scmp.ne.s32.totalorder %s276, %s278
      %p282 = scmp.eq.s32.totalorder %s21, 0
      %p283 = por %p281, %p282
      %p284 = scmp.ne.s32.totalorder %s276, %s278
      %p285 = scmp.eq.s32.totalorder %s26, 3
      %p286 = por %p284, %p285
      %p287 = scmp.ne.s32.totalorder %s278, %s279
      %p288 = scmp.eq.s32.totalorder %s26, 0
      %p289 = por %p287, %p288
      %p290 = scmp.ne.s32.totalorder %s278, %s279
      %p291 = scmp.eq.s32.totalorder %s27, 3
      %p292 = por %p290, %p291
      %p294 = scmp.ne.s32.totalorder %s279, %s293
      %p295 = scmp.eq.s32.totalorder %s27, 0
      %p296 = por %p294, %p295
      %s298 = sadd.s32 %s297, 1
      %p301 = scmp.eq.s32.totalorder %s21, 3
      %p302 = scmp.ne.s32.totalorder %s297, %s299
      %p303 = scmp.eq.s32.totalorder %s21, 0
      %p304 = por %p302, %p303
      %p305 = scmp.ne.s32.totalorder %s297, %s299
      %p306 = scmp.eq.s32.totalorder %s26, 3
      %p307 = por %p305, %p306
      %p308 = scmp.ne.s32.totalorder %s299, %s300
      %p309 = scmp.eq.s32.totalorder %s26, 0
      %p310 = por %p308, %p309
      %p311 = scmp.ne.s32.totalorder %s299, %s300
      %p312 = scmp.eq.s32.totalorder %s27, 3
      %p313 = por %p311, %p312
      %p315 = scmp.ne.s32.totalorder %s300, %s314
      %p316 = scmp.eq.s32.totalorder %s27, 0
      %p317 = por %p315, %p316
      %s319 = sadd.s32 %s318, 1
      %p322 = scmp.eq.s32.totalorder %s21, 3
      %p323 = scmp.ne.s32.totalorder %s318, %s320
      %p324 = scmp.eq.s32.totalorder %s21, 0
      %p325 = por %p323, %p324
      %p326 = scmp.ne.s32.totalorder %s318, %s320
      %p327 = scmp.eq.s32.totalorder %s26, 3
      %p328 = por %p326, %p327
      %p329 = scmp.ne.s32.totalorder %s320, %s321
      %p330 = scmp.eq.s32.totalorder %s26, 0
      %p331 = por %p329, %p330
      %p332 = scmp.ne.s32.totalorder %s320, %s321
      %p333 = scmp.eq.s32.totalorder %s27, 3
      %p334 = por %p332, %p333
      %p336 = scmp.ne.s32.totalorder %s321, %s335
      %p337 = scmp.eq.s32.totalorder %s27, 0
      %p338 = por %p336, %p337
      %s340 = sadd.s32 %s339, 1
      %p343 = scmp.eq.s32.totalorder %s21, 3
      %p344 = scmp.ne.s32.totalorder %s339, %s341
      %p345 = scmp.eq.s32.totalorder %s21, 0
      %p346 = por %p344, %p345
      %p347 = scmp.ne.s32.totalorder %s339, %s341
      %p348 = scmp.eq.s32.totalorder %s26, 3
      %p349 = por %p347, %p348
      %p350 = scmp.ne.s32.totalorder %s341, %s342
      %p351 = scmp.eq.s32.totalorder %s26, 0
      %p352 = por %p350, %p351
      %p353 = scmp.ne.s32.totalorder %s341, %s342
      %p354 = scmp.eq.s32.totalorder %s27, 3
      %p355 = por %p353, %p354
      %p357 = scmp.ne.s32.totalorder %s342, %s356
      %p358 = scmp.eq.s32.totalorder %s27, 0
      %p359 = por %p357, %p358
      %s360 = ssub.s32 %s28, %s40
      %p361 = scmp.eq.s32.totalorder %s360, 0
      %s363 = sadd.s32 %s362, 1
      %s364 = scalar_select %p361, %s362, %s363
      %p367 = pneg %p361
      %p368 = scmp.eq.s32.totalorder %s21, 3
      %p369 = por %p367, %p368
      %p370 = scmp.ne.s32.totalorder %s362, %s365
      %p371 = scmp.eq.s32.totalorder %s21, 0
      %p372 = por %p370, %p371
      %p373 = scmp.ne.s32.totalorder %s362, %s365
      %p374 = scmp.eq.s32.totalorder %s26, 3
      %p375 = por %p373, %p374
      %p376 = scmp.ne.s32.totalorder %s365, %s366
      %p377 = scmp.eq.s32.totalorder %s26, 0
      %p378 = por %p376, %p377
      %p379 = scmp.ne.s32.totalorder %s365, %s366
      %p380 = scmp.eq.s32.totalorder %s27, 3
      %p381 = por %p379, %p380
      %p383 = scmp.ne.s32.totalorder %s366, %s382
      %p384 = scmp.eq.s32.totalorder %s27, 0
      %p385 = por %p383, %p384
      %p386 = scmp.le.s32.totalorder 1, %s21
      %p387 = scmp.lt.s32.totalorder %s21, 5
      %p388 = pnand %p386, %p387
      %p389 = pneg %p388
      // Predicated region
      $region9: #{tpu_custom_call.1} parent=5 // pred_check
        _
      $region10: #{tpu_custom_call.1} parent=5 // pred_check_branch
        %391 = sbr.rel (%p388) target = $region12
      $region11: #{tpu_custom_call.1} parent=5 // pred_region
        %s392 = ssub.s32 %s21, 1
        // Predicated region
        $region13: #{tpu_custom_call.1} parent=11 // pred_check
          %p393 = pneg %p59
        $region14: #{tpu_custom_call.1} parent=11 // pred_check_branch
          %395 = sbr.rel (%p393) target = $region16
        $region15: #{tpu_custom_call.1} parent=11 // pred_region
          %s396 = smul.u32 2, %s30
          %p397 = scmp.lt.s32.totalorder %s396, 1
          %s398 = scalar_select %p397, %s396, 1
          %s399 = smul.addr %s398, 8
          %s400 = scalar_lea.vmem %s0, %s399
          %s401 = smul.u32 2, %s30
        $region16: #{tpu_custom_call.1} parent=11 // pred_fallthru
          _
        // Predicated region
        $region17: #{tpu_custom_call.1} parent=11 // pred_check
          %p402 = pneg %p85
        $region18: #{tpu_custom_call.1} parent=11 // pred_check_branch
          %404 = sbr.rel (%p402) target = $region20
        $region19: #{tpu_custom_call.1} parent=11 // pred_region
          %s405 = smul.u32 2, %s30
          %p406 = scmp.lt.s32.totalorder %s405, 1
          %s407 = scalar_select %p406, %s405, 1
          %s408 = smul.addr %s407, 8
          %s409 = scalar_lea.vmem %s1, %s408
          %s410 = smul.u32 2, %s30
        $region20: #{tpu_custom_call.1} parent=11 // pred_fallthru
          _
        // Predicated region
        $region21: #{tpu_custom_call.1} parent=11 // pred_check
          %p411 = pneg %p184
        $region22: #{tpu_custom_call.1} parent=11 // pred_check_branch
          %413 = sbr.rel (%p411) target = $region24
        $region23: #{tpu_custom_call.1} parent=11 // pred_region
          _
        $region24: #{tpu_custom_call.1} parent=11 // pred_fallthru
          _
        // Predicated region
        $region25: #{tpu_custom_call.1} parent=11 // pred_check
          %p414 = pneg %p205
        $region26: #{tpu_custom_call.1} parent=11 // pred_check_branch
          %416 = sbr.rel (%p414) target = $region28
        $region27: #{tpu_custom_call.1} parent=11 // pred_region
          _
        $region28: #{tpu_custom_call.1} parent=11 // pred_fallthru
          _
        // Predicated region
        $region29: #{tpu_custom_call.1} parent=11 // pred_check
          %p417 = pneg %p226
        $region30: #{tpu_custom_call.1} parent=11 // pred_check_branch
          %419 = sbr.rel (%p417) target = $region32
        $region31: #{tpu_custom_call.1} parent=11 // pred_region
          _
        $region32: #{tpu_custom_call.1} parent=11 // pred_fallthru
          _
        // Predicated region
        $region33: #{tpu_custom_call.1} parent=11 // pred_check
          %p420 = pneg %p247
        $region34: #{tpu_custom_call.1} parent=11 // pred_check_branch
          %422 = sbr.rel (%p420) target = $region36
        $region35: #{tpu_custom_call.1} parent=11 // pred_region
          _
        $region36: #{tpu_custom_call.1} parent=11 // pred_fallthru
          _
        // Predicated region
        $region37: #{tpu_custom_call.1} parent=11 // pred_check
          %p423 = pneg %p268
        $region38: #{tpu_custom_call.1} parent=11 // pred_check_branch
          %425 = sbr.rel (%p423) target = $region40
        $region39: #{tpu_custom_call.1} parent=11 // pred_region
          _
        $region40: #{tpu_custom_call.1} parent=11 // pred_fallthru
          _
        // Predicated region
        $region41: #{tpu_custom_call.1} parent=11 // pred_check
          %p426 = pneg %p289
        $region42: #{tpu_custom_call.1} parent=11 // pred_check_branch
          %428 = sbr.rel (%p426) target = $region44
        $region43: #{tpu_custom_call.1} parent=11 // pred_region
          _
        $region44: #{tpu_custom_call.1} parent=11 // pred_fallthru
          _
        // Predicated region
        $region45: #{tpu_custom_call.1} parent=11 // pred_check
          %p429 = pneg %p310
        $region46: #{tpu_custom_call.1} parent=11 // pred_check_branch
          %431 = sbr.rel (%p429) target = $region48
        $region47: #{tpu_custom_call.1} parent=11 // pred_region
          _
        $region48: #{tpu_custom_call.1} parent=11 // pred_fallthru
          _
        // Predicated region
        $region49: #{tpu_custom_call.1} parent=11 // pred_check
          %p432 = pneg %p331
        $region50: #{tpu_custom_call.1} parent=11 // pred_check_branch
          %434 = sbr.rel (%p432) target = $region52
        $region51: #{tpu_custom_call.1} parent=11 // pred_region
          _
        $region52: #{tpu_custom_call.1} parent=11 // pred_fallthru
          _
        // Predicated region
        $region53: #{tpu_custom_call.1} parent=11 // pred_check
          %p435 = pneg %p352
        $region54: #{tpu_custom_call.1} parent=11 // pred_check_branch
          %437 = sbr.rel (%p435) target = $region56
        $region55: #{tpu_custom_call.1} parent=11 // pred_region
          _
        $region56: #{tpu_custom_call.1} parent=11 // pred_fallthru
          _
      $region12: #{tpu_custom_call.1} parent=5 // pred_fallthru
        _
      %p438 = scmp.lt.s32.totalorder %s21, 4
      // Predicated region
      $region57: #{tpu_custom_call.1} parent=5 // pred_check
        %p439 = pneg %p438
      $region58: #{tpu_custom_call.1} parent=5 // pred_check_branch
        %441 = sbr.rel (%p439) target = $region60
      $region59: #{tpu_custom_call.1} parent=5 // pred_region
        // Predicated region
        $region61: #{tpu_custom_call.1} parent=59 // pred_check
          %p442 = pneg %p105
        $region62: #{tpu_custom_call.1} parent=59 // pred_check_branch
          %444 = sbr.rel (%p442) target = $region64
        $region63: #{tpu_custom_call.1} parent=59 // pred_region
          %p445 = scmp.lt.s32.totalorder %s29, 3
          %s446 = scalar_select %p445, %s29, 3
          %s447 = smul.addr %s446, 4
          %s448 = smul.addr %s447, 8
          %s449 = scalar_lea.vmem %s2, %s448
        $region64: #{tpu_custom_call.1} parent=59 // pred_fallthru
          _
        // Predicated region
        $region65: #{tpu_custom_call.1} parent=59 // pred_check
          %p450 = pneg %p131
        $region66: #{tpu_custom_call.1} parent=59 // pred_check_branch
          %452 = sbr.rel (%p450) target = $region68
        $region67: #{tpu_custom_call.1} parent=59 // pred_region
          %p453 = scmp.lt.s32.totalorder %s29, 3
          %s454 = scalar_select %p453, %s29, 3
          %s455 = scalar_lea.vmem %s3, %s454
        $region68: #{tpu_custom_call.1} parent=59 // pred_fallthru
          _
        // Predicated region
        $region69: #{tpu_custom_call.1} parent=59 // pred_check
          %p456 = pneg %p157
        $region70: #{tpu_custom_call.1} parent=59 // pred_check_branch
          %458 = sbr.rel (%p456) target = $region72
        $region71: #{tpu_custom_call.1} parent=59 // pred_region
          %p459 = scmp.lt.s32.totalorder %s29, 3
          %s460 = scalar_select %p459, %s29, 3
          %s461 = smul.addr %s460, 8
          %s462 = scalar_lea.vmem %s4, %s461
        $region72: #{tpu_custom_call.1} parent=59 // pred_fallthru
          _
      $region60: #{tpu_custom_call.1} parent=5 // pred_fallthru
        _
      %p463 = scmp.le.s32.totalorder 1, %s21
      %p464 = scmp.lt.s32.totalorder %s21, 5
      %p465 = pnand %p463, %p464
      %p466 = pneg %p465
      // Predicated region
      $region73: #{tpu_custom_call.1} parent=5 // pred_check
        _
      $region74: #{tpu_custom_call.1} parent=5 // pred_check_branch
        %468 = sbr.rel (%p465) target = $region76
      $region75: #{tpu_custom_call.1} parent=5 // pred_region
        %s469 = ssub.s32 %s21, 1
        %s470 = smul.u32 2, %s30
        %p471 = scmp.lt.s32.totalorder %s470, 1
        %s472 = scalar_select %p471, %s470, 1
        %s473 = smul.addr %s472, 8
        %s474 = scalar_lea.vmem %s0, %s473
        %p475 = pneg %p59
        %p476 = pneg %p56
        %s477 = smul.u32 2, %s30
        %p478 = scmp.lt.s32.totalorder %s477, 1
        %s479 = scalar_select %p478, %s477, 1
        %s480 = smul.addr %s479, 8
        %s481 = scalar_lea.vmem %s1, %s480
        %p482 = pneg %p85
        %p483 = pneg %p82
        %p484 = scmp.lt.s32.totalorder %s31, 3
        %s485 = scalar_select %p484, %s31, 3
        %s486 = smul.addr %s485, 4
        %s487 = smul.addr %s486, 8
        %s488 = scalar_lea.vmem %s2, %s487
        %p489 = pneg %p111
        %p490 = pneg %p108
        %p491 = scmp.lt.s32.totalorder %s31, 3
        %s492 = scalar_select %p491, %s31, 3
        %s493 = scalar_lea.vmem %s3, %s492
        %p494 = pneg %p137
        %p495 = pneg %p134
        %p496 = scmp.lt.s32.totalorder %s31, 3
        %s497 = scalar_select %p496, %s31, 3
        %s498 = smul.addr %s497, 8
        %s499 = scalar_lea.vmem %s4, %s498
        %p500 = pneg %p163
        %p501 = pneg %p160
        %p502 = pneg %p184
        %p503 = pneg %p181
        %p504 = pneg %p205
        %p505 = pneg %p202
        %p506 = pneg %p226
        %p507 = pneg %p223
        %p508 = pneg %p247
        %p509 = pneg %p244
        %p510 = pneg %p268
        %p511 = pneg %p265
        %p512 = pneg %p289
        %p513 = pneg %p286
        %p514 = pneg %p310
        %p515 = pneg %p307
        %p516 = pneg %p331
        %p517 = pneg %p328
        %p518 = pneg %p352
        %p519 = pneg %p349
        %p520 = pneg %p378
        %p521 = pneg %p375
        %s522 = smul.u32 2, %s30
        %p523 = scmp.lt.s32.totalorder %s522, 1
        %s524 = scalar_select %p523, %s522, 1
        %s525 = smul.addr %s524, 8
        %s526 = scalar_lea.vmem %s0, %s525
        %s527 = smul.u32 2, %s30
        %s528 = smul.u32 2, %s30
        %p529 = scmp.lt.s32.totalorder %s528, 1
        %s530 = scalar_select %p529, %s528, 1
        %s531 = smul.addr %s530, 8
        %s532 = scalar_lea.vmem %s1, %s531
        %s533 = smul.u32 2, %s30
        %p534 = scmp.lt.s32.totalorder %s31, 3
        %s535 = scalar_select %p534, %s31, 3
        %s536 = smul.addr %s535, 4
        %s537 = smul.addr %s536, 8
        %s538 = scalar_lea.vmem %s2, %s537
        %p539 = scmp.lt.s32.totalorder %s31, 3
        %s540 = scalar_select %p539, %s31, 3
        %s541 = scalar_lea.vmem %s3, %s540
        %p542 = scmp.lt.s32.totalorder %s31, 3
        %s543 = scalar_select %p542, %s31, 3
        %s544 = smul.addr %s543, 8
        %s545 = scalar_lea.vmem %s4, %s544
        %s546 = smul.u32 2, %s30
        %v547 = vld [vmem:[%s526] sm:$0xff]
        %v548 = vld [vmem:[%s526 + $0x8] sm:$0xff]
        %p549 = scmp.eq.s32.totalorder %s31, 0
        // Predicated region
        $region77: #{tpu_custom_call.1} parent=75 // pred_check
          %p550 = pneg %p549
        $region78: #{tpu_custom_call.1} parent=75 // pred_check_branch
          %552 = sbr.rel (%p550) target = $region80
        $region79: #{tpu_custom_call.1} parent=75 // pred_region
          %vm553 = vcmask 261120
          %554 = vst.msk [vmem:[#allocation2] sm:$0xff] %vm553, 0.0
          %555 = vst.msk [vmem:[#allocation2 + $0x8] sm:$0xff] %vm553, 0.0
          %v556 = vld [vmem:[%s532] sm:$0xff]
          %v557 = vld [vmem:[%s532 + $0x8] sm:$0xff]
          %vm558 = vcmp.eq.f32.partialorder %v556, 0.0
          %vm559 = vcmp.eq.f32.partialorder %v557, 0.0
          %v560 = vsel %vm558, -1e+09, 0.0
          %v561 = vsel %vm559, -1e+09, 0.0
          %vm562 = vcmask 64512
          %563 = vst.msk [vmem:[#allocation3] sm:$0xff] %vm562, %v560
          %564 = vst.msk [vmem:[#allocation3 + $0x8] sm:$0xff] %vm562, %v561
        $region80: #{tpu_custom_call.1} parent=75 // pred_fallthru
          _
        %v565 = vld [vmem:[%s538] sm:$0xff]
        %v566 = vld [vmem:[%s538 + $0x8] sm:$0xff]
        %v567 = vld [vmem:[%s538 + $0x10] sm:$0xff]
        %v568 = vld [vmem:[%s538 + $0x18] sm:$0xff]
        %v569 = vld [vmem:[%s541] sm:$0x1]
        %v571 = vlaneseq
        %v572 = vshrl.u32 %v571, 7
        %v573 = vsub.s32 0, %v572
        %v574 = vrot.slane %v569, %v573
        %vm576 = vcmask 261120
        %v578 = vsel %vm576, %v547, 0
        %v581 = vsel %vm576, %v548, 0
        %583 = vmatprep.subr.mxu0 0.0
        %584 = vmatpush1.msra.mxu0 %v565
        %585 = vmatprep.subr.mxu0 0.0
        %586 = vmatpush1.msra.mxu0 %v566
        %587 = vmatprep.subr.mxu0 0.0
        %588 = vmatpush1.msra.mxu0 %v567
        %589 = vmatprep.subr.mxu0 0.0
        %590 = vmatpush1.msra.mxu0 %v568
        %591 = vmatprep.subr.mxu0 0.0
        %592 = vmatpush1.msra.mxu0 0.0
        %593 = vmatprep.subr.mxu0 0.0
        %594 = vmatpush1.msra.mxu0 0.0
        %595 = vmatprep.subr.mxu0 0.0
        %596 = vmatpush1.msra.mxu0 0.0
        %597 = vmatprep.subr.mxu0 0.0
        %598 = vmatpush1.msra.mxu0 0.0
        %599 = vmatprep.subr.mxu0 0.0
        %600 = vmatpush1.msra.mxu0 0.0
        %601 = vmatprep.subr.mxu0 0.0
        %602 = vmatpush1.msra.mxu0 0.0
        %603 = vmatprep.subr.mxu0 0.0
        %604 = vmatpush1.msra.mxu0 0.0
        %605 = vmatprep.subr.mxu0 0.0
        %606 = vmatpush1.msra.mxu0 0.0
        %607 = vmatprep.subr.mxu0 0.0
        %608 = vmatpush1.msra.mxu0 0.0
        %609 = vmatprep.subr.mxu0 0.0
        %610 = vmatpush1.msra.mxu0 0.0
        %611 = vmatprep.subr.mxu0 0.0
        %612 = vmatpush1.msra.mxu0 0.0
        %613 = vmatprep.subr.mxu0 0.0
        %614 = vmatpush1.msra.mxu0 0.0
        %615 = vmatprep.subr.mxu0 0.0
        %616 = vmatpush1.msra.mxu0 0.0
        %617 = vmatprep.subr.mxu0 0.0
        %618 = vmatpush1.msra.mxu0 0.0
        %619 = vmatprep.subr.mxu0 0.0
        %620 = vmatpush1.msra.mxu0 0.0
        %621 = vmatprep.subr.mxu0 0.0
        %622 = vmatpush1.msra.mxu0 0.0
        %623 = vmatprep.subr.mxu0 0.0
        %624 = vmatpush1.msra.mxu0 0.0
        %625 = vmatprep.subr.mxu0 0.0
        %626 = vmatpush1.msra.mxu0 0.0
        %627 = vmatprep.subr.mxu0 0.0
        %628 = vmatpush1.msra.mxu0 0.0
        %629 = vmatprep.subr.mxu0 0.0
        %630 = vmatpush1.msra.mxu0 0.0
        %631 = vmatprep.subr.mxu0 0.0
        %632 = vmatpush1.msra.mxu0 0.0
        %633 = vmatprep.subr.mxu0 0.0
        %634 = vmatpush1.msra.mxu0 0.0
        %635 = vmatprep.subr.mxu0 0.0
        %636 = vmatpush1.msra.mxu0 0.0
        %637 = vmatprep.subr.mxu0 0.0
        %638 = vmatpush1.msra.mxu0 0.0
        %639 = vmatprep.subr.mxu0 0.0
        %640 = vmatpush1.msra.mxu0 0.0
        %641 = vmatprep.subr.mxu0 0.0
        %642 = vmatpush1.msra.mxu0 0.0
        %643 = vmatprep.subr.mxu0 0.0
        %644 = vmatpush1.msra.mxu0 0.0
        %645 = vmatprep.subr.mxu0 0.0
        %646 = vmatpush1.msra.mxu0 0.0
        %647 = vmatprep.mubr.f32.mxu0 0.0
        %648 = vmatmul.mubr.f32.gmra.mrb[0].mxu0 %v578
        %v649 = vpop.f32.mrb[0].mxu0
        %v650 = vadd.f32 %v574, %v649
        %v651 = vpop.f32.mrb[0].mxu0
        %652 = vmatprep.mubr.f32.mxu0 0.0
        %653 = vmatmul.mubr.f32.gmra.mrb[0].mxu0 %v581
        %v654 = vpop.f32.mrb[0].mxu0
        %v655 = vadd.f32 %v574, %v654
        %v656 = vpop.f32.mrb[0].mxu0
        %657 = vdwg.mxu0
        %659 = vrot.lane.b32.xlu0 %v650, 120
        %v660 = vpop.permute.xlu0 %659
        %vm661 = vcmask 64512
        %v662 = vsel %vm661, %v650, 0
        %v664 = vsel %vm661, %v660, 0
        %666 = vmatprep.subr.mxu0 0.0
        %667 = vmatpush1.xpose.msra.mxu0 %v664
        %668 = vmatprep.subr.mxu0 0.0
        %669 = vmatpush1.xpose.msra.mxu0 0.0
        %670 = vmatprep.subr.mxu0 0.0
        %671 = vmatpush1.xpose.msra.mxu0 0.0
        %672 = vmatprep.subr.mxu0 0.0
        %673 = vmatpush1.xpose.msra.mxu0 0.0
        %674 = vmatprep.subr.mxu0 0.0
        %675 = vmatpush1.xpose.msra.mxu0 0.0
        %676 = vmatprep.subr.mxu0 0.0
        %677 = vmatpush1.xpose.msra.mxu0 0.0
        %678 = vmatprep.subr.mxu0 0.0
        %679 = vmatpush1.xpose.msra.mxu0 0.0
        %680 = vmatprep.subr.mxu0 0.0
        %681 = vmatpush1.xpose.msra.mxu0 0.0
        %682 = vmatprep.subr.mxu0 0.0
        %683 = vmatpush1.xpose.msra.mxu0 0.0
        %684 = vmatprep.subr.mxu0 0.0
        %685 = vmatpush1.xpose.msra.mxu0 0.0
        %686 = vmatprep.subr.mxu0 0.0
        %687 = vmatpush1.xpose.msra.mxu0 0.0
        %688 = vmatprep.subr.mxu0 0.0
        %689 = vmatpush1.xpose.msra.mxu0 0.0
        %690 = vmatprep.subr.mxu0 0.0
        %691 = vmatpush1.xpose.msra.mxu0 0.0
        %692 = vmatprep.subr.mxu0 0.0
        %693 = vmatpush1.xpose.msra.mxu0 0.0
        %694 = vmatprep.subr.mxu0 0.0
        %695 = vmatpush1.xpose.msra.mxu0 0.0
        %696 = vmatprep.subr.mxu0 0.0
        %697 = vmatpush1.xpose.msra.mxu0 0.0
        %698 = vmatprep.subr.mxu0 0.0
        %699 = vmatpush1.xpose.msra.mxu0 0.0
        %700 = vmatprep.subr.mxu0 0.0
        %701 = vmatpush1.xpose.msra.mxu0 0.0
        %702 = vmatprep.subr.mxu0 0.0
        %703 = vmatpush1.xpose.msra.mxu0 0.0
        %704 = vmatprep.subr.mxu0 0.0
        %705 = vmatpush1.xpose.msra.mxu0 0.0
        %706 = vmatprep.subr.mxu0 0.0
        %707 = vmatpush1.xpose.msra.mxu0 0.0
        %708 = vmatprep.subr.mxu0 0.0
        %709 = vmatpush1.xpose.msra.mxu0 0.0
        %710 = vmatprep.subr.mxu0 0.0
        %711 = vmatpush1.xpose.msra.mxu0 0.0
        %712 = vmatprep.subr.mxu0 0.0
        %713 = vmatpush1.xpose.msra.mxu0 0.0
        %714 = vmatprep.subr.mxu0 0.0
        %715 = vmatpush1.xpose.msra.mxu0 0.0
        %716 = vmatprep.subr.mxu0 0.0
        %717 = vmatpush1.xpose.msra.mxu0 0.0
        %718 = vmatprep.subr.mxu0 0.0
        %719 = vmatpush1.xpose.msra.mxu0 0.0
        %720 = vmatprep.subr.mxu0 0.0
        %721 = vmatpush1.xpose.msra.mxu0 0.0
        %722 = vmatprep.subr.mxu0 0.0
        %723 = vmatpush1.xpose.msra.mxu0 0.0
        %724 = vmatprep.subr.mxu0 0.0
        %725 = vmatpush1.xpose.msra.mxu0 0.0
        %726 = vmatprep.subr.mxu0 0.0
        %727 = vmatpush1.xpose.msra.mxu0 0.0
        %728 = vmatprep.subr.mxu0 0.0
        %729 = vmatpush1.xpose.msra.mxu0 0.0
        %730 = vmatprep.mubr.f32.mxu0 0.0
        %731 = vmatmul.mubr.f32.gmra.mrb[0].mxu0 %v662
        %v732 = vpop.f32.mrb[0].mxu0
        %v733 = vadd.f32 0.0, %v732
        %v734 = vpop.f32.mrb[0].mxu0
        %735 = vdwg.mxu0
        %737 = vrot.lane.b32.xlu0 %v655, 120
        %v738 = vpop.permute.xlu0 %737
        %v739 = vsel %vm661, %v655, 0
        %v741 = vsel %vm661, %v738, 0
        %743 = vmatprep.subr.mxu0 0.0
        %744 = vmatpush1.xpose.msra.mxu0 %v741
        %745 = vmatprep.subr.mxu0 0.0
        %746 = vmatpush1.xpose.msra.mxu0 0.0
        %747 = vmatprep.subr.mxu0 0.0
        %748 = vmatpush1.xpose.msra.mxu0 0.0
        %749 = vmatprep.subr.mxu0 0.0
        %750 = vmatpush1.xpose.msra.mxu0 0.0
        %751 = vmatprep.subr.mxu0 0.0
        %752 = vmatpush1.xpose.msra.mxu0 0.0
        %753 = vmatprep.subr.mxu0 0.0
        %754 = vmatpush1.xpose.msra.mxu0 0.0
        %755 = vmatprep.subr.mxu0 0.0
        %756 = vmatpush1.xpose.msra.mxu0 0.0
        %757 = vmatprep.subr.mxu0 0.0
        %758 = vmatpush1.xpose.msra.mxu0 0.0
        %759 = vmatprep.subr.mxu0 0.0
        %760 = vmatpush1.xpose.msra.mxu0 0.0
        %761 = vmatprep.subr.mxu0 0.0
        %762 = vmatpush1.xpose.msra.mxu0 0.0
        %763 = vmatprep.subr.mxu0 0.0
        %764 = vmatpush1.xpose.msra.mxu0 0.0
        %765 = vmatprep.subr.mxu0 0.0
        %766 = vmatpush1.xpose.msra.mxu0 0.0
        %767 = vmatprep.subr.mxu0 0.0
        %768 = vmatpush1.xpose.msra.mxu0 0.0
        %769 = vmatprep.subr.mxu0 0.0
        %770 = vmatpush1.xpose.msra.mxu0 0.0
        %771 = vmatprep.subr.mxu0 0.0
        %772 = vmatpush1.xpose.msra.mxu0 0.0
        %773 = vmatprep.subr.mxu0 0.0
        %774 = vmatpush1.xpose.msra.mxu0 0.0
        %775 = vmatprep.subr.mxu0 0.0
        %776 = vmatpush1.xpose.msra.mxu0 0.0
        %777 = vmatprep.subr.mxu0 0.0
        %778 = vmatpush1.xpose.msra.mxu0 0.0
        %779 = vmatprep.subr.mxu0 0.0
        %780 = vmatpush1.xpose.msra.mxu0 0.0
        %781 = vmatprep.subr.mxu0 0.0
        %782 = vmatpush1.xpose.msra.mxu0 0.0
        %783 = vmatprep.subr.mxu0 0.0
        %784 = vmatpush1.xpose.msra.mxu0 0.0
        %785 = vmatprep.subr.mxu0 0.0
        %786 = vmatpush1.xpose.msra.mxu0 0.0
        %787 = vmatprep.subr.mxu0 0.0
        %788 = vmatpush1.xpose.msra.mxu0 0.0
        %789 = vmatprep.subr.mxu0 0.0
        %790 = vmatpush1.xpose.msra.mxu0 0.0
        %791 = vmatprep.subr.mxu0 0.0
        %792 = vmatpush1.xpose.msra.mxu0 0.0
        %793 = vmatprep.subr.mxu0 0.0
        %794 = vmatpush1.xpose.msra.mxu0 0.0
        %795 = vmatprep.subr.mxu0 0.0
        %796 = vmatpush1.xpose.msra.mxu0 0.0
        %797 = vmatprep.subr.mxu0 0.0
        %798 = vmatpush1.xpose.msra.mxu0 0.0
        %799 = vmatprep.subr.mxu0 0.0
        %800 = vmatpush1.xpose.msra.mxu0 0.0
        %801 = vmatprep.subr.mxu0 0.0
        %802 = vmatpush1.xpose.msra.mxu0 0.0
        %803 = vmatprep.subr.mxu0 0.0
        %804 = vmatpush1.xpose.msra.mxu0 0.0
        %805 = vmatprep.subr.mxu0 0.0
        %806 = vmatpush1.xpose.msra.mxu0 0.0
        %807 = vmatprep.mubr.f32.mxu0 0.0
        %808 = vmatmul.mubr.f32.gmra.mrb[0].mxu0 %v739
        %v809 = vpop.f32.mrb[0].mxu0
        %v810 = vadd.f32 0.0, %v809
        %v811 = vpop.f32.mrb[0].mxu0
        %812 = vdwg.mxu0
        %v813 = vmul.f32 %v733, 0.35355338
        %v814 = vmul.f32 %v810, 0.35355338
        %v815 = vld [vmem:[#allocation3] sm:$0xff]
        %v816 = vld [vmem:[#allocation3 + $0x8] sm:$0xff]
        %v817 = vadd.f32 %v813, %v815
        %v818 = vadd.f32 %v814, %v816
        %v819 = vsel %vm661, %v817, -inf
        %820 = vmax.xlane.f32.xlu0 %v819
        %v821 = vpop.xlane.xlu0 %820
        %v822 = vsel %vm661, %v818, -inf
        %823 = vmax.xlane.f32.xlu0 %v822
        %v824 = vpop.xlane.xlu0 %823
        %v825 = vsub.f32 %v817, %v821
        %v826 = vsub.f32 %v818, %v824
        %v827 = vmul.f32 %v825, 1.442695
        %v828 = vpow.pop %v827
        %v829 = vmul.f32 %v826, 1.442695
        %v830 = vpow.pop %v829
        %v831 = vsel %vm661, %v828, 0.0
        %832 = vadd.xlane.f32.xlu0 %v831
        %v833 = vpop.xlane.xlu0 %832
        %v834 = vsel %vm661, %v830, 0.0
        %835 = vadd.xlane.f32.xlu0 %v834
        %v836 = vpop.xlane.xlu0 %835
        %v837 = vrcp.pop %v833
        %v838 = vrcp.pop %v836
        %v839 = vmul.f32 %v828, %v837
        %v840 = vmul.f32 %v830, %v838
        %841 = vrot.lane.b32.xlu0 %v650, 112
        %v842 = vpop.permute.xlu0 %841
        %v845 = vsel %vm661, %v839, 0
        %847 = vmatprep.subr.mxu0 0.0
        %848 = vmatpush1.msra.mxu0 %v842
        %849 = vmatprep.subr.mxu0 0.0
        %850 = vmatpush1.msra.mxu0 0.0
        %851 = vmatprep.subr.mxu0 0.0
        %852 = vmatpush1.msra.mxu0 0.0
        %853 = vmatprep.subr.mxu0 0.0
        %854 = vmatpush1.msra.mxu0 0.0
        %855 = vmatprep.subr.mxu0 0.0
        %856 = vmatpush1.msra.mxu0 0.0
        %857 = vmatprep.subr.mxu0 0.0
        %858 = vmatpush1.msra.mxu0 0.0
        %859 = vmatprep.subr.mxu0 0.0
        %860 = vmatpush1.msra.mxu0 0.0
        %861 = vmatprep.subr.mxu0 0.0
        %862 = vmatpush1.msra.mxu0 0.0
        %863 = vmatprep.subr.mxu0 0.0
        %864 = vmatpush1.msra.mxu0 0.0
        %865 = vmatprep.subr.mxu0 0.0
        %866 = vmatpush1.msra.mxu0 0.0
        %867 = vmatprep.subr.mxu0 0.0
        %868 = vmatpush1.msra.mxu0 0.0
        %869 = vmatprep.subr.mxu0 0.0
        %870 = vmatpush1.msra.mxu0 0.0
        %871 = vmatprep.subr.mxu0 0.0
        %872 = vmatpush1.msra.mxu0 0.0
        %873 = vmatprep.subr.mxu0 0.0
        %874 = vmatpush1.msra.mxu0 0.0
        %875 = vmatprep.subr.mxu0 0.0
        %876 = vmatpush1.msra.mxu0 0.0
        %877 = vmatprep.subr.mxu0 0.0
        %878 = vmatpush1.msra.mxu0 0.0
        %879 = vmatprep.subr.mxu0 0.0
        %880 = vmatpush1.msra.mxu0 0.0
        %881 = vmatprep.subr.mxu0 0.0
        %882 = vmatpush1.msra.mxu0 0.0
        %883 = vmatprep.subr.mxu0 0.0
        %884 = vmatpush1.msra.mxu0 0.0
        %885 = vmatprep.subr.mxu0 0.0
        %886 = vmatpush1.msra.mxu0 0.0
        %887 = vmatprep.subr.mxu0 0.0
        %888 = vmatpush1.msra.mxu0 0.0
        %889 = vmatprep.subr.mxu0 0.0
        %890 = vmatpush1.msra.mxu0 0.0
        %891 = vmatprep.subr.mxu0 0.0
        %892 = vmatpush1.msra.mxu0 0.0
        %893 = vmatprep.subr.mxu0 0.0
        %894 = vmatpush1.msra.mxu0 0.0
        %895 = vmatprep.subr.mxu0 0.0
        %896 = vmatpush1.msra.mxu0 0.0
        %897 = vmatprep.subr.mxu0 0.0
        %898 = vmatpush1.msra.mxu0 0.0
        %899 = vmatprep.subr.mxu0 0.0
        %900 = vmatpush1.msra.mxu0 0.0
        %901 = vmatprep.subr.mxu0 0.0
        %902 = vmatpush1.msra.mxu0 0.0
        %903 = vmatprep.subr.mxu0 0.0
        %904 = vmatpush1.msra.mxu0 0.0
        %905 = vmatprep.subr.mxu0 0.0
        %906 = vmatpush1.msra.mxu0 0.0
        %907 = vmatprep.subr.mxu0 0.0
        %908 = vmatpush1.msra.mxu0 0.0
        %909 = vmatprep.subr.mxu0 0.0
        %910 = vmatpush1.msra.mxu0 0.0
        %911 = vmatprep.mubr.f32.mxu0 0.0
        %912 = vmatmul.mubr.f32.gmra.mrb[0].mxu0 %v845
        %v913 = vpop.f32.mrb[0].mxu0
        %v914 = vadd.f32 0.0, %v913
        %v915 = vpop.f32.mrb[0].mxu0
        %916 = vdwg.mxu0
        %917 = vrot.lane.b32.xlu0 %v655, 112
        %v918 = vpop.permute.xlu0 %917
        %v921 = vsel %vm661, %v840, 0
        %923 = vmatprep.subr.mxu0 0.0
        %924 = vmatpush1.msra.mxu0 %v918
        %925 = vmatprep.subr.mxu0 0.0
        %926 = vmatpush1.msra.mxu0 0.0
        %927 = vmatprep.subr.mxu0 0.0
        %928 = vmatpush1.msra.mxu0 0.0
        %929 = vmatprep.subr.mxu0 0.0
        %930 = vmatpush1.msra.mxu0 0.0
        %931 = vmatprep.subr.mxu0 0.0
        %932 = vmatpush1.msra.mxu0 0.0
        %933 = vmatprep.subr.mxu0 0.0
        %934 = vmatpush1.msra.mxu0 0.0
        %935 = vmatprep.subr.mxu0 0.0
        %936 = vmatpush1.msra.mxu0 0.0
        %937 = vmatprep.subr.mxu0 0.0
        %938 = vmatpush1.msra.mxu0 0.0
        %939 = vmatprep.subr.mxu0 0.0
        %940 = vmatpush1.msra.mxu0 0.0
        %941 = vmatprep.subr.mxu0 0.0
        %942 = vmatpush1.msra.mxu0 0.0
        %943 = vmatprep.subr.mxu0 0.0
        %944 = vmatpush1.msra.mxu0 0.0
        %945 = vmatprep.subr.mxu0 0.0
        %946 = vmatpush1.msra.mxu0 0.0
        %947 = vmatprep.subr.mxu0 0.0
        %948 = vmatpush1.msra.mxu0 0.0
        %949 = vmatprep.subr.mxu0 0.0
        %950 = vmatpush1.msra.mxu0 0.0
        %951 = vmatprep.subr.mxu0 0.0
        %952 = vmatpush1.msra.mxu0 0.0
        %953 = vmatprep.subr.mxu0 0.0
        %954 = vmatpush1.msra.mxu0 0.0
        %955 = vmatprep.subr.mxu0 0.0
        %956 = vmatpush1.msra.mxu0 0.0
        %957 = vmatprep.subr.mxu0 0.0
        %958 = vmatpush1.msra.mxu0 0.0
        %959 = vmatprep.subr.mxu0 0.0
        %960 = vmatpush1.msra.mxu0 0.0
        %961 = vmatprep.subr.mxu0 0.0
        %962 = vmatpush1.msra.mxu0 0.0
        %963 = vmatprep.subr.mxu0 0.0
        %964 = vmatpush1.msra.mxu0 0.0
        %965 = vmatprep.subr.mxu0 0.0
        %966 = vmatpush1.msra.mxu0 0.0
        %967 = vmatprep.subr.mxu0 0.0
        %968 = vmatpush1.msra.mxu0 0.0
        %969 = vmatprep.subr.mxu0 0.0
        %970 = vmatpush1.msra.mxu0 0.0
        %971 = vmatprep.subr.mxu0 0.0
        %972 = vmatpush1.msra.mxu0 0.0
        %973 = vmatprep.subr.mxu0 0.0
        %974 = vmatpush1.msra.mxu0 0.0
        %975 = vmatprep.subr.mxu0 0.0
        %976 = vmatpush1.msra.mxu0 0.0
        %977 = vmatprep.subr.mxu0 0.0
        %978 = vmatpush1.msra.mxu0 0.0
        %979 = vmatprep.subr.mxu0 0.0
        %980 = vmatpush1.msra.mxu0 0.0
        %981 = vmatprep.subr.mxu0 0.0
        %982 = vmatpush1.msra.mxu0 0.0
        %983 = vmatprep.subr.mxu0 0.0
        %984 = vmatpush1.msra.mxu0 0.0
        %985 = vmatprep.subr.mxu0 0.0
        %986 = vmatpush1.msra.mxu0 0.0
        %987 = vmatprep.mubr.f32.mxu0 0.0
        %988 = vmatmul.mubr.f32.gmra.mrb[0].mxu0 %v921
        %v989 = vpop.f32.mrb[0].mxu0
        %v990 = vadd.f32 0.0, %v989
        %v991 = vpop.f32.mrb[0].mxu0
        %992 = vdwg.mxu0
        %v993 = vld [vmem:[#allocation2] sm:$0xff]
        %v994 = vld [vmem:[#allocation2 + $0x8] sm:$0xff]
        %v995 = vld [vmem:[%s545] sm:$0xff]
        %v997 = vsel %vm661, %v914, 0
        %v1000 = vsel %vm661, %v990, 0
        %1002 = vmatprep.subr.mxu0 0.0
        %1003 = vmatpush1.msra.mxu0 %v995
        %1004 = vmatprep.subr.mxu0 0.0
        %1005 = vmatpush1.msra.mxu0 0.0
        %1006 = vmatprep.subr.mxu0 0.0
        %1007 = vmatpush1.msra.mxu0 0.0
        %1008 = vmatprep.subr.mxu0 0.0
        %1009 = vmatpush1.msra.mxu0 0.0
        %1010 = vmatprep.subr.mxu0 0.0
        %1011 = vmatpush1.msra.mxu0 0.0
        %1012 = vmatprep.subr.mxu0 0.0
        %1013 = vmatpush1.msra.mxu0 0.0
        %1014 = vmatprep.subr.mxu0 0.0
        %1015 = vmatpush1.msra.mxu0 0.0
        %1016 = vmatprep.subr.mxu0 0.0
        %1017 = vmatpush1.msra.mxu0 0.0
        %1018 = vmatprep.subr.mxu0 0.0
        %1019 = vmatpush1.msra.mxu0 0.0
        %1020 = vmatprep.subr.mxu0 0.0
        %1021 = vmatpush1.msra.mxu0 0.0
        %1022 = vmatprep.subr.mxu0 0.0
        %1023 = vmatpush1.msra.mxu0 0.0
        %1024 = vmatprep.subr.mxu0 0.0
        %1025 = vmatpush1.msra.mxu0 0.0
        %1026 = vmatprep.subr.mxu0 0.0
        %1027 = vmatpush1.msra.mxu0 0.0
        %1028 = vmatprep.subr.mxu0 0.0
        %1029 = vmatpush1.msra.mxu0 0.0
        %1030 = vmatprep.subr.mxu0 0.0
        %1031 = vmatpush1.msra.mxu0 0.0
        %1032 = vmatprep.subr.mxu0 0.0
        %1033 = vmatpush1.msra.mxu0 0.0
        %1034 = vmatprep.subr.mxu0 0.0
        %1035 = vmatpush1.msra.mxu0 0.0
        %1036 = vmatprep.subr.mxu0 0.0
        %1037 = vmatpush1.msra.mxu0 0.0
        %1038 = vmatprep.subr.mxu0 0.0
        %1039 = vmatpush1.msra.mxu0 0.0
        %1040 = vmatprep.subr.mxu0 0.0
        %1041 = vmatpush1.msra.mxu0 0.0
        %1042 = vmatprep.subr.mxu0 0.0
        %1043 = vmatpush1.msra.mxu0 0.0
        %1044 = vmatprep.subr.mxu0 0.0
        %1045 = vmatpush1.msra.mxu0 0.0
        %1046 = vmatprep.subr.mxu0 0.0
        %1047 = vmatpush1.msra.mxu0 0.0
        %1048 = vmatprep.subr.mxu0 0.0
        %1049 = vmatpush1.msra.mxu0 0.0
        %1050 = vmatprep.subr.mxu0 0.0
        %1051 = vmatpush1.msra.mxu0 0.0
        %1052 = vmatprep.subr.mxu0 0.0
        %1053 = vmatpush1.msra.mxu0 0.0
        %1054 = vmatprep.subr.mxu0 0.0
        %1055 = vmatpush1.msra.mxu0 0.0
        %1056 = vmatprep.subr.mxu0 0.0
        %1057 = vmatpush1.msra.mxu0 0.0
        %1058 = vmatprep.subr.mxu0 0.0
        %1059 = vmatpush1.msra.mxu0 0.0
        %1060 = vmatprep.subr.mxu0 0.0
        %1061 = vmatpush1.msra.mxu0 0.0
        %1062 = vmatprep.subr.mxu0 0.0
        %1063 = vmatpush1.msra.mxu0 0.0
        %1064 = vmatprep.subr.mxu0 0.0
        %1065 = vmatpush1.msra.mxu0 0.0
        %1066 = vmatprep.mubr.f32.mxu0 0.0
        %1067 = vmatmul.mubr.f32.gmra.mrb[0].mxu0 %v997
        %v1068 = vpop.f32.mrb[0].mxu0
        %v1069 = vadd.f32 0.0, %v1068
        %v1070 = vpop.f32.mrb[0].mxu0
        %1071 = vmatprep.mubr.f32.mxu0 0.0
        %1072 = vmatmul.mubr.f32.gmra.mrb[0].mxu0 %v1000
        %v1073 = vpop.f32.mrb[0].mxu0
        %v1074 = vadd.f32 0.0, %v1073
        %v1075 = vpop.f32.mrb[0].mxu0
        %1076 = vdwg.mxu0
        %v1077 = vadd.f32 %v993, %v1069
        %v1078 = vadd.f32 %v994, %v1074
        %1079 = vst.msk [vmem:[#allocation2] sm:$0xff] %vm576, %v1077
        %1080 = vst.msk [vmem:[#allocation2 + $0x8] sm:$0xff] %vm576, %v1078
        %p1081 = scmp.eq.s32.totalorder %s31, 3
        // Predicated region
        $region81: #{tpu_custom_call.1} parent=75 // pred_check
          %p1082 = pneg %p1081
        $region82: #{tpu_custom_call.1} parent=75 // pred_check_branch
          %1084 = sbr.rel (%p1082) target = $region84
        $region83: #{tpu_custom_call.1} parent=75 // pred_region
          %v1085 = vld [vmem:[#allocation2] sm:$0xff]
          %v1086 = vld [vmem:[#allocation2 + $0x8] sm:$0xff]
          %v1087 = vld [vmem:[%s5] sm:$0x1]
          %v1089 = vlaneseq
          %v1090 = vshrl.u32 %v1089, 7
          %v1091 = vsub.s32 0, %v1090
          %v1092 = vrot.slane %v1087, %v1091
          %v1094 = vadd.f32 %v1085, %v1092
          %v1095 = vadd.f32 %v1086, %v1092
          %v1096 = vadd.f32 %v1094, %v547
          %v1097 = vadd.f32 %v1095, %v548
          %v1098 = vsel %vm576, %v1096, 0.0
          %1099 = vadd.xlane.f32.xlu0 %v1098
          %v1100 = vpop.xlane.xlu0 %1099
          %v1101 = vsel %vm576, %v1097, 0.0
          %1102 = vadd.xlane.f32.xlu0 %v1101
          %v1103 = vpop.xlane.xlu0 %1102
          %v1104 = vrcp.pop 32.0
          %v1105 = vmul.f32 %v1100, %v1104
          %v1106 = vmul.f32 %v1103, %v1104
          %v1107 = vsub.f32 %v1096, %v1105
          %v1108 = vsub.f32 %v1097, %v1106
          %v1109 = vmul.f32 %v1107, %v1107
          %v1110 = vmul.f32 %v1108, %v1108
          %v1111 = vsel %vm576, %v1109, 0.0
          %1112 = vadd.xlane.f32.xlu0 %v1111
          %v1113 = vpop.xlane.xlu0 %1112
          %v1114 = vsel %vm576, %v1110, 0.0
          %1115 = vadd.xlane.f32.xlu0 %v1114
          %v1116 = vpop.xlane.xlu0 %1115
          %v1117 = vmul.f32 %v1113, %v1104
          %v1118 = vmul.f32 %v1116, %v1104
          %v1119 = vadd.f32 %v1117, 1e-05
          %v1120 = vadd.f32 %v1118, 1e-05
          %v1121 = vrsqrt.pop %v1119
          %v1122 = vrsqrt.pop %v1120
          %v1123 = vmul.f32 %v1107, %v1121
          %v1124 = vmul.f32 %v1108, %v1122
          %v1125 = vld [vmem:[%s6] sm:$0x1]
          %v1127 = vlaneseq
          %v1128 = vshrl.u32 %v1127, 7
          %v1129 = vsub.s32 0, %v1128
          %v1130 = vrot.slane %v1125, %v1129
          %v1132 = vmul.f32 %v1123, %v1130
          %v1133 = vmul.f32 %v1124, %v1130
          %v1134 = vld [vmem:[%s7] sm:$0x1]
          %v1136 = vlaneseq
          %v1137 = vshrl.u32 %v1136, 7
          %v1138 = vsub.s32 0, %v1137
          %v1139 = vrot.slane %v1134, %v1138
          %v1141 = vadd.f32 %v1132, %v1139
          %v1142 = vadd.f32 %v1133, %v1139
          %v1143 = vld [vmem:[%s8] sm:$0xff]
          %v1144 = vld [vmem:[%s8 + $0x8] sm:$0xff]
          %v1145 = vld [vmem:[%s8 + $0x10] sm:$0xff]
          %v1146 = vld [vmem:[%s8 + $0x18] sm:$0xff]
          %v1147 = vld [vmem:[%s9] sm:$0x1]
          %v1149 = vlaneseq
          %v1150 = vshrl.u32 %v1149, 7
          %v1151 = vsub.s32 0, %v1150
          %v1152 = vrot.slane %v1147, %v1151
          %v1155 = vsel %vm576, %v1141, 0
          %v1158 = vsel %vm576, %v1142, 0
          %1160 = vmatprep.subr.mxu0 0.0
          %1161 = vmatpush1.msra.mxu0 %v1143
          %1162 = vmatprep.subr.mxu0 0.0
          %1163 = vmatpush1.msra.mxu0 %v1144
          %1164 = vmatprep.subr.mxu0 0.0
          %1165 = vmatpush1.msra.mxu0 %v1145
          %1166 = vmatprep.subr.mxu0 0.0
          %1167 = vmatpush1.msra.mxu0 %v1146
          %1168 = vmatprep.subr.mxu0 0.0
          %1169 = vmatpush1.msra.mxu0 0.0
          %1170 = vmatprep.subr.mxu0 0.0
          %1171 = vmatpush1.msra.mxu0 0.0
          %1172 = vmatprep.subr.mxu0 0.0
          %1173 = vmatpush1.msra.mxu0 0.0
          %1174 = vmatprep.subr.mxu0 0.0
          %1175 = vmatpush1.msra.mxu0 0.0
          %1176 = vmatprep.subr.mxu0 0.0
          %1177 = vmatpush1.msra.mxu0 0.0
          %1178 = vmatprep.subr.mxu0 0.0
          %1179 = vmatpush1.msra.mxu0 0.0
          %1180 = vmatprep.subr.mxu0 0.0
          %1181 = vmatpush1.msra.mxu0 0.0
          %1182 = vmatprep.subr.mxu0 0.0
          %1183 = vmatpush1.msra.mxu0 0.0
          %1184 = vmatprep.subr.mxu0 0.0
          %1185 = vmatpush1.msra.mxu0 0.0
          %1186 = vmatprep.subr.mxu0 0.0
          %1187 = vmatpush1.msra.mxu0 0.0
          %1188 = vmatprep.subr.mxu0 0.0
          %1189 = vmatpush1.msra.mxu0 0.0
          %1190 = vmatprep.subr.mxu0 0.0
          %1191 = vmatpush1.msra.mxu0 0.0
          %1192 = vmatprep.subr.mxu0 0.0
          %1193 = vmatpush1.msra.mxu0 0.0
          %1194 = vmatprep.subr.mxu0 0.0
          %1195 = vmatpush1.msra.mxu0 0.0
          %1196 = vmatprep.subr.mxu0 0.0
          %1197 = vmatpush1.msra.mxu0 0.0
          %1198 = vmatprep.subr.mxu0 0.0
          %1199 = vmatpush1.msra.mxu0 0.0
          %1200 = vmatprep.subr.mxu0 0.0
          %1201 = vmatpush1.msra.mxu0 0.0
          %1202 = vmatprep.subr.mxu0 0.0
          %1203 = vmatpush1.msra.mxu0 0.0
          %1204 = vmatprep.subr.mxu0 0.0
          %1205 = vmatpush1.msra.mxu0 0.0
          %1206 = vmatprep.subr.mxu0 0.0
          %1207 = vmatpush1.msra.mxu0 0.0
          %1208 = vmatprep.subr.mxu0 0.0
          %1209 = vmatpush1.msra.mxu0 0.0
          %1210 = vmatprep.subr.mxu0 0.0
          %1211 = vmatpush1.msra.mxu0 0.0
          %1212 = vmatprep.subr.mxu0 0.0
          %1213 = vmatpush1.msra.mxu0 0.0
          %1214 = vmatprep.subr.mxu0 0.0
          %1215 = vmatpush1.msra.mxu0 0.0
          %1216 = vmatprep.subr.mxu0 0.0
          %1217 = vmatpush1.msra.mxu0 0.0
          %1218 = vmatprep.subr.mxu0 0.0
          %1219 = vmatpush1.msra.mxu0 0.0
          %1220 = vmatprep.subr.mxu0 0.0
          %1221 = vmatpush1.msra.mxu0 0.0
          %1222 = vmatprep.subr.mxu0 0.0
          %1223 = vmatpush1.msra.mxu0 0.0
          %1224 = vmatprep.mubr.f32.mxu0 0.0
          %1225 = vmatmul.mubr.f32.gmra.mrb[0].mxu0 %v1155
          %v1226 = vpop.f32.mrb[0].mxu0
          %v1227 = vadd.f32 %v1152, %v1226
          %v1228 = vpop.f32.mrb[0].mxu0
          %1229 = vmatprep.mubr.f32.mxu0 0.0
          %1230 = vmatmul.mubr.f32.gmra.mrb[0].mxu0 %v1158
          %v1231 = vpop.f32.mrb[0].mxu0
          %v1232 = vadd.f32 %v1152, %v1231
          %v1233 = vpop.f32.mrb[0].mxu0
          %1234 = vdwg.mxu0
          %v1235 = vmax.f32 %v1227, 0.0
          %v1236 = vmax.f32 %v1232, 0.0
          %v1237 = vld [vmem:[%s10] sm:$0xff]
          %v1238 = vld [vmem:[%s10 + $0x8] sm:$0xff]
          %v1239 = vld [vmem:[%s10 + $0x10] sm:$0xff]
          %v1240 = vld [vmem:[%s10 + $0x18] sm:$0xff]
          %v1241 = vld [vmem:[%s10 + $0x20] sm:$0xff]
          %v1242 = vld [vmem:[%s10 + $0x28] sm:$0xff]
          %v1243 = vld [vmem:[%s10 + $0x30] sm:$0xff]
          %v1244 = vld [vmem:[%s10 + $0x38] sm:$0xff]
          %v1245 = vld [vmem:[%s11] sm:$0x1]
          %v1247 = vlaneseq
          %v1248 = vshrl.u32 %v1247, 7
          %v1249 = vsub.s32 0, %v1248
          %v1250 = vrot.slane %v1245, %v1249
          %vm1252 = vcmask 523264
          %v1254 = vsel %vm1252, %v1235, 0
          %v1257 = vsel %vm1252, %v1236, 0
          %1259 = vmatprep.subr.mxu0 0.0
          %1260 = vmatpush1.msra.mxu0 %v1237
          %1261 = vmatprep.subr.mxu0 0.0
          %1262 = vmatpush1.msra.mxu0 %v1238
          %1263 = vmatprep.subr.mxu0 0.0
          %1264 = vmatpush1.msra.mxu0 %v1239
          %1265 = vmatprep.subr.mxu0 0.0
          %1266 = vmatpush1.msra.mxu0 %v1240
          %1267 = vmatprep.subr.mxu0 0.0
          %1268 = vmatpush1.msra.mxu0 %v1241
          %1269 = vmatprep.subr.mxu0 0.0
          %1270 = vmatpush1.msra.mxu0 %v1242
          %1271 = vmatprep.subr.mxu0 0.0
          %1272 = vmatpush1.msra.mxu0 %v1243
          %1273 = vmatprep.subr.mxu0 0.0
          %1274 = vmatpush1.msra.mxu0 %v1244
          %1275 = vmatprep.subr.mxu0 0.0
          %1276 = vmatpush1.msra.mxu0 0.0
          %1277 = vmatprep.subr.mxu0 0.0
          %1278 = vmatpush1.msra.mxu0 0.0
          %1279 = vmatprep.subr.mxu0 0.0
          %1280 = vmatpush1.msra.mxu0 0.0
          %1281 = vmatprep.subr.mxu0 0.0
          %1282 = vmatpush1.msra.mxu0 0.0
          %1283 = vmatprep.subr.mxu0 0.0
          %1284 = vmatpush1.msra.mxu0 0.0
          %1285 = vmatprep.subr.mxu0 0.0
          %1286 = vmatpush1.msra.mxu0 0.0
          %1287 = vmatprep.subr.mxu0 0.0
          %1288 = vmatpush1.msra.mxu0 0.0
          %1289 = vmatprep.subr.mxu0 0.0
          %1290 = vmatpush1.msra.mxu0 0.0
          %1291 = vmatprep.subr.mxu0 0.0
          %1292 = vmatpush1.msra.mxu0 0.0
          %1293 = vmatprep.subr.mxu0 0.0
          %1294 = vmatpush1.msra.mxu0 0.0
          %1295 = vmatprep.subr.mxu0 0.0
          %1296 = vmatpush1.msra.mxu0 0.0
          %1297 = vmatprep.subr.mxu0 0.0
          %1298 = vmatpush1.msra.mxu0 0.0
          %1299 = vmatprep.subr.mxu0 0.0
          %1300 = vmatpush1.msra.mxu0 0.0
          %1301 = vmatprep.subr.mxu0 0.0
          %1302 = vmatpush1.msra.mxu0 0.0
          %1303 = vmatprep.subr.mxu0 0.0
          %1304 = vmatpush1.msra.mxu0 0.0
          %1305 = vmatprep.subr.mxu0 0.0
          %1306 = vmatpush1.msra.mxu0 0.0
          %1307 = vmatprep.subr.mxu0 0.0
          %1308 = vmatpush1.msra.mxu0 0.0
          %1309 = vmatprep.subr.mxu0 0.0
          %1310 = vmatpush1.msra.mxu0 0.0
          %1311 = vmatprep.subr.mxu0 0.0
          %1312 = vmatpush1.msra.mxu0 0.0
          %1313 = vmatprep.subr.mxu0 0.0
          %1314 = vmatpush1.msra.mxu0 0.0
          %1315 = vmatprep.subr.mxu0 0.0
          %1316 = vmatpush1.msra.mxu0 0.0
          %1317 = vmatprep.subr.mxu0 0.0
          %1318 = vmatpush1.msra.mxu0 0.0
          %1319 = vmatprep.subr.mxu0 0.0
          %1320 = vmatpush1.msra.mxu0 0.0
          %1321 = vmatprep.subr.mxu0 0.0
          %1322 = vmatpush1.msra.mxu0 0.0
          %1323 = vmatprep.mubr.f32.mxu0 0.0
          %1324 = vmatmul.mubr.f32.gmra.mrb[0].mxu0 %v1254
          %v1325 = vpop.f32.mrb[0].mxu0
          %v1326 = vadd.f32 %v1250, %v1325
          %v1327 = vpop.f32.mrb[0].mxu0
          %1328 = vmatprep.mubr.f32.mxu0 0.0
          %1329 = vmatmul.mubr.f32.gmra.mrb[0].mxu0 %v1257
          %v1330 = vpop.f32.mrb[0].mxu0
          %v1331 = vadd.f32 %v1250, %v1330
          %v1332 = vpop.f32.mrb[0].mxu0
          %1333 = vdwg.mxu0
          %v1334 = vadd.f32 %v1326, %v1141
          %v1335 = vadd.f32 %v1331, %v1142
          %v1336 = vsel %vm576, %v1334, 0.0
          %1337 = vadd.xlane.f32.xlu0 %v1336
          %v1338 = vpop.xlane.xlu0 %1337
          %v1339 = vsel %vm576, %v1335, 0.0
          %1340 = vadd.xlane.f32.xlu0 %v1339
          %v1341 = vpop.xlane.xlu0 %1340
          %v1342 = vmul.f32 %v1338, %v1104
          %v1343 = vmul.f32 %v1341, %v1104
          %v1344 = vsub.f32 %v1334, %v1342
          %v1345 = vsub.f32 %v1335, %v1343
          %v1346 = vmul.f32 %v1344, %v1344
          %v1347 = vmul.f32 %v1345, %v1345
          %v1348 = vsel %vm576, %v1346, 0.0
          %1349 = vadd.xlane.f32.xlu0 %v1348
          %v1350 = vpop.xlane.xlu0 %1349
          %v1351 = vsel %vm576, %v1347, 0.0
          %1352 = vadd.xlane.f32.xlu0 %v1351
          %v1353 = vpop.xlane.xlu0 %1352
          %v1354 = vmul.f32 %v1350, %v1104
          %v1355 = vmul.f32 %v1353, %v1104
          %v1356 = vadd.f32 %v1354, 1e-05
          %v1357 = vadd.f32 %v1355, 1e-05
          %v1358 = vrsqrt.pop %v1356
          %v1359 = vrsqrt.pop %v1357
          %v1360 = vmul.f32 %v1344, %v1358
          %v1361 = vmul.f32 %v1345, %v1359
          %v1362 = vld [vmem:[%s12] sm:$0x1]
          %v1364 = vlaneseq
          %v1365 = vshrl.u32 %v1364, 7
          %v1366 = vsub.s32 0, %v1365
          %v1367 = vrot.slane %v1362, %v1366
          %v1369 = vmul.f32 %v1360, %v1367
          %v1370 = vmul.f32 %v1361, %v1367
          %v1371 = vld [vmem:[%s13] sm:$0x1]
          %v1373 = vlaneseq
          %v1374 = vshrl.u32 %v1373, 7
          %v1375 = vsub.s32 0, %v1374
          %v1376 = vrot.slane %v1371, %v1375
          %v1378 = vadd.f32 %v1369, %v1376
          %v1379 = vadd.f32 %v1370, %v1376
          %1380 = vst.msk [vmem:[#allocation4] sm:$0xff] %vm576, %v1378
          %1381 = vst.msk [vmem:[#allocation4 + $0x8] sm:$0xff] %vm576, %v1379
        $region84: #{tpu_custom_call.1} parent=75 // pred_fallthru
          _
        // Predicated region
        $region85: #{tpu_custom_call.1} parent=75 // pred_check
          %p1382 = pneg %p375
        $region86: #{tpu_custom_call.1} parent=75 // pred_check_branch
          %1384 = sbr.rel (%p1382) target = $region88
        $region87: #{tpu_custom_call.1} parent=75 // pred_region
          %s1385 = smul.u32 2, %s30
          %s1387 = ssub.s32 256, 256
          %1388 = vsyncadd [#allocation5], %s1387
          %s1389 = smul.addr %s1385, 128
          %s1390 = scalar_lea.hbm %s14, %s1389
          %s1391 = sshll.u32 [#allocation4], 4
          %s1392 = int_to_ptr.vmem [resolvable:$true] %s1391
          %1397 = dma.vmem_to_hbm [thread:$0]  %s1392, 256, %s1390, [#allocation5], 128, 128, 8
        $region88: #{tpu_custom_call.1} parent=75 // pred_fallthru
          _
        // Predicated region
        $region89: #{tpu_custom_call.1} parent=75 // pred_check
          %p1398 = pneg %p375
        $region90: #{tpu_custom_call.1} parent=75 // pred_check_branch
          %1400 = sbr.rel (%p1398) target = $region92
        $region91: #{tpu_custom_call.1} parent=75 // pred_region
          %1401 = dma.done [#allocation5], 256
        $region92: #{tpu_custom_call.1} parent=75 // pred_fallthru
          _
      $region76: #{tpu_custom_call.1} parent=5 // pred_fallthru
        _
      %p1402 = scmp.le.s32.totalorder 2, %s21
      // Predicated region
      $region93: #{tpu_custom_call.1} parent=5 // pred_check
        %p1403 = pneg %p1402
      $region94: #{tpu_custom_call.1} parent=5 // pred_check_branch
        %1405 = sbr.rel (%p1403) target = $region96
      $region95: #{tpu_custom_call.1} parent=5 // pred_region
        %s1406 = ssub.s32 %s21, 2
      $region96: #{tpu_custom_call.1} parent=5 // pred_fallthru
        _
    $region6: #{tpu_custom_call.1} parent=1 // loop_footer
      %s25 = sadd.s32 1, %s21
    $region7: #{tpu_custom_call.1} parent=1 // loop_footer_branch
      %20 = sbr.rel target = $region3
    $region8: #{tpu_custom_call.1} parent=1 // loop_exit
      _
    %1407 = vsyncpa [#allocation5], 1
    %s1408 = scalar_lea.sflag [#allocation5], 1
    %1409 = vsyncpa %s1408, 1

// kernel: tpu_custom_call.1
$region0: #{tpu_custom_call.1}
  #allocation0 [shape = 'u32[]', space=smem, size = 0x4, offset = 0x4, fixed_abs, tag = 'smem constant byte address 0x4 - core index']
  #allocation1 [shape = 'u32[144,128]{1,0:T(1,128)}', space=vmem, size = 0x12000, scoped, tag = 'internal scratch']
  #allocation2 [shape = 'f32[16,32]{1,0:T(8,128)}', space=vmem, size = 0x2000, scoped, tag = 'scratch operand']
  #allocation3 [shape = 'f32[2,8,8]{2,1,0:T(8,128)}', space=vmem, size = 0x2000, scoped, tag = 'scratch operand']
  %s0 = inlined_call_operand.vmem [shape: f32[2,8,32], index: 0, kind: input, shape index: {}]
  %s1 = inlined_call_operand.vmem [shape: f32[2,8,8], index: 1, kind: input, shape index: {}]
  %s2 = inlined_call_operand.vmem [shape: f32[4,32,24], index: 2, kind: input, shape index: {}]
  %s3 = inlined_call_operand.vmem [shape: f32[4,1,24], index: 3, kind: input, shape index: {}]
  %s4 = inlined_call_operand.vmem [shape: f32[4,8,32], index: 4, kind: input, shape index: {}]
  %s5 = inlined_call_operand.vmem [shape: f32[1,32], index: 5, kind: input, shape index: {}]
  %s6 = inlined_call_operand.vmem [shape: f32[1,32], index: 6, kind: input, shape index: {}]
  %s7 = inlined_call_operand.vmem [shape: f32[1,32], index: 7, kind: input, shape index: {}]
  %s8 = inlined_call_operand.vmem [shape: f32[32,64], index: 8, kind: input, shape index: {}]
  %s9 = inlined_call_operand.vmem [shape: f32[1,64], index: 9, kind: input, shape index: {}]
  %s10 = inlined_call_operand.vmem [shape: f32[64,32], index: 10, kind: input, shape index: {}]
  %s11 = inlined_call_operand.vmem [shape: f32[1,32], index: 11, kind: input, shape index: {}]
  %s12 = inlined_call_operand.vmem [shape: f32[1,32], index: 12, kind: input, shape index: {}]
  %s13 = inlined_call_operand.vmem [shape: f32[1,32], index: 13, kind: input, shape index: {}]
  %s14 = inlined_call_operand.hbm [shape: f32[2,8,32], index: 14, kind: output, shape index: {}]
  %s15 = sld [smem:[#allocation0]]
  $region97: #{tpu_custom_call.1} parent=0
    _
  %s17 = ssub.s32 1, %s15
  %s18 = scalar_select 0, %s17, %s15
  $region1: #{tpu_custom_call.1} parent=0
    #allocation4 [shape = 'u8[8192]{0}', space=vmem, size = 0x2000, scoped, tag = 'output window, operand 0, single buffered']
    #allocation5 [shape = 's32[2]{0}', space=sflag, size = 0x8, scoped, tag = 'scoped memory for tpu_custom_call.1']
    %19 = vsyncpa [#allocation5], 0
    loop: start=0, step=1, limit=6
    $region2: #{tpu_custom_call.1} parent=1 // loop_pre_header
      _
    $region3: #{tpu_custom_call.1} parent=1 // loop_header
      %s21 = sphi 0, %s25
      %p22 = scmp.ge.s32.totalorder %s21, 6
      %s28 = sphi 0, %s40
      %s29 = sphi 0, %s36
      %s30 = sphi 0, %s28
      %s31 = sphi 0, %s29
      %s32 = sphi 0, %s30
      %s33 = sphi 0, %s31
      %s43 = sphi 0, %s45
      %s46 = sphi 0, %s43
      %s47 = sphi 0, %s46
      %s63 = sphi 0, %s47
      %s69 = sphi 0, %s71
      %s72 = sphi 0, %s69
      %s73 = sphi 0, %s72
      %s89 = sphi 0, %s73
      %s95 = sphi 0, %s97
      %s98 = sphi 0, %s95
      %s99 = sphi 0, %s98
      %s115 = sphi 0, %s99
      %s121 = sphi 0, %s123
      %s124 = sphi 0, %s121
      %s125 = sphi 0, %s124
      %s141 = sphi 0, %s125
      %s147 = sphi 0, %s149
      %s150 = sphi 0, %s147
      %s151 = sphi 0, %s150
      %s167 = sphi 0, %s151
      %s171 = sphi 0, %s171
      %s173 = sphi 0, %s171
      %s174 = sphi 0, %s173
      %s188 = sphi 0, %s174
      %s192 = sphi 0, %s192
      %s194 = sphi 0, %s192
      %s195 = sphi 0, %s194
      %s209 = sphi 0, %s195
      %s213 = sphi 0, %s213
      %s215 = sphi 0, %s213
      %s216 = sphi 0, %s215
      %s230 = sphi 0, %s216
      %s234 = sphi 0, %s234
      %s236 = sphi 0, %s234
      %s237 = sphi 0, %s236
      %s251 = sphi 0, %s237
      %s255 = sphi 0, %s255
      %s257 = sphi 0, %s255
      %s258 = sphi 0, %s257
      %s272 = sphi 0, %s258
      %s276 = sphi 0, %s276
      %s278 = sphi 0, %s276
      %s279 = sphi 0, %s278
      %s293 = sphi 0, %s279
      %s297 = sphi 0, %s297
      %s299 = sphi 0, %s297
      %s300 = sphi 0, %s299
      %s314 = sphi 0, %s300
      %s318 = sphi 0, %s318
      %s320 = sphi 0, %s318
      %s321 = sphi 0, %s320
      %s335 = sphi 0, %s321
      %s339 = sphi 0, %s339
      %s341 = sphi 0, %s339
      %s342 = sphi 0, %s341
      %s356 = sphi 0, %s342
      %s362 = sphi 0, %s364
      %s365 = sphi 0, %s362
      %s366 = sphi 0, %s365
      %s382 = sphi 0, %s366
    $region4: #{tpu_custom_call.1} parent=1 // loop_header_branch
      %24 = sbr.rel (%p22) target = $region8
    $region5: #{tpu_custom_call.1} parent=1 // loop_body
      %s26 = ssub.s32 %s21, 1
      %s27 = ssub.s32 %s21, 2
      %s34 = sadd.s32 1, %s29
      %p35 = scmp.ge.s32.totalorder %s34, 4
      %s36 = scalar_select %p35, 0, %s34
      %s37 = sadd.s32 1, %s28
      %s38 = scalar_select %p35, %s37, %s28
      %p39 = scmp.ge.s32.totalorder %s38, 1
      %s40 = scalar_select %p39, 0, %s38
      %s41 = ssub.s32 %s28, %s40
      %p42 = scmp.eq.s32.totalorder %s41, 0
      %s44 = sadd.s32 %s43, 1
      %s45 = scalar_select %p42, %s43, %s44
      %p48 = pneg %p42
      %p49 = scmp.eq.s32.totalorder %s21, 3
      %p50 = por %p48, %p49
      %p51 = scmp.ne.s32.totalorder %s43, %s46
      %p52 = scmp.eq.s32.totalorder %s21, 0
      %p53 = por %p51, %p52
      %p54 = scmp.ne.s32.totalorder %s43, %s46
      %p55 = scmp.eq.s32.totalorder %s26, 3
      %p56 = por %p54, %p55
      %p57 = scmp.ne.s32.totalorder %s46, %s47
      %p58 = scmp.eq.s32.totalorder %s26, 0
      %p59 = por %p57, %p58
      %p60 = scmp.ne.s32.totalorder %s46, %s47
      %p61 = scmp.eq.s32.totalorder %s27, 3
      %p62 = por %p60, %p61
      %p64 = scmp.ne.s32.totalorder %s47, %s63
      %p65 = scmp.eq.s32.totalorder %s27, 0
      %p66 = por %p64, %p65
      %s67 = ssub.s32 %s28, %s40
      %p68 = scmp.eq.s32.totalorder %s67, 0
      %s70 = sadd.s32 %s69, 1
      %s71 = scalar_select %p68, %s69, %s70
      %p74 = pneg %p68
      %p75 = scmp.eq.s32.totalorder %s21, 3
      %p76 = por %p74, %p75
      %p77 = scmp.ne.s32.totalorder %s69, %s72
      %p78 = scmp.eq.s32.totalorder %s21, 0
      %p79 = por %p77, %p78
      %p80 = scmp.ne.s32.totalorder %s69, %s72
      %p81 = scmp.eq.s32.totalorder %s26, 3
      %p82 = por %p80, %p81
      %p83 = scmp.ne.s32.totalorder %s72, %s73
      %p84 = scmp.eq.s32.totalorder %s26, 0
      %p85 = por %p83, %p84
      %p86 = scmp.ne.s32.totalorder %s72, %s73
      %p87 = scmp.eq.s32.totalorder %s27, 3
      %p88 = por %p86, %p87
      %p90 = scmp.ne.s32.totalorder %s73, %s89
      %p91 = scmp.eq.s32.totalorder %s27, 0
      %p92 = por %p90, %p91
      %s93 = ssub.s32 %s29, %s36
      %p94 = scmp.eq.s32.totalorder %s93, 0
      %s96 = sadd.s32 %s95, 1
      %s97 = scalar_select %p94, %s95, %s96
      %p100 = pneg %p94
      %p101 = scmp.eq.s32.totalorder %s21, 3
      %p102 = por %p100, %p101
      %p103 = scmp.ne.s32.totalorder %s95, %s98
      %p104 = scmp.eq.s32.totalorder %s21, 0
      %p105 = por %p103, %p104
      %p106 = scmp.ne.s32.totalorder %s95, %s98
      %p107 = scmp.eq.s32.totalorder %s26, 3
      %p108 = por %p106, %p107
      %p109 = scmp.ne.s32.totalorder %s98, %s99
      %p110 = scmp.eq.s32.totalorder %s26, 0
      %p111 = por %p109, %p110
      %p112 = scmp.ne.s32.totalorder %s98, %s99
      %p113 = scmp.eq.s32.totalorder %s27, 3
      %p114 = por %p112, %p113
      %p116 = scmp.ne.s32.totalorder %s99, %s115
      %p117 = scmp.eq.s32.totalorder %s27, 0
      %p118 = por %p116, %p117
      %s119 = ssub.s32 %s29, %s36
      %p120 = scmp.eq.s32.totalorder %s119, 0
      %s122 = sadd.s32 %s121, 1
      %s123 = scalar_select %p120, %s121, %s122
      %p126 = pneg %p120
      %p127 = scmp.eq.s32.totalorder %s21, 3
      %p128 = por %p126, %p127
      %p129 = scmp.ne.s32.totalorder %s121, %s124
      %p130 = scmp.eq.s32.totalorder %s21, 0
      %p131 = por %p129, %p130
      %p132 = scmp.ne.s32.totalorder %s121, %s124
      %p133 = scmp.eq.s32.totalorder %s26, 3
      %p134 = por %p132, %p133
      %p135 = scmp.ne.s32.totalorder %s124, %s125
      %p136 = scmp.eq.s32.totalorder %s26, 0
      %p137 = por %p135, %p136
      %p138 = scmp.ne.s32.totalorder %s124, %s125
      %p139 = scmp.eq.s32.totalorder %s27, 3
      %p140 = por %p138, %p139
      %p142 = scmp.ne.s32.totalorder %s125, %s141
      %p143 = scmp.eq.s32.totalorder %s27, 0
      %p144 = por %p142, %p143
      %s145 = ssub.s32 %s29, %s36
      %p146 = scmp.eq.s32.totalorder %s145, 0
      %s148 = sadd.s32 %s147, 1
      %s149 = scalar_select %p146, %s147, %s148
      %p152 = pneg %p146
      %p153 = scmp.eq.s32.totalorder %s21, 3
      %p154 = por %p152, %p153
      %p155 = scmp.ne.s32.totalorder %s147, %s150
      %p156 = scmp.eq.s32.totalorder %s21, 0
      %p157 = por %p155, %p156
      %p158 = scmp.ne.s32.totalorder %s147, %s150
      %p159 = scmp.eq.s32.totalorder %s26, 3
      %p160 = por %p158, %p159
      %p161 = scmp.ne.s32.totalorder %s150, %s151
      %p162 = scmp.eq.s32.totalorder %s26, 0
      %p163 = por %p161, %p162
      %p164 = scmp.ne.s32.totalorder %s150, %s151
      %p165 = scmp.eq.s32.totalorder %s27, 3
      %p166 = por %p164, %p165
      %p168 = scmp.ne.s32.totalorder %s151, %s167
      %p169 = scmp.eq.s32.totalorder %s27, 0
      %p170 = por %p168, %p169
      %s172 = sadd.s32 %s171, 1
      %p175 = scmp.eq.s32.totalorder %s21, 3
      %p176 = scmp.ne.s32.totalorder %s171, %s173
      %p177 = scmp.eq.s32.totalorder %s21, 0
      %p178 = por %p176, %p177
      %p179 = scmp.ne.s32.totalorder %s171, %s173
      %p180 = scmp.eq.s32.totalorder %s26, 3
      %p181 = por %p179, %p180
      %p182 = scmp.ne.s32.totalorder %s173, %s174
      %p183 = scmp.eq.s32.totalorder %s26, 0
      %p184 = por %p182, %p183
      %p185 = scmp.ne.s32.totalorder %s173, %s174
      %p186 = scmp.eq.s32.totalorder %s27, 3
      %p187 = por %p185, %p186
      %p189 = scmp.ne.s32.totalorder %s174, %s188
      %p190 = scmp.eq.s32.totalorder %s27, 0
      %p191 = por %p189, %p190
      %s193 = sadd.s32 %s192, 1
      %p196 = scmp.eq.s32.totalorder %s21, 3
      %p197 = scmp.ne.s32.totalorder %s192, %s194
      %p198 = scmp.eq.s32.totalorder %s21, 0
      %p199 = por %p197, %p198
      %p200 = scmp.ne.s32.totalorder %s192, %s194
      %p201 = scmp.eq.s32.totalorder %s26, 3
      %p202 = por %p200, %p201
      %p203 = scmp.ne.s32.totalorder %s194, %s195
      %p204 = scmp.eq.s32.totalorder %s26, 0
      %p205 = por %p203, %p204
      %p206 = scmp.ne.s32.totalorder %s194, %s195
      %p207 = scmp.eq.s32.totalorder %s27, 3
      %p208 = por %p206, %p207
      %p210 = scmp.ne.s32.totalorder %s195, %s209
      %p211 = scmp.eq.s32.totalorder %s27, 0
      %p212 = por %p210, %p211
      %s214 = sadd.s32 %s213, 1
      %p217 = scmp.eq.s32.totalorder %s21, 3
      %p218 = scmp.ne.s32.totalorder %s213, %s215
      %p219 = scmp.eq.s32.totalorder %s21, 0
      %p220 = por %p218, %p219
      %p221 = scmp.ne.s32.totalorder %s213, %s215
      %p222 = scmp.eq.s32.totalorder %s26, 3
      %p223 = por %p221, %p222
      %p224 = scmp.ne.s32.totalorder %s215, %s216
      %p225 = scmp.eq.s32.totalorder %s26, 0
      %p226 = por %p224, %p225
      %p227 = scmp.ne.s32.totalorder %s215, %s216
      %p228 = scmp.eq.s32.totalorder %s27, 3
      %p229 = por %p227, %p228
      %p231 = scmp.ne.s32.totalorder %s216, %s230
      %p232 = scmp.eq.s32.totalorder %s27, 0
      %p233 = por %p231, %p232
      %s235 = sadd.s32 %s234, 1
      %p238 = scmp.eq.s32.totalorder %s21, 3
      %p239 = scmp.ne.s32.totalorder %s234, %s236
      %p240 = scmp.eq.s32.totalorder %s21, 0
      %p241 = por %p239, %p240
      %p242 = scmp.ne.s32.totalorder %s234, %s236
      %p243 = scmp.eq.s32.totalorder %s26, 3
      %p244 = por %p242, %p243
      %p245 = scmp.ne.s32.totalorder %s236, %s237
      %p246 = scmp.eq.s32.totalorder %s26, 0
      %p247 = por %p245, %p246
      %p248 = scmp.ne.s32.totalorder %s236, %s237
      %p249 = scmp.eq.s32.totalorder %s27, 3
      %p250 = por %p248, %p249
      %p252 = scmp.ne.s32.totalorder %s237, %s251
      %p253 = scmp.eq.s32.totalorder %s27, 0
      %p254 = por %p252, %p253
      %s256 = sadd.s32 %s255, 1
      %p259 = scmp.eq.s32.totalorder %s21, 3
      %p260 = scmp.ne.s32.totalorder %s255, %s257
      %p261 = scmp.eq.s32.totalorder %s21, 0
      %p262 = por %p260, %p261
      %p263 = scmp.ne.s32.totalorder %s255, %s257
      %p264 = scmp.eq.s32.totalorder %s26, 3
      %p265 = por %p263, %p264
      %p266 = scmp.ne.s32.totalorder %s257, %s258
      %p267 = scmp.eq.s32.totalorder %s26, 0
      %p268 = por %p266, %p267
      %p269 = scmp.ne.s32.totalorder %s257, %s258
      %p270 = scmp.eq.s32.totalorder %s27, 3
      %p271 = por %p269, %p270
      %p273 = scmp.ne.s32.totalorder %s258, %s272
      %p274 = scmp.eq.s32.totalorder %s27, 0
      %p275 = por %p273, %p274
      %s277 = sadd.s32 %s276, 1
      %p280 = scmp.eq.s32.totalorder %s21, 3
      %p281 = scmp.ne.s32.totalorder %s276, %s278
      %p282 = scmp.eq.s32.totalorder %s21, 0
      %p283 = por %p281, %p282
      %p284 = scmp.ne.s32.totalorder %s276, %s278
      %p285 = scmp.eq.s32.totalorder %s26, 3
      %p286 = por %p284, %p285
      %p287 = scmp.ne.s32.totalorder %s278, %s279
      %p288 = scmp.eq.s32.totalorder %s26, 0
      %p289 = por %p287, %p288
      %p290 = scmp.ne.s32.totalorder %s278, %s279
      %p291 = scmp.eq.s32.totalorder %s27, 3
      %p292 = por %p290, %p291
      %p294 = scmp.ne.s32.totalorder %s279, %s293
      %p295 = scmp.eq.s32.totalorder %s27, 0
      %p296 = por %p294, %p295
      %s298 = sadd.s32 %s297, 1
      %p301 = scmp.eq.s32.totalorder %s21, 3
      %p302 = scmp.ne.s32.totalorder %s297, %s299
      %p303 = scmp.eq.s32.totalorder %s21, 0
      %p304 = por %p302, %p303
      %p305 = scmp.ne.s32.totalorder %s297, %s299
      %p306 = scmp.eq.s32.totalorder %s26, 3
      %p307 = por %p305, %p306
      %p308 = scmp.ne.s32.totalorder %s299, %s300
      %p309 = scmp.eq.s32.totalorder %s26, 0
      %p310 = por %p308, %p309
      %p311 = scmp.ne.s32.totalorder %s299, %s300
      %p312 = scmp.eq.s32.totalorder %s27, 3
      %p313 = por %p311, %p312
      %p315 = scmp.ne.s32.totalorder %s300, %s314
      %p316 = scmp.eq.s32.totalorder %s27, 0
      %p317 = por %p315, %p316
      %s319 = sadd.s32 %s318, 1
      %p322 = scmp.eq.s32.totalorder %s21, 3
      %p323 = scmp.ne.s32.totalorder %s318, %s320
      %p324 = scmp.eq.s32.totalorder %s21, 0
      %p325 = por %p323, %p324
      %p326 = scmp.ne.s32.totalorder %s318, %s320
      %p327 = scmp.eq.s32.totalorder %s26, 3
      %p328 = por %p326, %p327
      %p329 = scmp.ne.s32.totalorder %s320, %s321
      %p330 = scmp.eq.s32.totalorder %s26, 0
      %p331 = por %p329, %p330
      %p332 = scmp.ne.s32.totalorder %s320, %s321
      %p333 = scmp.eq.s32.totalorder %s27, 3
      %p334 = por %p332, %p333
      %p336 = scmp.ne.s32.totalorder %s321, %s335
      %p337 = scmp.eq.s32.totalorder %s27, 0
      %p338 = por %p336, %p337
      %s340 = sadd.s32 %s339, 1
      %p343 = scmp.eq.s32.totalorder %s21, 3
      %p344 = scmp.ne.s32.totalorder %s339, %s341
      %p345 = scmp.eq.s32.totalorder %s21, 0
      %p346 = por %p344, %p345
      %p347 = scmp.ne.s32.totalorder %s339, %s341
      %p348 = scmp.eq.s32.totalorder %s26, 3
      %p349 = por %p347, %p348
      %p350 = scmp.ne.s32.totalorder %s341, %s342
      %p351 = scmp.eq.s32.totalorder %s26, 0
      %p352 = por %p350, %p351
      %p353 = scmp.ne.s32.totalorder %s341, %s342
      %p354 = scmp.eq.s32.totalorder %s27, 3
      %p355 = por %p353, %p354
      %p357 = scmp.ne.s32.totalorder %s342, %s356
      %p358 = scmp.eq.s32.totalorder %s27, 0
      %p359 = por %p357, %p358
      %s360 = ssub.s32 %s28, %s40
      %p361 = scmp.eq.s32.totalorder %s360, 0
      %s363 = sadd.s32 %s362, 1
      %s364 = scalar_select %p361, %s362, %s363
      %p367 = pneg %p361
      %p368 = scmp.eq.s32.totalorder %s21, 3
      %p369 = por %p367, %p368
      %p370 = scmp.ne.s32.totalorder %s362, %s365
      %p371 = scmp.eq.s32.totalorder %s21, 0
      %p372 = por %p370, %p371
      %p373 = scmp.ne.s32.totalorder %s362, %s365
      %p374 = scmp.eq.s32.totalorder %s26, 3
      %p375 = por %p373, %p374
      %p376 = scmp.ne.s32.totalorder %s365, %s366
      %p377 = scmp.eq.s32.totalorder %s26, 0
      %p378 = por %p376, %p377
      %p379 = scmp.ne.s32.totalorder %s365, %s366
      %p380 = scmp.eq.s32.totalorder %s27, 3
      %p381 = por %p379, %p380
      %p383 = scmp.ne.s32.totalorder %s366, %s382
      %p384 = scmp.eq.s32.totalorder %s27, 0
      %p385 = por %p383, %p384
      %p386 = scmp.le.s32.totalorder 1, %s21
      %p387 = scmp.lt.s32.totalorder %s21, 5
      %p388 = pnand %p386, %p387
      %p389 = pneg %p388
      // Predicated region
      $region9: #{tpu_custom_call.1} parent=5 // pred_check
        _
      $region10: #{tpu_custom_call.1} parent=5 // pred_check_branch
        %391 = sbr.rel (%p388) target = $region12
      $region11: #{tpu_custom_call.1} parent=5 // pred_region
        %s392 = ssub.s32 %s21, 1
        // Predicated region
        $region13: #{tpu_custom_call.1} parent=11 // pred_check
          %p393 = pneg %p59
        $region14: #{tpu_custom_call.1} parent=11 // pred_check_branch
          %395 = sbr.rel (%p393) target = $region16
        $region15: #{tpu_custom_call.1} parent=11 // pred_region
          %s396 = smul.u32 2, %s30
          %p397 = scmp.lt.s32.totalorder %s396, 1
          %s398 = scalar_select %p397, %s396, 1
          %s399 = smul.addr %s398, 8
          %s400 = scalar_lea.vmem %s0, %s399
          %s401 = smul.u32 2, %s30
        $region16: #{tpu_custom_call.1} parent=11 // pred_fallthru
          _
        // Predicated region
        $region17: #{tpu_custom_call.1} parent=11 // pred_check
          %p402 = pneg %p85
        $region18: #{tpu_custom_call.1} parent=11 // pred_check_branch
          %404 = sbr.rel (%p402) target = $region20
        $region19: #{tpu_custom_call.1} parent=11 // pred_region
          %s405 = smul.u32 2, %s30
          %p406 = scmp.lt.s32.totalorder %s405, 1
          %s407 = scalar_select %p406, %s405, 1
          %s408 = smul.addr %s407, 8
          %s409 = scalar_lea.vmem %s1, %s408
          %s410 = smul.u32 2, %s30
        $region20: #{tpu_custom_call.1} parent=11 // pred_fallthru
          _
        // Predicated region
        $region21: #{tpu_custom_call.1} parent=11 // pred_check
          %p411 = pneg %p184
        $region22: #{tpu_custom_call.1} parent=11 // pred_check_branch
          %413 = sbr.rel (%p411) target = $region24
        $region23: #{tpu_custom_call.1} parent=11 // pred_region
          _
        $region24: #{tpu_custom_call.1} parent=11 // pred_fallthru
          _
        // Predicated region
        $region25: #{tpu_custom_call.1} parent=11 // pred_check
          %p414 = pneg %p205
        $region26: #{tpu_custom_call.1} parent=11 // pred_check_branch
          %416 = sbr.rel (%p414) target = $region28
        $region27: #{tpu_custom_call.1} parent=11 // pred_region
          _
        $region28: #{tpu_custom_call.1} parent=11 // pred_fallthru
          _
        // Predicated region
        $region29: #{tpu_custom_call.1} parent=11 // pred_check
          %p417 = pneg %p226
        $region30: #{tpu_custom_call.1} parent=11 // pred_check_branch
          %419 = sbr.rel (%p417) target = $region32
        $region31: #{tpu_custom_call.1} parent=11 // pred_region
          _
        $region32: #{tpu_custom_call.1} parent=11 // pred_fallthru
          _
        // Predicated region
        $region33: #{tpu_custom_call.1} parent=11 // pred_check
          %p420 = pneg %p247
        $region34: #{tpu_custom_call.1} parent=11 // pred_check_branch
          %422 = sbr.rel (%p420) target = $region36
        $region35: #{tpu_custom_call.1} parent=11 // pred_region
          _
        $region36: #{tpu_custom_call.1} parent=11 // pred_fallthru
          _
        // Predicated region
        $region37: #{tpu_custom_call.1} parent=11 // pred_check
          %p423 = pneg %p268
        $region38: #{tpu_custom_call.1} parent=11 // pred_check_branch
          %425 = sbr.rel (%p423) target = $region40
        $region39: #{tpu_custom_call.1} parent=11 // pred_region
          _
        $region40: #{tpu_custom_call.1} parent=11 // pred_fallthru
          _
        // Predicated region
        $region41: #{tpu_custom_call.1} parent=11 // pred_check
          %p426 = pneg %p289
        $region42: #{tpu_custom_call.1} parent=11 // pred_check_branch
          %428 = sbr.rel (%p426) target = $region44
        $region43: #{tpu_custom_call.1} parent=11 // pred_region
          _
        $region44: #{tpu_custom_call.1} parent=11 // pred_fallthru
          _
        // Predicated region
        $region45: #{tpu_custom_call.1} parent=11 // pred_check
          %p429 = pneg %p310
        $region46: #{tpu_custom_call.1} parent=11 // pred_check_branch
          %431 = sbr.rel (%p429) target = $region48
        $region47: #{tpu_custom_call.1} parent=11 // pred_region
          _
        $region48: #{tpu_custom_call.1} parent=11 // pred_fallthru
          _
        // Predicated region
        $region49: #{tpu_custom_call.1} parent=11 // pred_check
          %p432 = pneg %p331
        $region50: #{tpu_custom_call.1} parent=11 // pred_check_branch
          %434 = sbr.rel (%p432) target = $region52
        $region51: #{tpu_custom_call.1} parent=11 // pred_region
          _
        $region52: #{tpu_custom_call.1} parent=11 // pred_fallthru
          _
        // Predicated region
        $region53: #{tpu_custom_call.1} parent=11 // pred_check
          %p435 = pneg %p352
        $region54: #{tpu_custom_call.1} parent=11 // pred_check_branch
          %437 = sbr.rel (%p435) target = $region56
        $region55: #{tpu_custom_call.1} parent=11 // pred_region
          _
        $region56: #{tpu_custom_call.1} parent=11 // pred_fallthru
          _
      $region12: #{tpu_custom_call.1} parent=5 // pred_fallthru
        _
      %p438 = scmp.lt.s32.totalorder %s21, 4
      // Predicated region
      $region57: #{tpu_custom_call.1} parent=5 // pred_check
        %p439 = pneg %p438
      $region58: #{tpu_custom_call.1} parent=5 // pred_check_branch
        %441 = sbr.rel (%p439) target = $region60
      $region59: #{tpu_custom_call.1} parent=5 // pred_region
        // Predicated region
        $region61: #{tpu_custom_call.1} parent=59 // pred_check
          %p442 = pneg %p105
        $region62: #{tpu_custom_call.1} parent=59 // pred_check_branch
          %444 = sbr.rel (%p442) target = $region64
        $region63: #{tpu_custom_call.1} parent=59 // pred_region
          %p445 = scmp.lt.s32.totalorder %s29, 3
          %s446 = scalar_select %p445, %s29, 3
          %s447 = smul.addr %s446, 4
          %s448 = smul.addr %s447, 8
          %s449 = scalar_lea.vmem %s2, %s448
        $region64: #{tpu_custom_call.1} parent=59 // pred_fallthru
          _
        // Predicated region
        $region65: #{tpu_custom_call.1} parent=59 // pred_check
          %p450 = pneg %p131
        $region66: #{tpu_custom_call.1} parent=59 // pred_check_branch
          %452 = sbr.rel (%p450) target = $region68
        $region67: #{tpu_custom_call.1} parent=59 // pred_region
          %p453 = scmp.lt.s32.totalorder %s29, 3
          %s454 = scalar_select %p453, %s29, 3
          %s455 = scalar_lea.vmem %s3, %s454
        $region68: #{tpu_custom_call.1} parent=59 // pred_fallthru
          _
        // Predicated region
        $region69: #{tpu_custom_call.1} parent=59 // pred_check
          %p456 = pneg %p157
        $region70: #{tpu_custom_call.1} parent=59 // pred_check_branch
          %458 = sbr.rel (%p456) target = $region72
        $region71: #{tpu_custom_call.1} parent=59 // pred_region
          %p459 = scmp.lt.s32.totalorder %s29, 3
          %s460 = scalar_select %p459, %s29, 3
          %s461 = smul.addr %s460, 8
          %s462 = scalar_lea.vmem %s4, %s461
        $region72: #{tpu_custom_call.1} parent=59 // pred_fallthru
          _
      $region60: #{tpu_custom_call.1} parent=5 // pred_fallthru
        _
      %p463 = scmp.le.s32.totalorder 1, %s21
      %p464 = scmp.lt.s32.totalorder %s21, 5
      %p465 = pnand %p463, %p464
      %p466 = pneg %p465
      // Predicated region
      $region73: #{tpu_custom_call.1} parent=5 // pred_check
        _
      $region74: #{tpu_custom_call.1} parent=5 // pred_check_branch
        %468 = sbr.rel (%p465) target = $region76
      $region75: #{tpu_custom_call.1} parent=5 // pred_region
        %s469 = ssub.s32 %s21, 1
        %s470 = smul.u32 2, %s30
        %p471 = scmp.lt.s32.totalorder %s470, 1
        %s472 = scalar_select %p471, %s470, 1
        %s473 = smul.addr %s472, 8
        %s474 = scalar_lea.vmem %s0, %s473
        %p475 = pneg %p59
        %p476 = pneg %p56
        %s477 = smul.u32 2, %s30
        %p478 = scmp.lt.s32.totalorder %s477, 1
        %s479 = scalar_select %p478, %s477, 1
        %s480 = smul.addr %s479, 8
        %s481 = scalar_lea.vmem %s1, %s480
        %p482 = pneg %p85
        %p483 = pneg %p82
        %p484 = scmp.lt.s32.totalorder %s31, 3
        %s485 = scalar_select %p484, %s31, 3
        %s486 = smul.addr %s485, 4
        %s487 = smul.addr %s486, 8
        %s488 = scalar_lea.vmem %s2, %s487
        %p489 = pneg %p111
        %p490 = pneg %p108
        %p491 = scmp.lt.s32.totalorder %s31, 3
        %s492 = scalar_select %p491, %s31, 3
        %s493 = scalar_lea.vmem %s3, %s492
        %p494 = pneg %p137
        %p495 = pneg %p134
        %p496 = scmp.lt.s32.totalorder %s31, 3
        %s497 = scalar_select %p496, %s31, 3
        %s498 = smul.addr %s497, 8
        %s499 = scalar_lea.vmem %s4, %s498
        %p500 = pneg %p163
        %p501 = pneg %p160
        %p502 = pneg %p184
        %p503 = pneg %p181
        %p504 = pneg %p205
        %p505 = pneg %p202
        %p506 = pneg %p226
        %p507 = pneg %p223
        %p508 = pneg %p247
        %p509 = pneg %p244
        %p510 = pneg %p268
        %p511 = pneg %p265
        %p512 = pneg %p289
        %p513 = pneg %p286
        %p514 = pneg %p310
        %p515 = pneg %p307
        %p516 = pneg %p331
        %p517 = pneg %p328
        %p518 = pneg %p352
        %p519 = pneg %p349
        %p520 = pneg %p378
        %p521 = pneg %p375
        %s522 = smul.u32 2, %s30
        %p523 = scmp.lt.s32.totalorder %s522, 1
        %s524 = scalar_select %p523, %s522, 1
        %s525 = smul.addr %s524, 8
        %s526 = scalar_lea.vmem %s0, %s525
        %s527 = smul.u32 2, %s30
        %s528 = smul.u32 2, %s30
        %p529 = scmp.lt.s32.totalorder %s528, 1
        %s530 = scalar_select %p529, %s528, 1
        %s531 = smul.addr %s530, 8
        %s532 = scalar_lea.vmem %s1, %s531
        %s533 = smul.u32 2, %s30
        %p534 = scmp.lt.s32.totalorder %s31, 3
        %s535 = scalar_select %p534, %s31, 3
        %s536 = smul.addr %s535, 4
        %s537 = smul.addr %s536, 8
        %s538 = scalar_lea.vmem %s2, %s537
        %p539 = scmp.lt.s32.totalorder %s31, 3
        %s540 = scalar_select %p539, %s31, 3
        %s541 = scalar_lea.vmem %s3, %s540
        %p542 = scmp.lt.s32.totalorder %s31, 3
        %s543 = scalar_select %p542, %s31, 3
        %s544 = smul.addr %s543, 8
        %s545 = scalar_lea.vmem %s4, %s544
        %s546 = smul.u32 2, %s30
        %v547 = vld [vmem:[%s526] sm:$0xff]
        %v548 = vld [vmem:[%s526 + $0x8] sm:$0xff]
        %p549 = scmp.eq.s32.totalorder %s31, 0
        // Predicated region
        $region77: #{tpu_custom_call.1} parent=75 // pred_check
          %p550 = pneg %p549
        $region78: #{tpu_custom_call.1} parent=75 // pred_check_branch
          %552 = sbr.rel (%p550) target = $region80
        $region79: #{tpu_custom_call.1} parent=75 // pred_region
          %vm553 = vcmask 261120
          %554 = vst.msk [vmem:[#allocation2] sm:$0xff] %vm553, 0.0
          %555 = vst.msk [vmem:[#allocation2 + $0x8] sm:$0xff] %vm553, 0.0
          %v556 = vld [vmem:[%s532] sm:$0xff]
          %v557 = vld [vmem:[%s532 + $0x8] sm:$0xff]
          %vm558 = vcmp.eq.f32.partialorder %v556, 0.0
          %vm559 = vcmp.eq.f32.partialorder %v557, 0.0
          %v560 = vsel %vm558, -1e+09, 0.0
          %v561 = vsel %vm559, -1e+09, 0.0
          %vm562 = vcmask 64512
          %563 = vst.msk [vmem:[#allocation3] sm:$0xff] %vm562, %v560
          %564 = vst.msk [vmem:[#allocation3 + $0x8] sm:$0xff] %vm562, %v561
        $region80: #{tpu_custom_call.1} parent=75 // pred_fallthru
          _
        %v565 = vld [vmem:[%s538] sm:$0xff]
        %v566 = vld [vmem:[%s538 + $0x8] sm:$0xff]
        %v567 = vld [vmem:[%s538 + $0x10] sm:$0xff]
        %v568 = vld [vmem:[%s538 + $0x18] sm:$0xff]
        %v569 = vld [vmem:[%s541] sm:$0x1]
        %v571 = vlaneseq
        %v572 = vshrl.u32 %v571, 7
        %v573 = vsub.s32 0, %v572
        %v574 = vrot.slane %v569, %v573
        %vm576 = vcmask 261120
        %v578 = vsel %vm576, %v547, 0
        %v581 = vsel %vm576, %v548, 0
        %583 = vmatprep.subr.mxu0 0.0
        %584 = vmatpush1.msra.mxu0 %v565
        %585 = vmatprep.subr.mxu0 0.0
        %586 = vmatpush1.msra.mxu0 %v566
        %587 = vmatprep.subr.mxu0 0.0
        %588 = vmatpush1.msra.mxu0 %v567
        %589 = vmatprep.subr.mxu0 0.0
        %590 = vmatpush1.msra.mxu0 %v568
        %591 = vmatprep.subr.mxu0 0.0
        %592 = vmatpush1.msra.mxu0 0.0
        %593 = vmatprep.subr.mxu0 0.0
        %594 = vmatpush1.msra.mxu0 0.0
        %595 = vmatprep.subr.mxu0 0.0
        %596 = vmatpush1.msra.mxu0 0.0
        %597 = vmatprep.subr.mxu0 0.0
        %598 = vmatpush1.msra.mxu0 0.0
        %599 = vmatprep.subr.mxu0 0.0
        %600 = vmatpush1.msra.mxu0 0.0
        %601 = vmatprep.subr.mxu0 0.0
        %602 = vmatpush1.msra.mxu0 0.0
        %603 = vmatprep.subr.mxu0 0.0
        %604 = vmatpush1.msra.mxu0 0.0
        %605 = vmatprep.subr.mxu0 0.0
        %606 = vmatpush1.msra.mxu0 0.0
        %607 = vmatprep.subr.mxu0 0.0
        %608 = vmatpush1.msra.mxu0 0.0
        %609 = vmatprep.subr.mxu0 0.0
        %610 = vmatpush1.msra.mxu0 0.0
        %611 = vmatprep.subr.mxu0 0.0
        %612 = vmatpush1.msra.mxu0 0.0
        %613 = vmatprep.subr.mxu0 0.0
        %614 = vmatpush1.msra.mxu0 0.0
        %615 = vmatprep.subr.mxu0 0.0
        %616 = vmatpush1.msra.mxu0 0.0
        %617 = vmatprep.subr.mxu0 0.0
        %618 = vmatpush1.msra.mxu0 0.0
        %619 = vmatprep.subr.mxu0 0.0
        %620 = vmatpush1.msra.mxu0 0.0
        %621 = vmatprep.subr.mxu0 0.0
        %622 = vmatpush1.msra.mxu0 0.0
        %623 = vmatprep.subr.mxu0 0.0
        %624 = vmatpush1.msra.mxu0 0.0
        %625 = vmatprep.subr.mxu0 0.0
        %626 = vmatpush1.msra.mxu0 0.0
        %627 = vmatprep.subr.mxu0 0.0
        %628 = vmatpush1.msra.mxu0 0.0
        %629 = vmatprep.subr.mxu0 0.0
        %630 = vmatpush1.msra.mxu0 0.0
        %631 = vmatprep.subr.mxu0 0.0
        %632 = vmatpush1.msra.mxu0 0.0
        %633 = vmatprep.subr.mxu0 0.0
        %634 = vmatpush1.msra.mxu0 0.0
        %635 = vmatprep.subr.mxu0 0.0
        %636 = vmatpush1.msra.mxu0 0.0
        %637 = vmatprep.subr.mxu0 0.0
        %638 = vmatpush1.msra.mxu0 0.0
        %639 = vmatprep.subr.mxu0 0.0
        %640 = vmatpush1.msra.mxu0 0.0
        %641 = vmatprep.subr.mxu0 0.0
        %642 = vmatpush1.msra.mxu0 0.0
        %643 = vmatprep.subr.mxu0 0.0
        %644 = vmatpush1.msra.mxu0 0.0
        %645 = vmatprep.subr.mxu0 0.0
        %646 = vmatpush1.msra.mxu0 0.0
        %647 = vmatprep.mubr.f32.mxu0 0.0
        %648 = vmatmul.mubr.f32.gmra.mrb[0].mxu0 %v578
        %v649 = vpop.f32.mrb[0].mxu0
        %v650 = vadd.f32 %v574, %v649
        %v651 = vpop.f32.mrb[0].mxu0
        %652 = vmatprep.mubr.f32.mxu0 0.0
        %653 = vmatmul.mubr.f32.gmra.mrb[0].mxu0 %v581
        %v654 = vpop.f32.mrb[0].mxu0
        %v655 = vadd.f32 %v574, %v654
        %v656 = vpop.f32.mrb[0].mxu0
        %657 = vdwg.mxu0
        %659 = vrot.lane.b32.xlu0 %v650, 120
        %v660 = vpop.permute.xlu0 %659
        %vm661 = vcmask 64512
        %v662 = vsel %vm661, %v650, 0
        %v664 = vsel %vm661, %v660, 0
        %666 = vmatprep.subr.mxu0 0.0
        %667 = vmatpush1.xpose.msra.mxu0 %v664
        %668 = vmatprep.subr.mxu0 0.0
        %669 = vmatpush1.xpose.msra.mxu0 0.0
        %670 = vmatprep.subr.mxu0 0.0
        %671 = vmatpush1.xpose.msra.mxu0 0.0
        %672 = vmatprep.subr.mxu0 0.0
        %673 = vmatpush1.xpose.msra.mxu0 0.0
        %674 = vmatprep.subr.mxu0 0.0
        %675 = vmatpush1.xpose.msra.mxu0 0.0
        %676 = vmatprep.subr.mxu0 0.0
        %677 = vmatpush1.xpose.msra.mxu0 0.0
        %678 = vmatprep.subr.mxu0 0.0
        %679 = vmatpush1.xpose.msra.mxu0 0.0
        %680 = vmatprep.subr.mxu0 0.0
        %681 = vmatpush1.xpose.msra.mxu0 0.0
        %682 = vmatprep.subr.mxu0 0.0
        %683 = vmatpush1.xpose.msra.mxu0 0.0
        %684 = vmatprep.subr.mxu0 0.0
        %685 = vmatpush1.xpose.msra.mxu0 0.0
        %686 = vmatprep.subr.mxu0 0.0
        %687 = vmatpush1.xpose.msra.mxu0 0.0
        %688 = vmatprep.subr.mxu0 0.0
        %689 = vmatpush1.xpose.msra.mxu0 0.0
        %690 = vmatprep.subr.mxu0 0.0
        %691 = vmatpush1.xpose.msra.mxu0 0.0
        %692 = vmatprep.subr.mxu0 0.0
        %693 = vmatpush1.xpose.msra.mxu0 0.0
        %694 = vmatprep.subr.mxu0 0.0
        %695 = vmatpush1.xpose.msra.mxu0 0.0
        %696 = vmatprep.subr.mxu0 0.0
        %697 = vmatpush1.xpose.msra.mxu0 0.0
        %698 = vmatprep.subr.mxu0 0.0
        %699 = vmatpush1.xpose.msra.mxu0 0.0
        %700 = vmatprep.subr.mxu0 0.0
        %701 = vmatpush1.xpose.msra.mxu0 0.0
        %702 = vmatprep.subr.mxu0 0.0
        %703 = vmatpush1.xpose.msra.mxu0 0.0
        %704 = vmatprep.subr.mxu0 0.0
        %705 = vmatpush1.xpose.msra.mxu0 0.0
        %706 = vmatprep.subr.mxu0 0.0
        %707 = vmatpush1.xpose.msra.mxu0 0.0
        %708 = vmatprep.subr.mxu0 0.0
        %709 = vmatpush1.xpose.msra.mxu0 0.0
        %710 = vmatprep.subr.mxu0 0.0
        %711 = vmatpush1.xpose.msra.mxu0 0.0
        %712 = vmatprep.subr.mxu0 0.0
        %713 = vmatpush1.xpose.msra.mxu0 0.0
        %714 = vmatprep.subr.mxu0 0.0
        %715 = vmatpush1.xpose.msra.mxu0 0.0
        %716 = vmatprep.subr.mxu0 0.0
        %717 = vmatpush1.xpose.msra.mxu0 0.0
        %718 = vmatprep.subr.mxu0 0.0
        %719 = vmatpush1.xpose.msra.mxu0 0.0
        %720 = vmatprep.subr.mxu0 0.0
        %721 = vmatpush1.xpose.msra.mxu0 0.0
        %722 = vmatprep.subr.mxu0 0.0
        %723 = vmatpush1.xpose.msra.mxu0 0.0
        %724 = vmatprep.subr.mxu0 0.0
        %725 = vmatpush1.xpose.msra.mxu0 0.0
        %726 = vmatprep.subr.mxu0 0.0
        %727 = vmatpush1.xpose.msra.mxu0 0.0
        %728 = vmatprep.subr.mxu0 0.0
        %729 = vmatpush1.xpose.msra.mxu0 0.0
        %730 = vmatprep.mubr.f32.mxu0 0.0
        %731 = vmatmul.mubr.f32.gmra.mrb[0].mxu0 %v662
        %v732 = vpop.f32.mrb[0].mxu0
        %v733 = vadd.f32 0.0, %v732
        %v734 = vpop.f32.mrb[0].mxu0
        %735 = vdwg.mxu0
        %737 = vrot.lane.b32.xlu0 %v655, 120
        %v738 = vpop.permute.xlu0 %737
        %v739 = vsel %vm661, %v655, 0
        %v741 = vsel %vm661, %v738, 0
        %743 = vmatprep.subr.mxu0 0.0
        %744 = vmatpush1.xpose.msra.mxu0 %v741
        %745 = vmatprep.subr.mxu0 0.0
        %746 = vmatpush1.xpose.msra.mxu0 0.0
        %747 = vmatprep.subr.mxu0 0.0
        %748 = vmatpush1.xpose.msra.mxu0 0.0
        %749 = vmatprep.subr.mxu0 0.0
        %750 = vmatpush1.xpose.msra.mxu0 0.0
        %751 = vmatprep.subr.mxu0 0.0
        %752 = vmatpush1.xpose.msra.mxu0 0.0
        %753 = vmatprep.subr.mxu0 0.0
        %754 = vmatpush1.xpose.msra.mxu0 0.0
        %755 = vmatprep.subr.mxu0 0.0
        %756 = vmatpush1.xpose.msra.mxu0 0.0
        %757 = vmatprep.subr.mxu0 0.0
        %758 = vmatpush1.xpose.msra.mxu0 0.0
        %759 = vmatprep.subr.mxu0 0.0
        %760 = vmatpush1.xpose.msra.mxu0 0.0
        %761 = vmatprep.subr.mxu0 0.0
        %762 = vmatpush1.xpose.msra.mxu0 0.0
        %763 = vmatprep.subr.mxu0 0.0
        %764 = vmatpush1.xpose.msra.mxu0 0.0
        %765 = vmatprep.subr.mxu0 0.0
        %766 = vmatpush1.xpose.msra.mxu0 0.0
        %767 = vmatprep.subr.mxu0 0.0
        %768 = vmatpush1.xpose.msra.mxu0 0.0
        %769 = vmatprep.subr.mxu0 0.0
        %770 = vmatpush1.xpose.msra.mxu0 0.0
        %771 = vmatprep.subr.mxu0 0.0
        %772 = vmatpush1.xpose.msra.mxu0 0.0
        %773 = vmatprep.subr.mxu0 0.0
        %774 = vmatpush1.xpose.msra.mxu0 0.0
        %775 = vmatprep.subr.mxu0 0.0
        %776 = vmatpush1.xpose.msra.mxu0 0.0
        %777 = vmatprep.subr.mxu0 0.0
        %778 = vmatpush1.xpose.msra.mxu0 0.0
        %779 = vmatprep.subr.mxu0 0.0
        %780 = vmatpush1.xpose.msra.mxu0 0.0
        %781 = vmatprep.subr.mxu0 0.0
        %782 = vmatpush1.xpose.msra.mxu0 0.0
        %783 = vmatprep.subr.mxu0 0.0
        %784 = vmatpush1.xpose.msra.mxu0 0.0
        %785 = vmatprep.subr.mxu0 0.0
        %786 = vmatpush1.xpose.msra.mxu0 0.0
        %787 = vmatprep.subr.mxu0 0.0
        %788 = vmatpush1.xpose.msra.mxu0 0.0
        %789 = vmatprep.subr.mxu0 0.0
        %790 = vmatpush1.xpose.msra.mxu0 0.0
        %791 = vmatprep.subr.mxu0 0.0
        %792 = vmatpush1.xpose.msra.mxu0 0.0
        %793 = vmatprep.subr.mxu0 0.0
        %794 = vmatpush1.xpose.msra.mxu0 0.0
        %795 = vmatprep.subr.mxu0 0.0
        %796 = vmatpush1.xpose.msra.mxu0 0.0
        %797 = vmatprep.subr.mxu0 0.0
        %798 = vmatpush1.xpose.msra.mxu0 0.0
        %799 = vmatprep.subr.mxu0 0.0
        %800 = vmatpush1.xpose.msra.mxu0 0.0
        %801 = vmatprep.subr.mxu0 0.0
        %802 = vmatpush1.xpose.msra.mxu0 0.0
        %803 = vmatprep.subr.mxu0 0.0
        %804 = vmatpush1.xpose.msra.mxu0 0.0
        %805 = vmatprep.subr.mxu0 0.0
        %806 = vmatpush1.xpose.msra.mxu0 0.0
        %807 = vmatprep.mubr.f32.mxu0 0.0
        %808 = vmatmul.mubr.f32.gmra.mrb[0].mxu0 %v739
        %v809 = vpop.f32.mrb[0].mxu0
        %v810 = vadd.f32 0.0, %v809
        %v811 = vpop.f32.mrb[0].mxu0
        %812 = vdwg.mxu0
        %v813 = vmul.f32 %v733, 0.35355338
        %v814 = vmul.f32 %v810, 0.35355338
        %v815 = vld [vmem:[#allocation3] sm:$0xff]
        %v816 = vld [vmem:[#allocation3 + $0x8] sm:$0xff]
        %v817 = vadd.f32 %v813, %v815
        %v818 = vadd.f32 %v814, %v816
        %v819 = vsel %vm661, %v817, -inf
        %820 = vmax.xlane.f32.xlu0 %v819
        %v821 = vpop.xlane.xlu0 %820
        %v822 = vsel %vm661, %v818, -inf
        %823 = vmax.xlane.f32.xlu0 %v822
        %v824 = vpop.xlane.xlu0 %823
        %v825 = vsub.f32 %v817, %v821
        %v826 = vsub.f32 %v818, %v824
        %v827 = vmul.f32 %v825, 1.442695
        %v828 = vpow.pop %v827
        %v829 = vmul.f32 %v826, 1.442695
        %v830 = vpow.pop %v829
        %v831 = vsel %vm661, %v828, 0.0
        %832 = vadd.xlane.f32.xlu0 %v831
        %v833 = vpop.xlane.xlu0 %832
        %v834 = vsel %vm661, %v830, 0.0
        %835 = vadd.xlane.f32.xlu0 %v834
        %v836 = vpop.xlane.xlu0 %835
        %v837 = vrcp.pop %v833
        %v838 = vrcp.pop %v836
        %v839 = vmul.f32 %v828, %v837
        %v840 = vmul.f32 %v830, %v838
        %841 = vrot.lane.b32.xlu0 %v650, 112
        %v842 = vpop.permute.xlu0 %841
        %v845 = vsel %vm661, %v839, 0
        %847 = vmatprep.subr.mxu0 0.0
        %848 = vmatpush1.msra.mxu0 %v842
        %849 = vmatprep.subr.mxu0 0.0
        %850 = vmatpush1.msra.mxu0 0.0
        %851 = vmatprep.subr.mxu0 0.0
        %852 = vmatpush1.msra.mxu0 0.0
        %853 = vmatprep.subr.mxu0 0.0
        %854 = vmatpush1.msra.mxu0 0.0
        %855 = vmatprep.subr.mxu0 0.0
        %856 = vmatpush1.msra.mxu0 0.0
        %857 = vmatprep.subr.mxu0 0.0
        %858 = vmatpush1.msra.mxu0 0.0
        %859 = vmatprep.subr.mxu0 0.0
        %860 = vmatpush1.msra.mxu0 0.0
        %861 = vmatprep.subr.mxu0 0.0
        %862 = vmatpush1.msra.mxu0 0.0
        %863 = vmatprep.subr.mxu0 0.0
        %864 = vmatpush1.msra.mxu0 0.0
        %865 = vmatprep.subr.mxu0 0.0
        %866 = vmatpush1.msra.mxu0 0.0
        %867 = vmatprep.subr.mxu0 0.0
        %868 = vmatpush1.msra.mxu0 0.0
        %869 = vmatprep.subr.mxu0 0.0
        %870 = vmatpush1.msra.mxu0 0.0
        %871 = vmatprep.subr.mxu0 0.0
        %872 = vmatpush1.msra.mxu0 0.0
        %873 = vmatprep.subr.mxu0 0.0
        %874 = vmatpush1.msra.mxu0 0.0
        %875 = vmatprep.subr.mxu0 0.0
        %876 = vmatpush1.msra.mxu0 0.0
        %877 = vmatprep.subr.mxu0 0.0
        %878 = vmatpush1.msra.mxu0 0.0
        %879 = vmatprep.subr.mxu0 0.0
        %880 = vmatpush1.msra.mxu0 0.0
        %881 = vmatprep.subr.mxu0 0.0
        %882 = vmatpush1.msra.mxu0 0.0
        %883 = vmatprep.subr.mxu0 0.0
        %884 = vmatpush1.msra.mxu0 0.0
        %885 = vmatprep.subr.mxu0 0.0
        %886 = vmatpush1.msra.mxu0 0.0
        %887 = vmatprep.subr.mxu0 0.0
        %888 = vmatpush1.msra.mxu0 0.0
        %889 = vmatprep.subr.mxu0 0.0
        %890 = vmatpush1.msra.mxu0 0.0
        %891 = vmatprep.subr.mxu0 0.0
        %892 = vmatpush1.msra.mxu0 0.0
        %893 = vmatprep.subr.mxu0 0.0
        %894 = vmatpush1.msra.mxu0 0.0
        %895 = vmatprep.subr.mxu0 0.0
        %896 = vmatpush1.msra.mxu0 0.0
        %897 = vmatprep.subr.mxu0 0.0
        %898 = vmatpush1.msra.mxu0 0.0
        %899 = vmatprep.subr.mxu0 0.0
        %900 = vmatpush1.msra.mxu0 0.0
        %901 = vmatprep.subr.mxu0 0.0
        %902 = vmatpush1.msra.mxu0 0.0
        %903 = vmatprep.subr.mxu0 0.0
        %904 = vmatpush1.msra.mxu0 0.0
        %905 = vmatprep.subr.mxu0 0.0
        %906 = vmatpush1.msra.mxu0 0.0
        %907 = vmatprep.subr.mxu0 0.0
        %908 = vmatpush1.msra.mxu0 0.0
        %909 = vmatprep.subr.mxu0 0.0
        %910 = vmatpush1.msra.mxu0 0.0
        %911 = vmatprep.mubr.f32.mxu0 0.0
        %912 = vmatmul.mubr.f32.gmra.mrb[0].mxu0 %v845
        %v913 = vpop.f32.mrb[0].mxu0
        %v914 = vadd.f32 0.0, %v913
        %v915 = vpop.f32.mrb[0].mxu0
        %916 = vdwg.mxu0
        %917 = vrot.lane.b32.xlu0 %v655, 112
        %v918 = vpop.permute.xlu0 %917
        %v921 = vsel %vm661, %v840, 0
        %923 = vmatprep.subr.mxu0 0.0
        %924 = vmatpush1.msra.mxu0 %v918
        %925 = vmatprep.subr.mxu0 0.0
        %926 = vmatpush1.msra.mxu0 0.0
        %927 = vmatprep.subr.mxu0 0.0
        %928 = vmatpush1.msra.mxu0 0.0
        %929 = vmatprep.subr.mxu0 0.0
        %930 = vmatpush1.msra.mxu0 0.0
        %931 = vmatprep.subr.mxu0 0.0
        %932 = vmatpush1.msra.mxu0 0.0
        %933 = vmatprep.subr.mxu0 0.0
        %934 = vmatpush1.msra.mxu0 0.0
        %935 = vmatprep.subr.mxu0 0.0
        %936 = vmatpush1.msra.mxu0 0.0
        %937 = vmatprep.subr.mxu0 0.0
        %938 = vmatpush1.msra.mxu0 0.0
        %939 = vmatprep.subr.mxu0 0.0
        %940 = vmatpush1.msra.mxu0 0.0
        %941 = vmatprep.subr.mxu0 0.0
        %942 = vmatpush1.msra.mxu0 0.0
        %943 = vmatprep.subr.mxu0 0.0
        %944 = vmatpush1.msra.mxu0 0.0
        %945 = vmatprep.subr.mxu0 0.0
        %946 = vmatpush1.msra.mxu0 0.0
        %947 = vmatprep.subr.mxu0 0.0
        %948 = vmatpush1.msra.mxu0 0.0
        %949 = vmatprep.subr.mxu0 0.0
        %950 = vmatpush1.msra.mxu0 0.0
        %951 = vmatprep.subr.mxu0 0.0
        %952 = vmatpush1.msra.mxu0 0.0
        %953 = vmatprep.subr.mxu0 0.0
        %954 = vmatpush1.msra.mxu0 0.0
        %955 = vmatprep.subr.mxu0 0.0
        %956 = vmatpush1.msra.mxu0 0.0
        %957 = vmatprep.subr.mxu0 0.0
        %958 = vmatpush1.msra.mxu0 0.0
        %959 = vmatprep.subr.mxu0 0.0
        %960 = vmatpush1.msra.mxu0 0.0
        %961 = vmatprep.subr.mxu0 0.0
        %962 = vmatpush1.msra.mxu0 0.0
        %963 = vmatprep.subr.mxu0 0.0
        %964 = vmatpush1.msra.mxu0 0.0
        %965 = vmatprep.subr.mxu0 0.0
        %966 = vmatpush1.msra.mxu0 0.0
        %967 = vmatprep.subr.mxu0 0.0
        %968 = vmatpush1.msra.mxu0 0.0
        %969 = vmatprep.subr.mxu0 0.0
        %970 = vmatpush1.msra.mxu0 0.0
        %971 = vmatprep.subr.mxu0 0.0
        %972 = vmatpush1.msra.mxu0 0.0
        %973 = vmatprep.subr.mxu0 0.0
        %974 = vmatpush1.msra.mxu0 0.0
        %975 = vmatprep.subr.mxu0 0.0
        %976 = vmatpush1.msra.mxu0 0.0
        %977 = vmatprep.subr.mxu0 0.0
        %978 = vmatpush1.msra.mxu0 0.0
        %979 = vmatprep.subr.mxu0 0.0
        %980 = vmatpush1.msra.mxu0 0.0
        %981 = vmatprep.subr.mxu0 0.0
        %982 = vmatpush1.msra.mxu0 0.0
        %983 = vmatprep.subr.mxu0 0.0
        %984 = vmatpush1.msra.mxu0 0.0
        %985 = vmatprep.subr.mxu0 0.0
        %986 = vmatpush1.msra.mxu0 0.0
        %987 = vmatprep.mubr.f32.mxu0 0.0
        %988 = vmatmul.mubr.f32.gmra.mrb[0].mxu0 %v921
        %v989 = vpop.f32.mrb[0].mxu0
        %v990 = vadd.f32 0.0, %v989
        %v991 = vpop.f32.mrb[0].mxu0
        %992 = vdwg.mxu0
        %v993 = vld [vmem:[#allocation2] sm:$0xff]
        %v994 = vld [vmem:[#allocation2 + $0x8] sm:$0xff]
        %v995 = vld [vmem:[%s545] sm:$0xff]
        %v997 = vsel %vm661, %v914, 0
        %v1000 = vsel %vm661, %v990, 0
        %1002 = vmatprep.subr.mxu0 0.0
        %1003 = vmatpush1.msra.mxu0 %v995
        %1004 = vmatprep.subr.mxu0 0.0
        %1005 = vmatpush1.msra.mxu0 0.0
        %1006 = vmatprep.subr.mxu0 0.0
        %1007 = vmatpush1.msra.mxu0 0.0
        %1008 = vmatprep.subr.mxu0 0.0
        %1009 = vmatpush1.msra.mxu0 0.0
        %1010 = vmatprep.subr.mxu0 0.0
        %1011 = vmatpush1.msra.mxu0 0.0
        %1012 = vmatprep.subr.mxu0 0.0
        %1013 = vmatpush1.msra.mxu0 0.0
        %1014 = vmatprep.subr.mxu0 0.0
        %1015 = vmatpush1.msra.mxu0 0.0
        %1016 = vmatprep.subr.mxu0 0.0
        %1017 = vmatpush1.msra.mxu0 0.0
        %1018 = vmatprep.subr.mxu0 0.0
        %1019 = vmatpush1.msra.mxu0 0.0
        %1020 = vmatprep.subr.mxu0 0.0
        %1021 = vmatpush1.msra.mxu0 0.0
        %1022 = vmatprep.subr.mxu0 0.0
        %1023 = vmatpush1.msra.mxu0 0.0
        %1024 = vmatprep.subr.mxu0 0.0
        %1025 = vmatpush1.msra.mxu0 0.0
        %1026 = vmatprep.subr.mxu0 0.0
        %1027 = vmatpush1.msra.mxu0 0.0
        %1028 = vmatprep.subr.mxu0 0.0
        %1029 = vmatpush1.msra.mxu0 0.0
        %1030 = vmatprep.subr.mxu0 0.0
        %1031 = vmatpush1.msra.mxu0 0.0
        %1032 = vmatprep.subr.mxu0 0.0
        %1033 = vmatpush1.msra.mxu0 0.0
        %1034 = vmatprep.subr.mxu0 0.0
        %1035 = vmatpush1.msra.mxu0 0.0
        %1036 = vmatprep.subr.mxu0 0.0
        %1037 = vmatpush1.msra.mxu0 0.0
        %1038 = vmatprep.subr.mxu0 0.0
        %1039 = vmatpush1.msra.mxu0 0.0
        %1040 = vmatprep.subr.mxu0 0.0
        %1041 = vmatpush1.msra.mxu0 0.0
        %1042 = vmatprep.subr.mxu0 0.0
        %1043 = vmatpush1.msra.mxu0 0.0
        %1044 = vmatprep.subr.mxu0 0.0
        %1045 = vmatpush1.msra.mxu0 0.0
        %1046 = vmatprep.subr.mxu0 0.0
        %1047 = vmatpush1.msra.mxu0 0.0
        %1048 = vmatprep.subr.mxu0 0.0
        %1049 = vmatpush1.msra.mxu0 0.0
        %1050 = vmatprep.subr.mxu0 0.0
        %1051 = vmatpush1.msra.mxu0 0.0
        %1052 = vmatprep.subr.mxu0 0.0
        %1053 = vmatpush1.msra.mxu0 0.0
        %1054 = vmatprep.subr.mxu0 0.0
        %1055 = vmatpush1.msra.mxu0 0.0
        %1056 = vmatprep.subr.mxu0 0.0
        %1057 = vmatpush1.msra.mxu0 0.0
        %1058 = vmatprep.subr.mxu0 0.0
        %1059 = vmatpush1.msra.mxu0 0.0
        %1060 = vmatprep.subr.mxu0 0.0
        %1061 = vmatpush1.msra.mxu0 0.0
        %1062 = vmatprep.subr.mxu0 0.0
        %1063 = vmatpush1.msra.mxu0 0.0
        %1064 = vmatprep.subr.mxu0 0.0
        %1065 = vmatpush1.msra.mxu0 0.0
        %1066 = vmatprep.mubr.f32.mxu0 0.0
        %1067 = vmatmul.mubr.f32.gmra.mrb[0].mxu0 %v997
        %v1068 = vpop.f32.mrb[0].mxu0
        %v1069 = vadd.f32 0.0, %v1068
        %v1070 = vpop.f32.mrb[0].mxu0
        %1071 = vmatprep.mubr.f32.mxu0 0.0
        %1072 = vmatmul.mubr.f32.gmra.mrb[0].mxu0 %v1000
        %v1073 = vpop.f32.mrb[0].mxu0
        %v1074 = vadd.f32 0.0, %v1073
        %v1075 = vpop.f32.mrb[0].mxu0
        %1076 = vdwg.mxu0
        %v1077 = vadd.f32 %v993, %v1069
        %v1078 = vadd.f32 %v994, %v1074
        %1079 = vst.msk [vmem:[#allocation2] sm:$0xff] %vm576, %v1077
        %1080 = vst.msk [vmem:[#allocation2 + $0x8] sm:$0xff] %vm576, %v1078
        %p1081 = scmp.eq.s32.totalorder %s31, 3
        // Predicated region
        $region81: #{tpu_custom_call.1} parent=75 // pred_check
          %p1082 = pneg %p1081
        $region82: #{tpu_custom_call.1} parent=75 // pred_check_branch
          %1084 = sbr.rel (%p1082) target = $region84
        $region83: #{tpu_custom_call.1} parent=75 // pred_region
          %v1085 = vld [vmem:[#allocation2] sm:$0xff]
          %v1086 = vld [vmem:[#allocation2 + $0x8] sm:$0xff]
          %v1087 = vld [vmem:[%s5] sm:$0x1]
          %v1089 = vlaneseq
          %v1090 = vshrl.u32 %v1089, 7
          %v1091 = vsub.s32 0, %v1090
          %v1092 = vrot.slane %v1087, %v1091
          %v1094 = vadd.f32 %v1085, %v1092
          %v1095 = vadd.f32 %v1086, %v1092
          %v1096 = vadd.f32 %v1094, %v547
          %v1097 = vadd.f32 %v1095, %v548
          %v1098 = vsel %vm576, %v1096, 0.0
          %1099 = vadd.xlane.f32.xlu0 %v1098
          %v1100 = vpop.xlane.xlu0 %1099
          %v1101 = vsel %vm576, %v1097, 0.0
          %1102 = vadd.xlane.f32.xlu0 %v1101
          %v1103 = vpop.xlane.xlu0 %1102
          %v1104 = vrcp.pop 32.0
          %v1105 = vmul.f32 %v1100, %v1104
          %v1106 = vmul.f32 %v1103, %v1104
          %v1107 = vsub.f32 %v1096, %v1105
          %v1108 = vsub.f32 %v1097, %v1106
          %v1109 = vmul.f32 %v1107, %v1107
          %v1110 = vmul.f32 %v1108, %v1108
          %v1111 = vsel %vm576, %v1109, 0.0
          %1112 = vadd.xlane.f32.xlu0 %v1111
          %v1113 = vpop.xlane.xlu0 %1112
          %v1114 = vsel %vm576, %v1110, 0.0
          %1115 = vadd.xlane.f32.xlu0 %v1114
          %v1116 = vpop.xlane.xlu0 %1115
          %v1117 = vmul.f32 %v1113, %v1104
          %v1118 = vmul.f32 %v1116, %v1104
          %v1119 = vadd.f32 %v1117, 1e-05
          %v1120 = vadd.f32 %v1118, 1e-05
          %v1121 = vrsqrt.pop %v1119
          %v1122 = vrsqrt.pop %v1120
          %v1123 = vmul.f32 %v1107, %v1121
          %v1124 = vmul.f32 %v1108, %v1122
          %v1125 = vld [vmem:[%s6] sm:$0x1]
          %v1127 = vlaneseq
          %v1128 = vshrl.u32 %v1127, 7
          %v1129 = vsub.s32 0, %v1128
          %v1130 = vrot.slane %v1125, %v1129
          %v1132 = vmul.f32 %v1123, %v1130
          %v1133 = vmul.f32 %v1124, %v1130
          %v1134 = vld [vmem:[%s7] sm:$0x1]
          %v1136 = vlaneseq
          %v1137 = vshrl.u32 %v1136, 7
          %v1138 = vsub.s32 0, %v1137
          %v1139 = vrot.slane %v1134, %v1138
          %v1141 = vadd.f32 %v1132, %v1139
          %v1142 = vadd.f32 %v1133, %v1139
          %v1143 = vld [vmem:[%s8] sm:$0xff]
          %v1144 = vld [vmem:[%s8 + $0x8] sm:$0xff]
          %v1145 = vld [vmem:[%s8 + $0x10] sm:$0xff]
          %v1146 = vld [vmem:[%s8 + $0x18] sm:$0xff]
          %v1147 = vld [vmem:[%s9] sm:$0x1]
          %v1149 = vlaneseq
          %v1150 = vshrl.u32 %v1149, 7
          %v1151 = vsub.s32 0, %v1150
          %v1152 = vrot.slane %v1147, %v1151
          %v1155 = vsel %vm576, %v1141, 0
          %v1158 = vsel %vm576, %v1142, 0
          %1160 = vmatprep.subr.mxu0 0.0
          %1161 = vmatpush1.msra.mxu0 %v1143
          %1162 = vmatprep.subr.mxu0 0.0
          %1163 = vmatpush1.msra.mxu0 %v1144
          %1164 = vmatprep.subr.mxu0 0.0
          %1165 = vmatpush1.msra.mxu0 %v1145
          %1166 = vmatprep.subr.mxu0 0.0
          %1167 = vmatpush1.msra.mxu0 %v1146
          %1168 = vmatprep.subr.mxu0 0.0
          %1169 = vmatpush1.msra.mxu0 0.0
          %1170 = vmatprep.subr.mxu0 0.0
          %1171 = vmatpush1.msra.mxu0 0.0
          %1172 = vmatprep.subr.mxu0 0.0
          %1173 = vmatpush1.msra.mxu0 0.0
          %1174 = vmatprep.subr.mxu0 0.0
          %1175 = vmatpush1.msra.mxu0 0.0
          %1176 = vmatprep.subr.mxu0 0.0
          %1177 = vmatpush1.msra.mxu0 0.0
          %1178 = vmatprep.subr.mxu0 0.0
          %1179 = vmatpush1.msra.mxu0 0.0
          %1180 = vmatprep.subr.mxu0 0.0
          %1181 = vmatpush1.msra.mxu0 0.0
          %1182 = vmatprep.subr.mxu0 0.0
          %1183 = vmatpush1.msra.mxu0 0.0
          %1184 = vmatprep.subr.mxu0 0.0
          %1185 = vmatpush1.msra.mxu0 0.0
          %1186 = vmatprep.subr.mxu0 0.0
          %1187 = vmatpush1.msra.mxu0 0.0
          %1188 = vmatprep.subr.mxu0 0.0
          %1189 = vmatpush1.msra.mxu0 0.0
          %1190 = vmatprep.subr.mxu0 0.0
          %1191 = vmatpush1.msra.mxu0 0.0
          %1192 = vmatprep.subr.mxu0 0.0
          %1193 = vmatpush1.msra.mxu0 0.0
          %1194 = vmatprep.subr.mxu0 0.0
          %1195 = vmatpush1.msra.mxu0 0.0
          %1196 = vmatprep.subr.mxu0 0.0
          %1197 = vmatpush1.msra.mxu0 0.0
          %1198 = vmatprep.subr.mxu0 0.0
          %1199 = vmatpush1.msra.mxu0 0.0
          %1200 = vmatprep.subr.mxu0 0.0
          %1201 = vmatpush1.msra.mxu0 0.0
          %1202 = vmatprep.subr.mxu0 0.0
          %1203 = vmatpush1.msra.mxu0 0.0
          %1204 = vmatprep.subr.mxu0 0.0
          %1205 = vmatpush1.msra.mxu0 0.0
          %1206 = vmatprep.subr.mxu0 0.0
          %1207 = vmatpush1.msra.mxu0 0.0
          %1208 = vmatprep.subr.mxu0 0.0
          %1209 = vmatpush1.msra.mxu0 0.0
          %1210 = vmatprep.subr.mxu0 0.0
          %1211 = vmatpush1.msra.mxu0 0.0
          %1212 = vmatprep.subr.mxu0 0.0
          %1213 = vmatpush1.msra.mxu0 0.0
          %1214 = vmatprep.subr.mxu0 0.0
          %1215 = vmatpush1.msra.mxu0 0.0
          %1216 = vmatprep.subr.mxu0 0.0
          %1217 = vmatpush1.msra.mxu0 0.0
          %1218 = vmatprep.subr.mxu0 0.0
          %1219 = vmatpush1.msra.mxu0 0.0
          %1220 = vmatprep.subr.mxu0 0.0
          %1221 = vmatpush1.msra.mxu0 0.0
          %1222 = vmatprep.subr.mxu0 0.0
          %1223 = vmatpush1.msra.mxu0 0.0
          %1224 = vmatprep.mubr.f32.mxu0 0.0
          %1225 = vmatmul.mubr.f32.gmra.mrb[0].mxu0 %v1155
          %v1226 = vpop.f32.mrb[0].mxu0
          %v1227 = vadd.f32 %v1152, %v1226
          %v1228 = vpop.f32.mrb[0].mxu0
          %1229 = vmatprep.mubr.f32.mxu0 0.0
          %1230 = vmatmul.mubr.f32.gmra.mrb[0].mxu0 %v1158
          %v1231 = vpop.f32.mrb[0].mxu0
          %v1232 = vadd.f32 %v1152, %v1231
          %v1233 = vpop.f32.mrb[0].mxu0
          %1234 = vdwg.mxu0
          %v1235 = vmax.f32 %v1227, 0.0
          %v1236 = vmax.f32 %v1232, 0.0
          %v1237 = vld [vmem:[%s10] sm:$0xff]
          %v1238 = vld [vmem:[%s10 + $0x8] sm:$0xff]
          %v1239 = vld [vmem:[%s10 + $0x10] sm:$0xff]
          %v1240 = vld [vmem:[%s10 + $0x18] sm:$0xff]
          %v1241 = vld [vmem:[%s10 + $0x20] sm:$0xff]
          %v1242 = vld [vmem:[%s10 + $0x28] sm:$0xff]
          %v1243 = vld [vmem:[%s10 + $0x30] sm:$0xff]
          %v1244 = vld [vmem:[%s10 + $0x38] sm:$0xff]
          %v1245 = vld [vmem:[%s11] sm:$0x1]
          %v1247 = vlaneseq
          %v1248 = vshrl.u32 %v1247, 7
          %v1249 = vsub.s32 0, %v1248
          %v1250 = vrot.slane %v1245, %v1249
          %vm1252 = vcmask 523264
          %v1254 = vsel %vm1252, %v1235, 0
          %v1257 = vsel %vm1252, %v1236, 0
          %1259 = vmatprep.subr.mxu0 0.0
          %1260 = vmatpush1.msra.mxu0 %v1237
          %1261 = vmatprep.subr.mxu0 0.0
          %1262 = vmatpush1.msra.mxu0 %v1238
          %1263 = vmatprep.subr.mxu0 0.0
          %1264 = vmatpush1.msra.mxu0 %v1239
          %1265 = vmatprep.subr.mxu0 0.0
          %1266 = vmatpush1.msra.mxu0 %v1240
          %1267 = vmatprep.subr.mxu0 0.0
          %1268 = vmatpush1.msra.mxu0 %v1241
          %1269 = vmatprep.subr.mxu0 0.0
          %1270 = vmatpush1.msra.mxu0 %v1242
          %1271 = vmatprep.subr.mxu0 0.0
          %1272 = vmatpush1.msra.mxu0 %v1243
          %1273 = vmatprep.subr.mxu0 0.0
          %1274 = vmatpush1.msra.mxu0 %v1244
          %1275 = vmatprep.subr.mxu0 0.0
          %1276 = vmatpush1.msra.mxu0 0.0
          %1277 = vmatprep.subr.mxu0 0.0
          %1278 = vmatpush1.msra.mxu0 0.0
          %1279 = vmatprep.subr.mxu0 0.0
          %1280 = vmatpush1.msra.mxu0 0.0
          %1281 = vmatprep.subr.mxu0 0.0
          %1282 = vmatpush1.msra.mxu0 0.0
          %1283 = vmatprep.subr.mxu0 0.0
          %1284 = vmatpush1.msra.mxu0 0.0
          %1285 = vmatprep.subr.mxu0 0.0
          %1286 = vmatpush1.msra.mxu0 0.0
          %1287 = vmatprep.subr.mxu0 0.0
          %1288 = vmatpush1.msra.mxu0 0.0
          %1289 = vmatprep.subr.mxu0 0.0
          %1290 = vmatpush1.msra.mxu0 0.0
          %1291 = vmatprep.subr.mxu0 0.0
          %1292 = vmatpush1.msra.mxu0 0.0
          %1293 = vmatprep.subr.mxu0 0.0
          %1294 = vmatpush1.msra.mxu0 0.0
          %1295 = vmatprep.subr.mxu0 0.0
          %1296 = vmatpush1.msra.mxu0 0.0
          %1297 = vmatprep.subr.mxu0 0.0
          %1298 = vmatpush1.msra.mxu0 0.0
          %1299 = vmatprep.subr.mxu0 0.0
          %1300 = vmatpush1.msra.mxu0 0.0
          %1301 = vmatprep.subr.mxu0 0.0
          %1302 = vmatpush1.msra.mxu0 0.0
          %1303 = vmatprep.subr.mxu0 0.0
          %1304 = vmatpush1.msra.mxu0 0.0
          %1305 = vmatprep.subr.mxu0 0.0
          %1306 = vmatpush1.msra.mxu0 0.0
          %1307 = vmatprep.subr.mxu0 0.0
          %1308 = vmatpush1.msra.mxu0 0.0
          %1309 = vmatprep.subr.mxu0 0.0
          %1310 = vmatpush1.msra.mxu0 0.0
          %1311 = vmatprep.subr.mxu0 0.0
          %1312 = vmatpush1.msra.mxu0 0.0
          %1313 = vmatprep.subr.mxu0 0.0
          %1314 = vmatpush1.msra.mxu0 0.0
          %1315 = vmatprep.subr.mxu0 0.0
          %1316 = vmatpush1.msra.mxu0 0.0
          %1317 = vmatprep.subr.mxu0 0.0
          %1318 = vmatpush1.msra.mxu0 0.0
          %1319 = vmatprep.subr.mxu0 0.0
          %1320 = vmatpush1.msra.mxu0 0.0
          %1321 = vmatprep.subr.mxu0 0.0
          %1322 = vmatpush1.msra.mxu0 0.0
          %1323 = vmatprep.mubr.f32.mxu0 0.0
          %1324 = vmatmul.mubr.f32.gmra.mrb[0].mxu0 %v1254
          %v1325 = vpop.f32.mrb[0].mxu0
          %v1326 = vadd.f32 %v1250, %v1325
          %v1327 = vpop.f32.mrb[0].mxu0
          %1328 = vmatprep.mubr.f32.mxu0 0.0
          %1329 = vmatmul.mubr.f32.gmra.mrb[0].mxu0 %v1257
          %v1330 = vpop.f32.mrb[0].mxu0
          %v1331 = vadd.f32 %v1250, %v1330
          %v1332 = vpop.f32.mrb[0].mxu0
          %1333 = vdwg.mxu0
          %v1334 = vadd.f32 %v1326, %v1141
          %v1335 = vadd.f32 %v1331, %v1142
          %v1336 = vsel %vm576, %v1334, 0.0
          %1337 = vadd.xlane.f32.xlu0 %v1336
          %v1338 = vpop.xlane.xlu0 %1337
          %v1339 = vsel %vm576, %v1335, 0.0
          %1340 = vadd.xlane.f32.xlu0 %v1339
          %v1341 = vpop.xlane.xlu0 %1340
          %v1342 = vmul.f32 %v1338, %v1104
          %v1343 = vmul.f32 %v1341, %v1104
          %v1344 = vsub.f32 %v1334, %v1342
          %v1345 = vsub.f32 %v1335, %v1343
          %v1346 = vmul.f32 %v1344, %v1344
          %v1347 = vmul.f32 %v1345, %v1345
          %v1348 = vsel %vm576, %v1346, 0.0
          %1349 = vadd.xlane.f32.xlu0 %v1348
          %v1350 = vpop.xlane.xlu0 %1349
          %v1351 = vsel %vm576, %v1347, 0.0
          %1352 = vadd.xlane.f32.xlu0 %v1351
          %v1353 = vpop.xlane.xlu0 %1352
          %v1354 = vmul.f32 %v1350, %v1104
          %v1355 = vmul.f32 %v1353, %v1104
          %v1356 = vadd.f32 %v1354, 1e-05
          %v1357 = vadd.f32 %v1355, 1e-05
          %v1358 = vrsqrt.pop %v1356
          %v1359 = vrsqrt.pop %v1357
          %v1360 = vmul.f32 %v1344, %v1358
          %v1361 = vmul.f32 %v1345, %v1359
          %v1362 = vld [vmem:[%s12] sm:$0x1]
          %v1364 = vlaneseq
          %v1365 = vshrl.u32 %v1364, 7
          %v1366 = vsub.s32 0, %v1365
          %v1367 = vrot.slane %v1362, %v1366
          %v1369 = vmul.f32 %v1360, %v1367
          %v1370 = vmul.f32 %v1361, %v1367
          %v1371 = vld [vmem:[%s13] sm:$0x1]
          %v1373 = vlaneseq
          %v1374 = vshrl.u32 %v1373, 7
          %v1375 = vsub.s32 0, %v1374
          %v1376 = vrot.slane %v1371, %v1375
          %v1378 = vadd.f32 %v1369, %v1376
          %v1379 = vadd.f32 %v1370, %v1376
          %1380 = vst.msk [vmem:[#allocation4] sm:$0xff] %vm576, %v1378
          %1381 = vst.msk [vmem:[#allocation4 + $0x8] sm:$0xff] %vm576, %v1379
        $region84: #{tpu_custom_call.1} parent=75 // pred_fallthru
          _
        // Predicated region
        $region85: #{tpu_custom_call.1} parent=75 // pred_check
          %p1382 = pneg %p375
        $region86: #{tpu_custom_call.1} parent=75 // pred_check_branch
          %1384 = sbr.rel (%p1382) target = $region88
        $region87: #{tpu_custom_call.1} parent=75 // pred_region
          %s1385 = smul.u32 2, %s30
          %s1387 = ssub.s32 256, 256
          %1388 = vsyncadd [#allocation5], %s1387
          %s1389 = smul.addr %s1385, 128
          %s1390 = scalar_lea.hbm %s14, %s1389
          %s1391 = sshll.u32 [#allocation4], 4
          %s1392 = int_to_ptr.vmem [resolvable:$true] %s1391
          %1397 = dma.vmem_to_hbm [thread:$0]  %s1392, 256, %s1390, [#allocation5], 128, 128, 8
        $region88: #{tpu_custom_call.1} parent=75 // pred_fallthru
          _
        // Predicated region
        $region89: #{tpu_custom_call.1} parent=75 // pred_check
          %p1398 = pneg %p375
        $region90: #{tpu_custom_call.1} parent=75 // pred_check_branch
          %1400 = sbr.rel (%p1398) target = $region92
        $region91: #{tpu_custom_call.1} parent=75 // pred_region
          %1401 = dma.done [#allocation5], 256
        $region92: #{tpu_custom_call.1} parent=75 // pred_fallthru
          _
      $region76: #{tpu_custom_call.1} parent=5 // pred_fallthru
        _
      %p1402 = scmp.le.s32.totalorder 2, %s21
      // Predicated region
      $region93: #{tpu_custom_call.1} parent=5 // pred_check
        %p1403 = pneg %p1402
      $region94: #{tpu_custom_call.1} parent=5 // pred_check_branch
        %1405 = sbr.rel (%p1403) target = $region96
      $region95: #{tpu_custom_call.1} parent=5 // pred_region
        %s1406 = ssub.s32 %s21, 2
      $region96: #{tpu_custom_call.1} parent=5 // pred_fallthru
        _
    $region6: #{tpu_custom_call.1} parent=1 // loop_footer
      %s25 = sadd.s32 1, %s21
    $region7: #{tpu_custom_call.1} parent=1 // loop_footer_branch
      %20 = sbr.rel target = $region3
    $region8: #{tpu_custom_call.1} parent=1 // loop_exit
      _
    %1407 = vsyncpa [#allocation5], 1
    %s1408 = scalar_lea.sflag [#allocation5], 1
    %1409 = vsyncpa %s1408, 1

</llo_original>
